<compile_context>
chip_gen: v5e
topology: v5e:2x2
jax: 0.10.0
libtpu: 0.0.40
codegen_flags: <defaults>
</compile_context>

<pallas_src>
import jax
import jax.numpy as jnp
import numpy as np
from jax.experimental import pallas as pl
from jax.experimental.pallas import tpu as pltpu


# ---------------------------------------------------------------------------
# Fused, M-tiled forward kernel.
#
# Padded sizes: N_pad nodes, M_pad = padded N//2, F_pad = padded n_in,
#               H_pad = padded n_h, TM = row tile.
# Inputs (per grid step i):
#   a_top (TM, N_pad)      bf16  rows [i*TM:(i+1)*TM] of top half of A_hat
#   a_bot (TM, N_pad)      bf16  same rows of the bottom half
#   seq   (2*N_pad, F_pad) f32   [seq1 ; seq2] row-stacked   (resident)
#   wg    (F_pad, H_pad)   f32   GCN weight                  (resident)
#   bg2   (1, 2*H_pad)     f32   [b_gcn | b_gcn]             (resident)
#   wcat  (2*H_pad, H_pad) f32   SimCAT weight               (resident)
#   bcat  (1, H_pad)       f32   SimCAT bias                 (resident)
#   wbt   (H_pad, H_pad)   f32   W_bil^T                     (resident)
#   msk   (TM, 1)          f32   readout mask rows for this tile
#   sb    (2, M_pad)       f32   [samp_bias1 ; samp_bias2]   (resident)
#   scal  (2,)             f32   SMEM: [b_bil, 1/denom]
# Output:
#   out   (2, M_pad)       f32   [sc_1 ; sc_2]  (written once, last tile)
# Scratch:
#   xw    (N_pad, 2*H_pad) f32   [X1@W | X2@W]  (computed once)
#   h_all (M_pad, 2*H_pad) f32   [h_1 | h_2]    SimCAT outputs, all rows
#   racc  (1, H_pad)       f32   running msk-weighted sum of h_1
# ---------------------------------------------------------------------------
_NT_DIMS = (((1,), (1,)), ((), ()))           # contract lane dims: A @ B^T


def _dgis_kernel(a_top_ref, a_bot_ref, seq_ref, wg_ref, bg2_ref, wcat_ref,
                 bcat_ref, wbt_ref, msk_ref, sb_ref, scal_ref,
                 out_ref, xw_ref, h_all_ref, racc_ref):
    f32 = jnp.float32
    i = pl.program_id(0)
    tm = a_top_ref.shape[0]
    n_pad = xw_ref.shape[0]
    h_pad = wbt_ref.shape[0]

    # ---- one-time: GCN linear for both branches + readout accumulator ------
    @pl.when(i == 0)
    def _init():
        xw_stacked = jnp.dot(seq_ref[...], wg_ref[...],
                             preferred_element_type=f32)          # (2N, H)
        xw_ref[...] = jnp.concatenate(
            [xw_stacked[:n_pad, :], xw_stacked[n_pad:, :]], axis=1)  # (N, 2H)
        racc_ref[...] = jnp.zeros_like(racc_ref)

    # ---- aggregation: bf16 A row-tile @ f32 XW, + bias, ReLU ----------------
    xw = xw_ref[...]
    h_top = jnp.maximum(
        jnp.dot(a_top_ref[...], xw, preferred_element_type=f32) + bg2_ref[...],
        0.0)                                                       # (TM, 2H)
    h_bot = jnp.maximum(
        jnp.dot(a_bot_ref[...], xw, preferred_element_type=f32) + bg2_ref[...],
        0.0)                                                       # (TM, 2H)

    # ---- SimCAT: per branch, relu(cat(h_top_b, h_bot_b) @ W_cat + b) --------
    in1 = jnp.concatenate([h_top[:, :h_pad], h_bot[:, :h_pad]], axis=1)
    in2 = jnp.concatenate([h_top[:, h_pad:], h_bot[:, h_pad:]], axis=1)
    h1 = jnp.maximum(
        jnp.dot(in1, wcat_ref[...], preferred_element_type=f32) + bcat_ref[...],
        0.0)                                                       # (TM, H)
    h2 = jnp.maximum(
        jnp.dot(in2, wcat_ref[...], preferred_element_type=f32) + bcat_ref[...],
        0.0)                                                       # (TM, H)

    row0 = pl.multiple_of(i * tm, tm)
    h_all_ref[pl.ds(row0, tm), :] = jnp.concatenate([h1, h2], axis=1)

    # ---- readout partial sum: VPU multiply + sublane reduce (off the MXU) ---
    racc_ref[...] += jnp.sum(h1 * msk_ref[...], axis=0, keepdims=True)

    # ---- last tile: sigmoid + bilinear discriminator, one fused store -------
    @pl.when(i == pl.num_programs(0) - 1)
    def _finalize():
        b_bil = scal_ref[0]
        inv_denom = scal_ref[1]
        c = jax.nn.sigmoid(racc_ref[...] * inv_denom)              # (1, H)
        u = jnp.dot(c, wbt_ref[...], preferred_element_type=f32)   # (1, H)
        zero = jnp.zeros_like(u)
        u2 = jnp.concatenate(
            [jnp.concatenate([u, zero], axis=1),
             jnp.concatenate([zero, u], axis=1)], axis=0)          # (2, 2H)
        sc = jax.lax.dot_general(u2, h_all_ref[...], _NT_DIMS,
                                 preferred_element_type=f32)       # (2, M_pad)
        out_ref[...] = sc + b_bil + sb_ref[...]


# ---------------------------------------------------------------------------
# Plain-JAX glue.
# ---------------------------------------------------------------------------
def _round_up(x, m):
    return ((x + m - 1) // m) * m


def gcn_normalized_adj(edge_index, num_nodes):
    """D^-1/2 (A + I) D^-1/2 from COO edges (scatter build, deduped)."""
    row, col = edge_index[0], edge_index[1]
    a = jnp.zeros((num_nodes, num_nodes), jnp.float32)
    a = a.at[col, row].set(1.0)                      # a[target, source] = 1
    a = a + jnp.eye(num_nodes, dtype=jnp.float32)    # self loops
    d_inv_sqrt = jax.lax.rsqrt(jnp.maximum(jnp.sum(a, axis=1), 1e-12))
    return a * d_inv_sqrt[:, None] * d_inv_sqrt[None, :]


def _pick_tile_and_vmem(m_pad, n_pad, h_pad, f_pad):
    """Generation-aware row-tile TM + explicit VMEM limit (v7x = 64 MiB)."""
    try:
        cap = int(pltpu.get_tpu_info().vmem_capacity_bytes)
    except Exception:
        cap = 64 << 20                               # v7x per-core worst case
    budget = int(cap * 0.8)
    resident = 2 * (                                  # assume double-buffered
        2 * n_pad * f_pad * 4                         # stacked seq
        + f_pad * h_pad * 4 + 2 * h_pad * 4           # W_gcn, bg2
        + 2 * h_pad * h_pad * 4 + h_pad * 4           # W_cat, b_cat
        + h_pad * h_pad * 4                           # W_bil^T
        + 2 * m_pad * 4 + 2 * m_pad * 4               # sb, out
    ) + (n_pad * 2 * h_pad * 4                        # xw scratch (f32)
         + m_pad * 2 * h_pad * 4                      # h_all scratch
         + h_pad * 4)                                 # readout acc
    tm = 128
    for cand in (512, 256, 128):
        if m_pad % cand:
            continue
        tiled = 2 * (2 * cand * n_pad * 2 + cand * 4)   # a_top+a_bot bf16 + msk
        if resident + tiled <= budget:
            tm = cand
            break
    tiled = 2 * (2 * tm * n_pad * 2 + tm * 4)
    vmem_limit = min(max(resident + tiled + (2 << 20), 16 << 20), cap)
    return tm, vmem_limit


def dgis_forward(params, seq1, seq2, edge_index, msk=None,
                 samp_bias1=None, samp_bias2=None):
    n, n_in = seq1.shape
    m = n // 2
    n_h = params["w_gcn"].shape[1]
    f32 = jnp.float32

    # ---- lane-dense padded sizes -------------------------------------------
    h_pad = _round_up(n_h, 128)
    f_pad = _round_up(n_in, 128)
    m_pad = _round_up(m, 128)
    n_pad = _round_up(n, 128)
    tm, vmem_limit = _pick_tile_and_vmem(m_pad, n_pad, h_pad, f_pad)
    grid = (m_pad // tm,)

    # ---- adjacency (bf16 halves, zero-padded) ------------------------------
    a_hat = gcn_normalized_adj(edge_index, n)
    a_top = jnp.zeros((m_pad, n_pad), jnp.bfloat16)
    a_top = a_top.at[:m, :n].set(a_hat[:m].astype(jnp.bfloat16))
    a_bot = jnp.zeros((m_pad, n_pad), jnp.bfloat16)
    a_bot = a_bot.at[:m, :n].set(a_hat[m:].astype(jnp.bfloat16))

    # ---- features row-stacked (no block-diag weights) -----------------------
    seq_stacked = jnp.zeros((2 * n_pad, f_pad), f32)
    seq_stacked = seq_stacked.at[:n, :n_in].set(seq1.astype(f32))
    seq_stacked = seq_stacked.at[n_pad:n_pad + n, :n_in].set(seq2.astype(f32))

    wg = jnp.zeros((f_pad, h_pad), f32).at[:n_in, :n_h].set(
        params["w_gcn"].astype(f32))
    bg2 = jnp.zeros((1, 2 * h_pad), f32)
    bg2 = bg2.at[0, :n_h].set(params["b_gcn"].astype(f32))
    bg2 = bg2.at[0, h_pad:h_pad + n_h].set(params["b_gcn"].astype(f32))

    wcat = jnp.zeros((2 * h_pad, h_pad), f32)
    wcat = wcat.at[:n_h, :n_h].set(params["w_cat"][:n_h].astype(f32))
    wcat = wcat.at[h_pad:h_pad + n_h, :n_h].set(params["w_cat"][n_h:].astype(f32))
    bcat = jnp.zeros((1, h_pad), f32).at[0, :n_h].set(params["b_cat"].astype(f32))

    wbt = jnp.zeros((h_pad, h_pad), f32).at[:n_h, :n_h].set(
        params["w_bil"].astype(f32).T)

    # ---- readout mask / sample biases / scalars -----------------------------
    if msk is None:
        msk = jnp.ones((m,), f32)
    msk = msk.astype(f32).reshape(m)
    msk_col = jnp.zeros((m_pad, 1), f32).at[:m, 0].set(msk)
    inv_denom = 1.0 / jnp.maximum(jnp.sum(msk), 1.0)

    sb1 = (jnp.zeros((m,), f32) if samp_bias1 is None
           else samp_bias1.astype(f32).reshape(m))
    sb2 = (jnp.zeros((m,), f32) if samp_bias2 is None
           else samp_bias2.astype(f32).reshape(m))
    sb = jnp.zeros((2, m_pad), f32).at[0, :m].set(sb1).at[1, :m].set(sb2)

    b_bil = params["b_bil"].astype(f32).reshape(-1)[0]
    scal = jnp.stack([b_bil, inv_denom.astype(f32)])                 # SMEM (2,)

    inputs = (a_top, a_bot, seq_stacked, wg, bg2, wcat, bcat, wbt,
              msk_col, sb, scal)

    # ---- cost estimate -------------------------------------------------------
    flops = int(
        2 * (2 * n_pad) * f_pad * h_pad              # XW (once)
        + 2 * (2 * m_pad) * n_pad * (2 * h_pad)      # A @ XW (both halves)
        + 2 * 2 * m_pad * (2 * h_pad) * h_pad        # SimCAT (both branches)
        + 2 * m_pad * h_pad                          # readout accumulate
        + 2 * h_pad * h_pad                          # u = c @ W_bil^T
        + 2 * 2 * m_pad * (2 * h_pad))               # scores
    bytes_accessed = int(sum(int(np.prod(x.shape)) * x.dtype.itemsize
                             for x in inputs) + 2 * m_pad * 4)
    cost = pl.CostEstimate(flops=flops, transcendentals=h_pad,
                           bytes_accessed=bytes_accessed)

    smem = pl.BlockSpec(memory_space=pltpu.MemorySpace.SMEM)
    grid_spec = pltpu.PrefetchScalarGridSpec(
        num_scalar_prefetch=0,
        grid=grid,
        in_specs=[
            pl.BlockSpec((tm, n_pad), lambda i: (i, 0)),          # a_top tile
            pl.BlockSpec((tm, n_pad), lambda i: (i, 0)),          # a_bot tile
            pl.BlockSpec((2 * n_pad, f_pad), lambda i: (0, 0)),   # seq (resident)
            pl.BlockSpec((f_pad, h_pad), lambda i: (0, 0)),       # W_gcn
            pl.BlockSpec((1, 2 * h_pad), lambda i: (0, 0)),       # bg2
            pl.BlockSpec((2 * h_pad, h_pad), lambda i: (0, 0)),   # W_cat
            pl.BlockSpec((1, h_pad), lambda i: (0, 0)),           # b_cat
            pl.BlockSpec((h_pad, h_pad), lambda i: (0, 0)),       # W_bil^T
            pl.BlockSpec((tm, 1), lambda i: (i, 0)),              # msk tile
            pl.BlockSpec((2, m_pad), lambda i: (0, 0)),           # samp biases
            smem,                                                  # [b_bil, 1/denom]
        ],
        out_specs=pl.BlockSpec((2, m_pad), lambda i: (0, 0)),
        scratch_shapes=[
            pltpu.VMEM((n_pad, 2 * h_pad), jnp.float32),          # XW (f32)
            pltpu.VMEM((m_pad, 2 * h_pad), jnp.float32),          # h_all
            pltpu.VMEM((1, h_pad), jnp.float32),                  # readout acc
        ],
    )

    out = pl.pallas_call(
        _dgis_kernel,
        out_shape=jax.ShapeDtypeStruct((2, m_pad), f32),
        grid_spec=grid_spec,
        compiler_params=pltpu.CompilerParams(
            # "arbitrary": the readout reduction + h_all scratch span this axis.
            dimension_semantics=("arbitrary",),
            vmem_limit_bytes=vmem_limit),
        cost_estimate=cost,
    )(*inputs)

    return out[:, :m].reshape(2 * m)   # == cat(sc_1, sc_2), matches the module


# ---------------------------------------------------------------------------
# Pure-JAX f32 reference (numerical sanity check).
# ---------------------------------------------------------------------------
def dgis_reference(params, seq1, seq2, edge_index, msk, sb1, sb2):
    n = seq1.shape[0]
    m = n // 2
    a_hat = gcn_normalized_adj(edge_index, n)

    def branch(seq):
        h = jax.nn.relu(a_hat @ (seq @ params["w_gcn"]) + params["b_gcn"])
        hc = jnp.concatenate([h[:m], h[m:]], axis=1)
        return jax.nn.relu(hc @ params["w_cat"] + params["b_cat"])

    h1 = branch(seq1)
    h2 = branch(seq2)
    c = jax.nn.sigmoid(jnp.sum(h1 * msk[:, None], axis=0)
                       / jnp.maximum(jnp.sum(msk), 1.0))
    u = params["w_bil"] @ c
    sc1 = h1 @ u + params["b_bil"][0] + sb1
    sc2 = h2 @ u + params["b_bil"][0] + sb2
    return jnp.concatenate([sc1, sc2], axis=0)


if __name__ == "__main__":
    # Small but multi-tile: M_pad = 256, TM = 128 -> 2 grid steps.
    N, n_in, n_h = 512, 16, 32
    M = N // 2

    key = jax.random.PRNGKey(0)
    keys = jax.random.split(key, 8)
    params = {
        "w_gcn": 0.1 * jax.random.normal(keys[0], (n_in, n_h), jnp.float32),
        "b_gcn": 0.1 * jax.random.normal(keys[1], (n_h,), jnp.float32),
        "w_cat": 0.1 * jax.random.normal(keys[2], (2 * n_h, n_h), jnp.float32),
        "b_cat": 0.1 * jax.random.normal(keys[3], (n_h,), jnp.float32),
        "w_bil": 0.1 * jax.random.normal(keys[4], (n_h, n_h), jnp.float32),
        "b_bil": jnp.zeros((1,), jnp.float32),
    }

    seq1 = jax.random.normal(keys[5], (N, n_in), jnp.float32)
    seq2 = jax.random.normal(keys[6], (N, n_in), jnp.float32)

    # bidirectional ring graph
    src = jnp.arange(N, dtype=jnp.int32)
    dst = (src + 1) % N
    edge_index = jnp.stack(
        [jnp.concatenate([src, dst]), jnp.concatenate([dst, src])], axis=0)

    msk = jnp.ones((M,), jnp.float32)             # readout mask (all ones)
    samp_bias1 = jnp.zeros((M,), jnp.float32)     # samp_bias = None -> zeros
    samp_bias2 = jnp.zeros((M,), jnp.float32)

    fwd = jax.jit(dgis_forward)
    out = fwd(params, seq1, seq2, edge_index, msk, samp_bias1, samp_bias2)
    jax.block_until_ready(out)
    assert out.shape == (2 * M,)

    # A is stored bf16 (memory-bound aggregation); XW and all other math is f32.
    ref = dgis_reference(params, seq1, seq2, edge_index, msk,
                         samp_bias1, samp_bias2)
    assert np.allclose(np.asarray(out), np.asarray(ref), atol=3e-2, rtol=3e-2)
    print("KERNEL_OK")
</pallas_src>

<mosaic_0001>
module attributes {stable_mosaic.version = 11 : i64} {
  func.func @_dgis_kernel(%arg0: i32, %arg1: memref<256x512xbf16, #tpu.memory_space<vmem>>, %arg2: memref<256x512xbf16, #tpu.memory_space<vmem>>, %arg3: memref<1024x128xf32, #tpu.memory_space<vmem>>, %arg4: memref<128x128xf32, #tpu.memory_space<vmem>>, %arg5: memref<1x256xf32, #tpu.memory_space<vmem>>, %arg6: memref<256x128xf32, #tpu.memory_space<vmem>>, %arg7: memref<1x128xf32, #tpu.memory_space<vmem>>, %arg8: memref<128x128xf32, #tpu.memory_space<vmem>>, %arg9: memref<256x1xf32, #tpu.memory_space<vmem>>, %arg10: memref<2x256xf32, #tpu.memory_space<vmem>>, %arg11: memref<2xf32, #tpu.memory_space<smem>>, %arg12: memref<2x256xf32, #tpu.memory_space<vmem>>, %arg13: memref<512x256xf32, #tpu.memory_space<vmem>>, %arg14: memref<256x256xf32, #tpu.memory_space<vmem>>, %arg15: memref<1x128xf32, #tpu.memory_space<vmem>>) attributes {dimension_semantics = [#tpu.dimension_semantics<arbitrary>], iteration_bounds = array<i64: 1>, scalar_prefetch = 0 : i64, scratch_operands = 3 : i64, tpu.core_type = #tpu.core_type<tc>, window_params = [{transform_indices = @transform_0, window_bounds = array<i64: 256, 512>}, {transform_indices = @transform_1, window_bounds = array<i64: 256, 512>}, {pipeline_mode = #tpu.pipeline_mode<synchronous>, transform_indices = @transform_2, window_bounds = array<i64: 1024, 128>}, {pipeline_mode = #tpu.pipeline_mode<synchronous>, transform_indices = @transform_3, window_bounds = array<i64: 128, 128>}, {pipeline_mode = #tpu.pipeline_mode<synchronous>, transform_indices = @transform_4, window_bounds = array<i64: 1, 256>}, {pipeline_mode = #tpu.pipeline_mode<synchronous>, transform_indices = @transform_5, window_bounds = array<i64: 256, 128>}, {pipeline_mode = #tpu.pipeline_mode<synchronous>, transform_indices = @transform_6, window_bounds = array<i64: 1, 128>}, {pipeline_mode = #tpu.pipeline_mode<synchronous>, transform_indices = @transform_7, window_bounds = array<i64: 128, 128>}, {transform_indices = @transform_8, window_bounds = array<i64: 256, 1>}, {pipeline_mode = #tpu.pipeline_mode<synchronous>, transform_indices = @transform_9, window_bounds = array<i64: 2, 256>}, {transform_indices = @transform_10, window_bounds = array<i64: 2>}, {pipeline_mode = #tpu.pipeline_mode<synchronous>, transform_indices = @transform_11, window_bounds = array<i64: 2, 256>}]} {
    %c0_i32 = arith.constant 0 : i32
    %0 = arith.cmpi eq, %arg0, %c0_i32 : i32
    %1 = arith.extui %0 : i1 to i32
    %c0_i32_0 = arith.constant 0 : i32
    %2 = arith.cmpi ne, %1, %c0_i32_0 : i32
    scf.if %2 {
      %c0_35 = arith.constant 0 : index
      %c0_36 = arith.constant 0 : index
      %54 = vector.load %arg3[%c0_35, %c0_36] : memref<1024x128xf32, #tpu.memory_space<vmem>>, vector<1024x128xf32>
      %c0_37 = arith.constant 0 : index
      %c0_38 = arith.constant 0 : index
      %55 = vector.load %arg4[%c0_37, %c0_38] : memref<128x128xf32, #tpu.memory_space<vmem>>, vector<128x128xf32>
      %cst_39 = arith.constant dense<0.000000e+00> : vector<1024x128xf32>
      %56 = tpu.matmul %54, %55, %cst_39 {dimension_numbers = #tpu.dot_dimension_numbers<[1], [0], [0], [1], [0, 0, 1, 1], [], []>} : vector<1024x128xf32>, vector<128x128xf32>, vector<1024x128xf32> -> vector<1024x128xf32>
      %57 = vector.extract_strided_slice %56 {offsets = [0, 0], sizes = [512, 128], strides = [1, 1]} : vector<1024x128xf32> to vector<512x128xf32>
      %58 = vector.extract_strided_slice %56 {offsets = [512, 0], sizes = [512, 128], strides = [1, 1]} : vector<1024x128xf32> to vector<512x128xf32>
      %59 = tpu.concatenate %57, %58 in 1 : vector<512x128xf32>, vector<512x128xf32> -> vector<512x256xf32>
      %c0_40 = arith.constant 0 : index
      %c0_41 = arith.constant 0 : index
      %60 = vector.load %arg13[%c0_40, %c0_41] : memref<512x256xf32, #tpu.memory_space<vmem>>, vector<512x256xf32>
      tpu.vector_store %arg13[%c0_40, %c0_41], %59 {strides = array<i32>} : memref<512x256xf32, #tpu.memory_space<vmem>>, vector<512x256xf32>,
      %cst_42 = arith.constant 0.000000e+00 : f32
      %61 = vector.broadcast %cst_42 : f32 to vector<1x128xf32>
      %c0_43 = arith.constant 0 : index
      %c0_44 = arith.constant 0 : index
      %62 = vector.load %arg15[%c0_43, %c0_44] : memref<1x128xf32, #tpu.memory_space<vmem>>, vector<1x128xf32>
      tpu.vector_store %arg15[%c0_43, %c0_44], %61 {strides = array<i32>} : memref<1x128xf32, #tpu.memory_space<vmem>>, vector<1x128xf32>,
    } else {
    }
    %c0 = arith.constant 0 : index
    %c0_1 = arith.constant 0 : index
    %3 = vector.load %arg13[%c0, %c0_1] : memref<512x256xf32, #tpu.memory_space<vmem>>, vector<512x256xf32>
    %c0_2 = arith.constant 0 : index
    %c0_3 = arith.constant 0 : index
    %4 = vector.load %arg1[%c0_2, %c0_3] : memref<256x512xbf16, #tpu.memory_space<vmem>>, vector<256x512xbf16>
    %cst = arith.constant dense<0.000000e+00> : vector<256x256xf32>
    %5 = tpu.matmul %4, %3, %cst {dimension_numbers = #tpu.dot_dimension_numbers<[1], [0], [0], [1], [0, 0, 1, 1], [], []>} : vector<256x512xbf16>, vector<512x256xf32>, vector<256x256xf32> -> vector<256x256xf32>
    %c0_4 = arith.constant 0 : index
    %c0_5 = arith.constant 0 : index
    %6 = vector.load %arg5[%c0_4, %c0_5] : memref<1x256xf32, #tpu.memory_space<vmem>>, vector<1x256xf32>
    %7 = vector.broadcast %6 : vector<1x256xf32> to vector<256x256xf32>
    %8 = arith.addf %5, %7 : vector<256x256xf32>
    %cst_6 = arith.constant 0.000000e+00 : f32
    %9 = vector.broadcast %cst_6 : f32 to vector<256x256xf32>
    %10 = arith.maximumf %8, %9 : vector<256x256xf32>
    %c0_7 = arith.constant 0 : index
    %c0_8 = arith.constant 0 : index
    %11 = vector.load %arg2[%c0_7, %c0_8] : memref<256x512xbf16, #tpu.memory_space<vmem>>, vector<256x512xbf16>
    %cst_9 = arith.constant dense<0.000000e+00> : vector<256x256xf32>
    %12 = tpu.matmul %11, %3, %cst_9 {dimension_numbers = #tpu.dot_dimension_numbers<[1], [0], [0], [1], [0, 0, 1, 1], [], []>} : vector<256x512xbf16>, vector<512x256xf32>, vector<256x256xf32> -> vector<256x256xf32>
    %c0_10 = arith.constant 0 : index
    %c0_11 = arith.constant 0 : index
    %13 = vector.load %arg5[%c0_10, %c0_11] : memref<1x256xf32, #tpu.memory_space<vmem>>, vector<1x256xf32>
    %14 = vector.broadcast %13 : vector<1x256xf32> to vector<256x256xf32>
    %15 = arith.addf %12, %14 : vector<256x256xf32>
    %cst_12 = arith.constant 0.000000e+00 : f32
    %16 = vector.broadcast %cst_12 : f32 to vector<256x256xf32>
    %17 = arith.maximumf %15, %16 : vector<256x256xf32>
    %18 = vector.extract_strided_slice %10 {offsets = [0, 0], sizes = [256, 128], strides = [1, 1]} : vector<256x256xf32> to vector<256x128xf32>
    %19 = vector.extract_strided_slice %17 {offsets = [0, 0], sizes = [256, 128], strides = [1, 1]} : vector<256x256xf32> to vector<256x128xf32>
    %20 = tpu.concatenate %18, %19 in 1 : vector<256x128xf32>, vector<256x128xf32> -> vector<256x256xf32>
    %21 = vector.extract_strided_slice %10 {offsets = [0, 128], sizes = [256, 128], strides = [1, 1]} : vector<256x256xf32> to vector<256x128xf32>
    %22 = vector.extract_strided_slice %17 {offsets = [0, 128], sizes = [256, 128], strides = [1, 1]} : vector<256x256xf32> to vector<256x128xf32>
    %23 = tpu.concatenate %21, %22 in 1 : vector<256x128xf32>, vector<256x128xf32> -> vector<256x256xf32>
    %c0_13 = arith.constant 0 : index
    %c0_14 = arith.constant 0 : index
    %24 = vector.load %arg6[%c0_13, %c0_14] : memref<256x128xf32, #tpu.memory_space<vmem>>, vector<256x128xf32>
    %cst_15 = arith.constant dense<0.000000e+00> : vector<256x128xf32>
    %25 = tpu.matmul %20, %24, %cst_15 {dimension_numbers = #tpu.dot_dimension_numbers<[1], [0], [0], [1], [0, 0, 1, 1], [], []>} : vector<256x256xf32>, vector<256x128xf32>, vector<256x128xf32> -> vector<256x128xf32>
    %c0_16 = arith.constant 0 : index
    %c0_17 = arith.constant 0 : index
    %26 = vector.load %arg7[%c0_16, %c0_17] : memref<1x128xf32, #tpu.memory_space<vmem>>, vector<1x128xf32>
    %27 = vector.broadcast %26 : vector<1x128xf32> to vector<256x128xf32>
    %28 = arith.addf %25, %27 : vector<256x128xf32>
    %cst_18 = arith.constant 0.000000e+00 : f32
    %29 = vector.broadcast %cst_18 : f32 to vector<256x128xf32>
    %30 = arith.maximumf %28, %29 : vector<256x128xf32>
    %c0_19 = arith.constant 0 : index
    %c0_20 = arith.constant 0 : index
    %31 = vector.load %arg6[%c0_19, %c0_20] : memref<256x128xf32, #tpu.memory_space<vmem>>, vector<256x128xf32>
    %cst_21 = arith.constant dense<0.000000e+00> : vector<256x128xf32>
    %32 = tpu.matmul %23, %31, %cst_21 {dimension_numbers = #tpu.dot_dimension_numbers<[1], [0], [0], [1], [0, 0, 1, 1], [], []>} : vector<256x256xf32>, vector<256x128xf32>, vector<256x128xf32> -> vector<256x128xf32>
    %c0_22 = arith.constant 0 : index
    %c0_23 = arith.constant 0 : index
    %33 = vector.load %arg7[%c0_22, %c0_23] : memref<1x128xf32, #tpu.memory_space<vmem>>, vector<1x128xf32>
    %34 = vector.broadcast %33 : vector<1x128xf32> to vector<256x128xf32>
    %35 = arith.addf %32, %34 : vector<256x128xf32>
    %cst_24 = arith.constant 0.000000e+00 : f32
    %36 = vector.broadcast %cst_24 : f32 to vector<256x128xf32>
    %37 = arith.maximumf %35, %36 : vector<256x128xf32>
    %c256_i32 = arith.constant 256 : i32
    %38 = arith.muli %arg0, %c256_i32 : i32
    %39 = tpu.assume_multiple %38, 256 : i32
    %40 = tpu.concatenate %30, %37 in 1 : vector<256x128xf32>, vector<256x128xf32> -> vector<256x256xf32>
    %41 = arith.index_cast %39 : i32 to index
    %c0_25 = arith.constant 0 : index
    %42 = vector.load %arg14[%41, %c0_25] : memref<256x256xf32, #tpu.memory_space<vmem>>, vector<256x256xf32>
    tpu.vector_store %arg14[%41, %c0_25], %40 {strides = array<i32>} : memref<256x256xf32, #tpu.memory_space<vmem>>, vector<256x256xf32>,
    %c0_26 = arith.constant 0 : index
    %c0_27 = arith.constant 0 : index
    %43 = vector.load %arg15[%c0_26, %c0_27] : memref<1x128xf32, #tpu.memory_space<vmem>>, vector<1x128xf32>
    %c0_28 = arith.constant 0 : index
    %c0_29 = arith.constant 0 : index
    %44 = vector.load %arg9[%c0_28, %c0_29] : memref<256x1xf32, #tpu.memory_space<vmem>>, vector<256x1xf32>
    %45 = vector.broadcast %44 : vector<256x1xf32> to vector<256x128xf32>
    %46 = arith.mulf %30, %45 : vector<256x128xf32>
    %cst_30 = arith.constant dense<0.000000e+00> : vector<128xf32>
    %47 = vector.multi_reduction <add>, %46, %cst_30 [0] : vector<256x128xf32> to vector<128xf32>
    %48 = vector.shape_cast %47 : vector<128xf32> to vector<1x128xf32>
    %49 = arith.addf %43, %48 : vector<1x128xf32>
    %c0_31 = arith.constant 0 : index
    %c0_32 = arith.constant 0 : index
    %50 = vector.load %arg15[%c0_31, %c0_32] : memref<1x128xf32, #tpu.memory_space<vmem>>, vector<1x128xf32>
    tpu.vector_store %arg15[%c0_31, %c0_32], %49 {strides = array<i32>} : memref<1x128xf32, #tpu.memory_space<vmem>>, vector<1x128xf32>,
    %c0_i32_33 = arith.constant 0 : i32
    %51 = arith.cmpi eq, %arg0, %c0_i32_33 : i32
    %52 = arith.extui %51 : i1 to i32
    %c0_i32_34 = arith.constant 0 : i32
    %53 = arith.cmpi ne, %52, %c0_i32_34 : i32
    scf.if %53 {
      %c0_35 = arith.constant 0 : index
      %54 = memref.load %arg11[%c0_35] : memref<2xf32, #tpu.memory_space<smem>>
      %c1 = arith.constant 1 : index
      %55 = memref.load %arg11[%c1] : memref<2xf32, #tpu.memory_space<smem>>
      %c0_36 = arith.constant 0 : index
      %c0_37 = arith.constant 0 : index
      %56 = vector.load %arg15[%c0_36, %c0_37] : memref<1x128xf32, #tpu.memory_space<vmem>>, vector<1x128xf32>
      %57 = vector.broadcast %55 : f32 to vector<1x128xf32>
      %58 = arith.mulf %56, %57 : vector<1x128xf32>
      %59 = arith.negf %58 : vector<1x128xf32>
      %60 = math.exp %59 : vector<1x128xf32>
      %cst_38 = arith.constant 1.000000e+00 : f32
      %61 = vector.broadcast %cst_38 : f32 to vector<1x128xf32>
      %62 = arith.addf %61, %60 : vector<1x128xf32>
      %63 = arith.divf %61, %62 : vector<1x128xf32>
      %c0_39 = arith.constant 0 : index
      %c0_40 = arith.constant 0 : index
      %64 = vector.load %arg8[%c0_39, %c0_40] : memref<128x128xf32, #tpu.memory_space<vmem>>, vector<128x128xf32>
      %cst_41 = arith.constant dense<0.000000e+00> : vector<1x128xf32>
      %65 = tpu.matmul %63, %64, %cst_41 {dimension_numbers = #tpu.dot_dimension_numbers<[1], [0], [0], [1], [0, 0, 1, 1], [], []>} : vector<1x128xf32>, vector<128x128xf32>, vector<1x128xf32> -> vector<1x128xf32>
      %cst_42 = arith.constant 0.000000e+00 : f32
      %66 = vector.broadcast %cst_42 : f32 to vector<1x128xf32>
      %67 = tpu.concatenate %65, %66 in 1 : vector<1x128xf32>, vector<1x128xf32> -> vector<1x256xf32>
      %68 = tpu.concatenate %66, %65 in 1 : vector<1x128xf32>, vector<1x128xf32> -> vector<1x256xf32>
      %69 = tpu.concatenate %67, %68 in 0 : vector<1x256xf32>, vector<1x256xf32> -> vector<2x256xf32>
      %c0_43 = arith.constant 0 : index
      %c0_44 = arith.constant 0 : index
      %70 = vector.load %arg14[%c0_43, %c0_44] : memref<256x256xf32, #tpu.memory_space<vmem>>, vector<256x256xf32>
      %cst_45 = arith.constant dense<0.000000e+00> : vector<2x256xf32>
      %71 = tpu.matmul %69, %70, %cst_45 {dimension_numbers = #tpu.dot_dimension_numbers<[1], [1], [0], [0], [0, 0, 1, 0], [], []>} : vector<2x256xf32>, vector<256x256xf32>, vector<2x256xf32> -> vector<2x256xf32>
      %72 = vector.broadcast %54 : f32 to vector<2x256xf32>
      %73 = arith.addf %71, %72 : vector<2x256xf32>
      %c0_46 = arith.constant 0 : index
      %c0_47 = arith.constant 0 : index
      %74 = vector.load %arg10[%c0_46, %c0_47] : memref<2x256xf32, #tpu.memory_space<vmem>>, vector<2x256xf32>
      %75 = arith.addf %73, %74 : vector<2x256xf32>
      %c0_48 = arith.constant 0 : index
      %c0_49 = arith.constant 0 : index
      %76 = vector.load %arg12[%c0_48, %c0_49] : memref<2x256xf32, #tpu.memory_space<vmem>>, vector<2x256xf32>
      tpu.vector_store %arg12[%c0_48, %c0_49], %75 {strides = array<i32>} : memref<2x256xf32, #tpu.memory_space<vmem>>, vector<2x256xf32>,
    } else {
    }
    return
  }
  func.func @transform_0(%arg0: i32) -> (i32, i32) {
    %c0_i32 = arith.constant 0 : i32
    %c0_i32_0 = arith.constant 0 : i32
    return %arg0, %c0_i32 : i32, i32
  }
  func.func @transform_1(%arg0: i32) -> (i32, i32) {
    %c0_i32 = arith.constant 0 : i32
    %c0_i32_0 = arith.constant 0 : i32
    return %arg0, %c0_i32 : i32, i32
  }
  func.func @transform_2(%arg0: i32) -> (i32, i32) {
    %c0_i32 = arith.constant 0 : i32
    %c0_i32_0 = arith.constant 0 : i32
    %c0_i32_1 = arith.constant 0 : i32
    return %c0_i32, %c0_i32_0 : i32, i32
  }
  func.func @transform_3(%arg0: i32) -> (i32, i32) {
    %c0_i32 = arith.constant 0 : i32
    %c0_i32_0 = arith.constant 0 : i32
    %c0_i32_1 = arith.constant 0 : i32
    return %c0_i32, %c0_i32_0 : i32, i32
  }
  func.func @transform_4(%arg0: i32) -> (i32, i32) {
    %c0_i32 = arith.constant 0 : i32
    %c0_i32_0 = arith.constant 0 : i32
    %c0_i32_1 = arith.constant 0 : i32
    return %c0_i32, %c0_i32_0 : i32, i32
  }
  func.func @transform_5(%arg0: i32) -> (i32, i32) {
    %c0_i32 = arith.constant 0 : i32
    %c0_i32_0 = arith.constant 0 : i32
    %c0_i32_1 = arith.constant 0 : i32
    return %c0_i32, %c0_i32_0 : i32, i32
  }
  func.func @transform_6(%arg0: i32) -> (i32, i32) {
    %c0_i32 = arith.constant 0 : i32
    %c0_i32_0 = arith.constant 0 : i32
    %c0_i32_1 = arith.constant 0 : i32
    return %c0_i32, %c0_i32_0 : i32, i32
  }
  func.func @transform_7(%arg0: i32) -> (i32, i32) {
    %c0_i32 = arith.constant 0 : i32
    %c0_i32_0 = arith.constant 0 : i32
    %c0_i32_1 = arith.constant 0 : i32
    return %c0_i32, %c0_i32_0 : i32, i32
  }
  func.func @transform_8(%arg0: i32) -> (i32, i32) {
    %c0_i32 = arith.constant 0 : i32
    %c0_i32_0 = arith.constant 0 : i32
    return %arg0, %c0_i32 : i32, i32
  }
  func.func @transform_9(%arg0: i32) -> (i32, i32) {
    %c0_i32 = arith.constant 0 : i32
    %c0_i32_0 = arith.constant 0 : i32
    %c0_i32_1 = arith.constant 0 : i32
    return %c0_i32, %c0_i32_0 : i32, i32
  }
  func.func @transform_10(%arg0: i32) -> i32 {
    %c0_i32 = arith.constant 0 : i32
    %c0_i32_0 = arith.constant 0 : i32
    return %c0_i32 : i32
  }
  func.func @transform_11(%arg0: i32) -> (i32, i32) {
    %c0_i32 = arith.constant 0 : i32
    %c0_i32_0 = arith.constant 0 : i32
    %c0_i32_1 = arith.constant 0 : i32
    return %c0_i32, %c0_i32_0 : i32, i32
  }
}

</mosaic_0001>

<llo_original>
// kernel: dgis_forward.1
$region0: #{dgis_forward.1}
  #allocation0 [shape = 'u32[]', space=smem, size = 0x4, offset = 0x4, fixed_abs, tag = 'smem constant byte address 0x4 - core index']
  #allocation1 [shape = 'u32[72,128]{1,0:T(1,128)}', space=vmem, size = 0x9000, scoped, tag = 'internal scratch']
  #allocation2 [shape = 'f32[512,256]{1,0:T(8,128)}', space=vmem, size = 0x80000, scoped, tag = 'scratch operand']
  #allocation3 [shape = 'f32[256,256]{1,0:T(8,128)}', space=vmem, size = 0x40000, scoped, tag = 'scratch operand']
  #allocation4 [shape = 'f32[1,128]{1,0:T(1,128)}', space=vmem, size = 0x200, scoped, tag = 'scratch operand']
  %s0 = inlined_call_operand.vmem [shape: bf16[256,512], index: 0, kind: input, shape index: {}]
  %s1 = inlined_call_operand.vmem [shape: bf16[256,512], index: 1, kind: input, shape index: {}]
  %s2 = inlined_call_operand.vmem [shape: f32[1024,128], index: 2, kind: input, shape index: {}]
  %s3 = inlined_call_operand.vmem [shape: f32[128,128], index: 3, kind: input, shape index: {}]
  %s4 = inlined_call_operand.vmem [shape: f32[1,256], index: 4, kind: input, shape index: {}]
  %s5 = inlined_call_operand.vmem [shape: f32[256,128], index: 5, kind: input, shape index: {}]
  %s6 = inlined_call_operand.vmem [shape: f32[1,128], index: 6, kind: input, shape index: {}]
  %s7 = inlined_call_operand.vmem [shape: f32[128,128], index: 7, kind: input, shape index: {}]
  %s8 = inlined_call_operand.vmem [shape: f32[256,1], index: 8, kind: input, shape index: {}]
  %s9 = inlined_call_operand.vmem [shape: f32[2,256], index: 9, kind: input, shape index: {}]
  %s10 = inlined_call_operand.vmem [shape: f32[2], index: 10, kind: input, shape index: {}]
  %s11 = inlined_call_operand.vmem [shape: f32[2,256], index: 11, kind: output, shape index: {}]
  %s12 = sld [smem:[#allocation0]]
  $region66: #{dgis_forward.1} parent=0
    _
  %s14 = ssub.s32 1, %s12
  %s15 = scalar_select 0, %s14, %s12
  $region1: #{dgis_forward.1} parent=0
    #allocation5 [shape = 'u8[512]{0}', space=smem, size = 0x200, scoped, tag = 'input window, operand 10, single buffered']
    #allocation6 [shape = 's32[1]{0}', space=sflag, size = 0x4, scoped, tag = 'scoped memory for dgis_forward.1']
    %16 = vsyncpa [#allocation6], 0
    // Predicated region
    $region2: #{dgis_forward.1} parent=1 // pred_check
      _
    $region3: #{dgis_forward.1} parent=1 // pred_check_branch
      %18 = sbr.rel (0) target = $region5
    $region4: #{dgis_forward.1} parent=1 // pred_region
      _
    $region5: #{dgis_forward.1} parent=1 // pred_fallthru
      _
    // Predicated region
    $region6: #{dgis_forward.1} parent=1 // pred_check
      _
    $region7: #{dgis_forward.1} parent=1 // pred_check_branch
      %20 = sbr.rel (0) target = $region9
    $region8: #{dgis_forward.1} parent=1 // pred_region
      _
    $region9: #{dgis_forward.1} parent=1 // pred_fallthru
      _
    // Predicated region
    $region10: #{dgis_forward.1} parent=1 // pred_check
      _
    $region11: #{dgis_forward.1} parent=1 // pred_check_branch
      %22 = sbr.rel (0) target = $region13
    $region12: #{dgis_forward.1} parent=1 // pred_region
      _
    $region13: #{dgis_forward.1} parent=1 // pred_fallthru
      _
    // Predicated region
    $region14: #{dgis_forward.1} parent=1 // pred_check
      _
    $region15: #{dgis_forward.1} parent=1 // pred_check_branch
      %24 = sbr.rel (0) target = $region17
    $region16: #{dgis_forward.1} parent=1 // pred_region
      _
    $region17: #{dgis_forward.1} parent=1 // pred_fallthru
      _
    // Predicated region
    $region18: #{dgis_forward.1} parent=1 // pred_check
      _
    $region19: #{dgis_forward.1} parent=1 // pred_check_branch
      %26 = sbr.rel (0) target = $region21
    $region20: #{dgis_forward.1} parent=1 // pred_region
      _
    $region21: #{dgis_forward.1} parent=1 // pred_fallthru
      _
    // Predicated region
    $region22: #{dgis_forward.1} parent=1 // pred_check
      _
    $region23: #{dgis_forward.1} parent=1 // pred_check_branch
      %28 = sbr.rel (0) target = $region25
    $region24: #{dgis_forward.1} parent=1 // pred_region
      _
    $region25: #{dgis_forward.1} parent=1 // pred_fallthru
      _
    // Predicated region
    $region26: #{dgis_forward.1} parent=1 // pred_check
      _
    $region27: #{dgis_forward.1} parent=1 // pred_check_branch
      %30 = sbr.rel (0) target = $region29
    $region28: #{dgis_forward.1} parent=1 // pred_region
      _
    $region29: #{dgis_forward.1} parent=1 // pred_fallthru
      _
    // Predicated region
    $region30: #{dgis_forward.1} parent=1 // pred_check
      _
    $region31: #{dgis_forward.1} parent=1 // pred_check_branch
      %32 = sbr.rel (0) target = $region33
    $region32: #{dgis_forward.1} parent=1 // pred_region
      _
    $region33: #{dgis_forward.1} parent=1 // pred_fallthru
      _
    // Predicated region
    $region34: #{dgis_forward.1} parent=1 // pred_check
      _
    $region35: #{dgis_forward.1} parent=1 // pred_check_branch
      %34 = sbr.rel (0) target = $region37
    $region36: #{dgis_forward.1} parent=1 // pred_region
      _
    $region37: #{dgis_forward.1} parent=1 // pred_fallthru
      _
    // Predicated region
    $region38: #{dgis_forward.1} parent=1 // pred_check
      _
    $region39: #{dgis_forward.1} parent=1 // pred_check_branch
      %36 = sbr.rel (0) target = $region41
    $region40: #{dgis_forward.1} parent=1 // pred_region
      _
    $region41: #{dgis_forward.1} parent=1 // pred_fallthru
      _
    // Predicated region
    $region42: #{dgis_forward.1} parent=1 // pred_check
      _
    $region43: #{dgis_forward.1} parent=1 // pred_check_branch
      %38 = sbr.rel (0) target = $region45
    $region44: #{dgis_forward.1} parent=1 // pred_region
      %40 = vsyncadd [#allocation6], 0
      %s42 = sshll.u32 %s10, 4
      %s43 = int_to_ptr.vmem [resolvable:$true] %s42
      %45 = dma.vmem_to_smem %s43, 16, [#allocation5], [#allocation6]
    $region45: #{dgis_forward.1} parent=1 // pred_fallthru
      _
    // Predicated region
    $region46: #{dgis_forward.1} parent=1 // pred_check
      _
    $region47: #{dgis_forward.1} parent=1 // pred_check_branch
      %47 = sbr.rel (0) target = $region49
    $region48: #{dgis_forward.1} parent=1 // pred_region
      %49 = dma.done [#allocation6], 16
    $region49: #{dgis_forward.1} parent=1 // pred_fallthru
      _
    %50 = sfence
    %p51 = scmp.eq.s32.totalorder 0, 0
    // Predicated region
    $region50: #{dgis_forward.1} parent=1 // pred_check
      %p52 = pneg %p51
    $region51: #{dgis_forward.1} parent=1 // pred_check_branch
      %54 = sbr.rel (%p52) target = $region53
    $region52: #{dgis_forward.1} parent=1 // pred_region
      %v55 = vld [vmem:[%s2] sm:$0xff]
      %v56 = vld [vmem:[%s2 + $0x8] sm:$0xff]
      %v57 = vld [vmem:[%s2 + $0x10] sm:$0xff]
      %v58 = vld [vmem:[%s2 + $0x18] sm:$0xff]
      %v59 = vld [vmem:[%s2 + $0x20] sm:$0xff]
      %v60 = vld [vmem:[%s2 + $0x28] sm:$0xff]
      %v61 = vld [vmem:[%s2 + $0x30] sm:$0xff]
      %v62 = vld [vmem:[%s2 + $0x38] sm:$0xff]
      %v63 = vld [vmem:[%s2 + $0x40] sm:$0xff]
      %v64 = vld [vmem:[%s2 + $0x48] sm:$0xff]
      %v65 = vld [vmem:[%s2 + $0x50] sm:$0xff]
      %v66 = vld [vmem:[%s2 + $0x58] sm:$0xff]
      %v67 = vld [vmem:[%s2 + $0x60] sm:$0xff]
      %v68 = vld [vmem:[%s2 + $0x68] sm:$0xff]
      %v69 = vld [vmem:[%s2 + $0x70] sm:$0xff]
      %v70 = vld [vmem:[%s2 + $0x78] sm:$0xff]
      %v71 = vld [vmem:[%s2 + $0x80] sm:$0xff]
      %v72 = vld [vmem:[%s2 + $0x88] sm:$0xff]
      %v73 = vld [vmem:[%s2 + $0x90] sm:$0xff]
      %v74 = vld [vmem:[%s2 + $0x98] sm:$0xff]
      %v75 = vld [vmem:[%s2 + $0xa0] sm:$0xff]
      %v76 = vld [vmem:[%s2 + $0xa8] sm:$0xff]
      %v77 = vld [vmem:[%s2 + $0xb0] sm:$0xff]
      %v78 = vld [vmem:[%s2 + $0xb8] sm:$0xff]
      %v79 = vld [vmem:[%s2 + $0xc0] sm:$0xff]
      %v80 = vld [vmem:[%s2 + $0xc8] sm:$0xff]
      %v81 = vld [vmem:[%s2 + $0xd0] sm:$0xff]
      %v82 = vld [vmem:[%s2 + $0xd8] sm:$0xff]
      %v83 = vld [vmem:[%s2 + $0xe0] sm:$0xff]
      %v84 = vld [vmem:[%s2 + $0xe8] sm:$0xff]
      %v85 = vld [vmem:[%s2 + $0xf0] sm:$0xff]
      %v86 = vld [vmem:[%s2 + $0xf8] sm:$0xff]
      %v87 = vld [vmem:[%s2 + $0x100] sm:$0xff]
      %v88 = vld [vmem:[%s2 + $0x108] sm:$0xff]
      %v89 = vld [vmem:[%s2 + $0x110] sm:$0xff]
      %v90 = vld [vmem:[%s2 + $0x118] sm:$0xff]
      %v91 = vld [vmem:[%s2 + $0x120] sm:$0xff]
      %v92 = vld [vmem:[%s2 + $0x128] sm:$0xff]
      %v93 = vld [vmem:[%s2 + $0x130] sm:$0xff]
      %v94 = vld [vmem:[%s2 + $0x138] sm:$0xff]
      %v95 = vld [vmem:[%s2 + $0x140] sm:$0xff]
      %v96 = vld [vmem:[%s2 + $0x148] sm:$0xff]
      %v97 = vld [vmem:[%s2 + $0x150] sm:$0xff]
      %v98 = vld [vmem:[%s2 + $0x158] sm:$0xff]
      %v99 = vld [vmem:[%s2 + $0x160] sm:$0xff]
      %v100 = vld [vmem:[%s2 + $0x168] sm:$0xff]
      %v101 = vld [vmem:[%s2 + $0x170] sm:$0xff]
      %v102 = vld [vmem:[%s2 + $0x178] sm:$0xff]
      %v103 = vld [vmem:[%s2 + $0x180] sm:$0xff]
      %v104 = vld [vmem:[%s2 + $0x188] sm:$0xff]
      %v105 = vld [vmem:[%s2 + $0x190] sm:$0xff]
      %v106 = vld [vmem:[%s2 + $0x198] sm:$0xff]
      %v107 = vld [vmem:[%s2 + $0x1a0] sm:$0xff]
      %v108 = vld [vmem:[%s2 + $0x1a8] sm:$0xff]
      %v109 = vld [vmem:[%s2 + $0x1b0] sm:$0xff]
      %v110 = vld [vmem:[%s2 + $0x1b8] sm:$0xff]
      %v111 = vld [vmem:[%s2 + $0x1c0] sm:$0xff]
      %v112 = vld [vmem:[%s2 + $0x1c8] sm:$0xff]
      %v113 = vld [vmem:[%s2 + $0x1d0] sm:$0xff]
      %v114 = vld [vmem:[%s2 + $0x1d8] sm:$0xff]
      %v115 = vld [vmem:[%s2 + $0x1e0] sm:$0xff]
      %v116 = vld [vmem:[%s2 + $0x1e8] sm:$0xff]
      %v117 = vld [vmem:[%s2 + $0x1f0] sm:$0xff]
      %v118 = vld [vmem:[%s2 + $0x1f8] sm:$0xff]
      %v119 = vld [vmem:[%s2 + $0x200] sm:$0xff]
      %v120 = vld [vmem:[%s2 + $0x208] sm:$0xff]
      %v121 = vld [vmem:[%s2 + $0x210] sm:$0xff]
      %v122 = vld [vmem:[%s2 + $0x218] sm:$0xff]
      %v123 = vld [vmem:[%s2 + $0x220] sm:$0xff]
      %v124 = vld [vmem:[%s2 + $0x228] sm:$0xff]
      %v125 = vld [vmem:[%s2 + $0x230] sm:$0xff]
      %v126 = vld [vmem:[%s2 + $0x238] sm:$0xff]
      %v127 = vld [vmem:[%s2 + $0x240] sm:$0xff]
      %v128 = vld [vmem:[%s2 + $0x248] sm:$0xff]
      %v129 = vld [vmem:[%s2 + $0x250] sm:$0xff]
      %v130 = vld [vmem:[%s2 + $0x258] sm:$0xff]
      %v131 = vld [vmem:[%s2 + $0x260] sm:$0xff]
      %v132 = vld [vmem:[%s2 + $0x268] sm:$0xff]
      %v133 = vld [vmem:[%s2 + $0x270] sm:$0xff]
      %v134 = vld [vmem:[%s2 + $0x278] sm:$0xff]
      %v135 = vld [vmem:[%s2 + $0x280] sm:$0xff]
      %v136 = vld [vmem:[%s2 + $0x288] sm:$0xff]
      %v137 = vld [vmem:[%s2 + $0x290] sm:$0xff]
      %v138 = vld [vmem:[%s2 + $0x298] sm:$0xff]
      %v139 = vld [vmem:[%s2 + $0x2a0] sm:$0xff]
      %v140 = vld [vmem:[%s2 + $0x2a8] sm:$0xff]
      %v141 = vld [vmem:[%s2 + $0x2b0] sm:$0xff]
      %v142 = vld [vmem:[%s2 + $0x2b8] sm:$0xff]
      %v143 = vld [vmem:[%s2 + $0x2c0] sm:$0xff]
      %v144 = vld [vmem:[%s2 + $0x2c8] sm:$0xff]
      %v145 = vld [vmem:[%s2 + $0x2d0] sm:$0xff]
      %v146 = vld [vmem:[%s2 + $0x2d8] sm:$0xff]
      %v147 = vld [vmem:[%s2 + $0x2e0] sm:$0xff]
      %v148 = vld [vmem:[%s2 + $0x2e8] sm:$0xff]
      %v149 = vld [vmem:[%s2 + $0x2f0] sm:$0xff]
      %v150 = vld [vmem:[%s2 + $0x2f8] sm:$0xff]
      %v151 = vld [vmem:[%s2 + $0x300] sm:$0xff]
      %v152 = vld [vmem:[%s2 + $0x308] sm:$0xff]
      %v153 = vld [vmem:[%s2 + $0x310] sm:$0xff]
      %v154 = vld [vmem:[%s2 + $0x318] sm:$0xff]
      %v155 = vld [vmem:[%s2 + $0x320] sm:$0xff]
      %v156 = vld [vmem:[%s2 + $0x328] sm:$0xff]
      %v157 = vld [vmem:[%s2 + $0x330] sm:$0xff]
      %v158 = vld [vmem:[%s2 + $0x338] sm:$0xff]
      %v159 = vld [vmem:[%s2 + $0x340] sm:$0xff]
      %v160 = vld [vmem:[%s2 + $0x348] sm:$0xff]
      %v161 = vld [vmem:[%s2 + $0x350] sm:$0xff]
      %v162 = vld [vmem:[%s2 + $0x358] sm:$0xff]
      %v163 = vld [vmem:[%s2 + $0x360] sm:$0xff]
      %v164 = vld [vmem:[%s2 + $0x368] sm:$0xff]
      %v165 = vld [vmem:[%s2 + $0x370] sm:$0xff]
      %v166 = vld [vmem:[%s2 + $0x378] sm:$0xff]
      %v167 = vld [vmem:[%s2 + $0x380] sm:$0xff]
      %v168 = vld [vmem:[%s2 + $0x388] sm:$0xff]
      %v169 = vld [vmem:[%s2 + $0x390] sm:$0xff]
      %v170 = vld [vmem:[%s2 + $0x398] sm:$0xff]
      %v171 = vld [vmem:[%s2 + $0x3a0] sm:$0xff]
      %v172 = vld [vmem:[%s2 + $0x3a8] sm:$0xff]
      %v173 = vld [vmem:[%s2 + $0x3b0] sm:$0xff]
      %v174 = vld [vmem:[%s2 + $0x3b8] sm:$0xff]
      %v175 = vld [vmem:[%s2 + $0x3c0] sm:$0xff]
      %v176 = vld [vmem:[%s2 + $0x3c8] sm:$0xff]
      %v177 = vld [vmem:[%s2 + $0x3d0] sm:$0xff]
      %v178 = vld [vmem:[%s2 + $0x3d8] sm:$0xff]
      %v179 = vld [vmem:[%s2 + $0x3e0] sm:$0xff]
      %v180 = vld [vmem:[%s2 + $0x3e8] sm:$0xff]
      %v181 = vld [vmem:[%s2 + $0x3f0] sm:$0xff]
      %v182 = vld [vmem:[%s2 + $0x3f8] sm:$0xff]
      %v183 = vld [vmem:[%s3] sm:$0xff]
      %v184 = vld [vmem:[%s3 + $0x8] sm:$0xff]
      %v185 = vld [vmem:[%s3 + $0x10] sm:$0xff]
      %v186 = vld [vmem:[%s3 + $0x18] sm:$0xff]
      %v187 = vld [vmem:[%s3 + $0x20] sm:$0xff]
      %v188 = vld [vmem:[%s3 + $0x28] sm:$0xff]
      %v189 = vld [vmem:[%s3 + $0x30] sm:$0xff]
      %v190 = vld [vmem:[%s3 + $0x38] sm:$0xff]
      %v191 = vld [vmem:[%s3 + $0x40] sm:$0xff]
      %v192 = vld [vmem:[%s3 + $0x48] sm:$0xff]
      %v193 = vld [vmem:[%s3 + $0x50] sm:$0xff]
      %v194 = vld [vmem:[%s3 + $0x58] sm:$0xff]
      %v195 = vld [vmem:[%s3 + $0x60] sm:$0xff]
      %v196 = vld [vmem:[%s3 + $0x68] sm:$0xff]
      %v197 = vld [vmem:[%s3 + $0x70] sm:$0xff]
      %v198 = vld [vmem:[%s3 + $0x78] sm:$0xff]
      %199 = vmatpush.msra.mxu0 %v198
      %200 = vmatpush.msra.mxu0 %v197
      %201 = vmatpush.msra.mxu0 %v196
      %202 = vmatpush.msra.mxu0 %v195
      %203 = vmatpush.msra.mxu0 %v194
      %204 = vmatpush.msra.mxu0 %v193
      %205 = vmatpush.msra.mxu0 %v192
      %206 = vmatpush.msra.mxu0 %v191
      %207 = vmatpush.msra.mxu0 %v190
      %208 = vmatpush.msra.mxu0 %v189
      %209 = vmatpush.msra.mxu0 %v188
      %210 = vmatpush.msra.mxu0 %v187
      %211 = vmatpush.msra.mxu0 %v186
      %212 = vmatpush.msra.mxu0 %v185
      %213 = vmatpush.msra.mxu0 %v184
      %214 = vmatpush.msra.mxu0 %v183
      %215 = vmatmul.f32.gmra.mxu0 %v55
      %v216 = vpop.f32.mrf.mxu0
      %v217 = vadd.f32 0.0, %v216
      %218 = vmatmul.f32.gmra.mxu0 %v56
      %v219 = vpop.f32.mrf.mxu0
      %v220 = vadd.f32 0.0, %v219
      %221 = vmatmul.f32.gmra.mxu0 %v57
      %v222 = vpop.f32.mrf.mxu0
      %v223 = vadd.f32 0.0, %v222
      %224 = vmatmul.f32.gmra.mxu0 %v58
      %v225 = vpop.f32.mrf.mxu0
      %v226 = vadd.f32 0.0, %v225
      %227 = vmatmul.f32.gmra.mxu0 %v59
      %v228 = vpop.f32.mrf.mxu0
      %v229 = vadd.f32 0.0, %v228
      %230 = vmatmul.f32.gmra.mxu0 %v60
      %v231 = vpop.f32.mrf.mxu0
      %v232 = vadd.f32 0.0, %v231
      %233 = vmatmul.f32.gmra.mxu0 %v61
      %v234 = vpop.f32.mrf.mxu0
      %v235 = vadd.f32 0.0, %v234
      %236 = vmatmul.f32.gmra.mxu0 %v62
      %v237 = vpop.f32.mrf.mxu0
      %v238 = vadd.f32 0.0, %v237
      %239 = vmatmul.f32.gmra.mxu0 %v63
      %v240 = vpop.f32.mrf.mxu0
      %v241 = vadd.f32 0.0, %v240
      %242 = vmatmul.f32.gmra.mxu0 %v64
      %v243 = vpop.f32.mrf.mxu0
      %v244 = vadd.f32 0.0, %v243
      %245 = vmatmul.f32.gmra.mxu0 %v65
      %v246 = vpop.f32.mrf.mxu0
      %v247 = vadd.f32 0.0, %v246
      %248 = vmatmul.f32.gmra.mxu0 %v66
      %v249 = vpop.f32.mrf.mxu0
      %v250 = vadd.f32 0.0, %v249
      %251 = vmatmul.f32.gmra.mxu0 %v67
      %v252 = vpop.f32.mrf.mxu0
      %v253 = vadd.f32 0.0, %v252
      %254 = vmatmul.f32.gmra.mxu0 %v68
      %v255 = vpop.f32.mrf.mxu0
      %v256 = vadd.f32 0.0, %v255
      %257 = vmatmul.f32.gmra.mxu0 %v69
      %v258 = vpop.f32.mrf.mxu0
      %v259 = vadd.f32 0.0, %v258
      %260 = vmatmul.f32.gmra.mxu0 %v70
      %v261 = vpop.f32.mrf.mxu0
      %v262 = vadd.f32 0.0, %v261
      %263 = vmatmul.f32.gmra.mxu0 %v71
      %v264 = vpop.f32.mrf.mxu0
      %v265 = vadd.f32 0.0, %v264
      %266 = vmatmul.f32.gmra.mxu0 %v72
      %v267 = vpop.f32.mrf.mxu0
      %v268 = vadd.f32 0.0, %v267
      %269 = vmatmul.f32.gmra.mxu0 %v73
      %v270 = vpop.f32.mrf.mxu0
      %v271 = vadd.f32 0.0, %v270
      %272 = vmatmul.f32.gmra.mxu0 %v74
      %v273 = vpop.f32.mrf.mxu0
      %v274 = vadd.f32 0.0, %v273
      %275 = vmatmul.f32.gmra.mxu0 %v75
      %v276 = vpop.f32.mrf.mxu0
      %v277 = vadd.f32 0.0, %v276
      %278 = vmatmul.f32.gmra.mxu0 %v76
      %v279 = vpop.f32.mrf.mxu0
      %v280 = vadd.f32 0.0, %v279
      %281 = vmatmul.f32.gmra.mxu0 %v77
      %v282 = vpop.f32.mrf.mxu0
      %v283 = vadd.f32 0.0, %v282
      %284 = vmatmul.f32.gmra.mxu0 %v78
      %v285 = vpop.f32.mrf.mxu0
      %v286 = vadd.f32 0.0, %v285
      %287 = vmatmul.f32.gmra.mxu0 %v79
      %v288 = vpop.f32.mrf.mxu0
      %v289 = vadd.f32 0.0, %v288
      %290 = vmatmul.f32.gmra.mxu0 %v80
      %v291 = vpop.f32.mrf.mxu0
      %v292 = vadd.f32 0.0, %v291
      %293 = vmatmul.f32.gmra.mxu0 %v81
      %v294 = vpop.f32.mrf.mxu0
      %v295 = vadd.f32 0.0, %v294
      %296 = vmatmul.f32.gmra.mxu0 %v82
      %v297 = vpop.f32.mrf.mxu0
      %v298 = vadd.f32 0.0, %v297
      %299 = vmatmul.f32.gmra.mxu0 %v83
      %v300 = vpop.f32.mrf.mxu0
      %v301 = vadd.f32 0.0, %v300
      %302 = vmatmul.f32.gmra.mxu0 %v84
      %v303 = vpop.f32.mrf.mxu0
      %v304 = vadd.f32 0.0, %v303
      %305 = vmatmul.f32.gmra.mxu0 %v85
      %v306 = vpop.f32.mrf.mxu0
      %v307 = vadd.f32 0.0, %v306
      %308 = vmatmul.f32.gmra.mxu0 %v86
      %v309 = vpop.f32.mrf.mxu0
      %v310 = vadd.f32 0.0, %v309
      %311 = vmatmul.f32.gmra.mxu0 %v87
      %v312 = vpop.f32.mrf.mxu0
      %v313 = vadd.f32 0.0, %v312
      %314 = vmatmul.f32.gmra.mxu0 %v88
      %v315 = vpop.f32.mrf.mxu0
      %v316 = vadd.f32 0.0, %v315
      %317 = vmatmul.f32.gmra.mxu0 %v89
      %v318 = vpop.f32.mrf.mxu0
      %v319 = vadd.f32 0.0, %v318
      %320 = vmatmul.f32.gmra.mxu0 %v90
      %v321 = vpop.f32.mrf.mxu0
      %v322 = vadd.f32 0.0, %v321
      %323 = vmatmul.f32.gmra.mxu0 %v91
      %v324 = vpop.f32.mrf.mxu0
      %v325 = vadd.f32 0.0, %v324
      %326 = vmatmul.f32.gmra.mxu0 %v92
      %v327 = vpop.f32.mrf.mxu0
      %v328 = vadd.f32 0.0, %v327
      %329 = vmatmul.f32.gmra.mxu0 %v93
      %v330 = vpop.f32.mrf.mxu0
      %v331 = vadd.f32 0.0, %v330
      %332 = vmatmul.f32.gmra.mxu0 %v94
      %v333 = vpop.f32.mrf.mxu0
      %v334 = vadd.f32 0.0, %v333
      %335 = vmatmul.f32.gmra.mxu0 %v95
      %v336 = vpop.f32.mrf.mxu0
      %v337 = vadd.f32 0.0, %v336
      %338 = vmatmul.f32.gmra.mxu0 %v96
      %v339 = vpop.f32.mrf.mxu0
      %v340 = vadd.f32 0.0, %v339
      %341 = vmatmul.f32.gmra.mxu0 %v97
      %v342 = vpop.f32.mrf.mxu0
      %v343 = vadd.f32 0.0, %v342
      %344 = vmatmul.f32.gmra.mxu0 %v98
      %v345 = vpop.f32.mrf.mxu0
      %v346 = vadd.f32 0.0, %v345
      %347 = vmatmul.f32.gmra.mxu0 %v99
      %v348 = vpop.f32.mrf.mxu0
      %v349 = vadd.f32 0.0, %v348
      %350 = vmatmul.f32.gmra.mxu0 %v100
      %v351 = vpop.f32.mrf.mxu0
      %v352 = vadd.f32 0.0, %v351
      %353 = vmatmul.f32.gmra.mxu0 %v101
      %v354 = vpop.f32.mrf.mxu0
      %v355 = vadd.f32 0.0, %v354
      %356 = vmatmul.f32.gmra.mxu0 %v102
      %v357 = vpop.f32.mrf.mxu0
      %v358 = vadd.f32 0.0, %v357
      %359 = vmatmul.f32.gmra.mxu0 %v103
      %v360 = vpop.f32.mrf.mxu0
      %v361 = vadd.f32 0.0, %v360
      %362 = vmatmul.f32.gmra.mxu0 %v104
      %v363 = vpop.f32.mrf.mxu0
      %v364 = vadd.f32 0.0, %v363
      %365 = vmatmul.f32.gmra.mxu0 %v105
      %v366 = vpop.f32.mrf.mxu0
      %v367 = vadd.f32 0.0, %v366
      %368 = vmatmul.f32.gmra.mxu0 %v106
      %v369 = vpop.f32.mrf.mxu0
      %v370 = vadd.f32 0.0, %v369
      %371 = vmatmul.f32.gmra.mxu0 %v107
      %v372 = vpop.f32.mrf.mxu0
      %v373 = vadd.f32 0.0, %v372
      %374 = vmatmul.f32.gmra.mxu0 %v108
      %v375 = vpop.f32.mrf.mxu0
      %v376 = vadd.f32 0.0, %v375
      %377 = vmatmul.f32.gmra.mxu0 %v109
      %v378 = vpop.f32.mrf.mxu0
      %v379 = vadd.f32 0.0, %v378
      %380 = vmatmul.f32.gmra.mxu0 %v110
      %v381 = vpop.f32.mrf.mxu0
      %v382 = vadd.f32 0.0, %v381
      %383 = vmatmul.f32.gmra.mxu0 %v111
      %v384 = vpop.f32.mrf.mxu0
      %v385 = vadd.f32 0.0, %v384
      %386 = vmatmul.f32.gmra.mxu0 %v112
      %v387 = vpop.f32.mrf.mxu0
      %v388 = vadd.f32 0.0, %v387
      %389 = vmatmul.f32.gmra.mxu0 %v113
      %v390 = vpop.f32.mrf.mxu0
      %v391 = vadd.f32 0.0, %v390
      %392 = vmatmul.f32.gmra.mxu0 %v114
      %v393 = vpop.f32.mrf.mxu0
      %v394 = vadd.f32 0.0, %v393
      %395 = vmatmul.f32.gmra.mxu0 %v115
      %v396 = vpop.f32.mrf.mxu0
      %v397 = vadd.f32 0.0, %v396
      %398 = vmatmul.f32.gmra.mxu0 %v116
      %v399 = vpop.f32.mrf.mxu0
      %v400 = vadd.f32 0.0, %v399
      %401 = vmatmul.f32.gmra.mxu0 %v117
      %v402 = vpop.f32.mrf.mxu0
      %v403 = vadd.f32 0.0, %v402
      %404 = vmatmul.f32.gmra.mxu0 %v118
      %v405 = vpop.f32.mrf.mxu0
      %v406 = vadd.f32 0.0, %v405
      %407 = vmatmul.f32.gmra.mxu0 %v119
      %v408 = vpop.f32.mrf.mxu0
      %v409 = vadd.f32 0.0, %v408
      %410 = vmatmul.f32.gmra.mxu0 %v120
      %v411 = vpop.f32.mrf.mxu0
      %v412 = vadd.f32 0.0, %v411
      %413 = vmatmul.f32.gmra.mxu0 %v121
      %v414 = vpop.f32.mrf.mxu0
      %v415 = vadd.f32 0.0, %v414
      %416 = vmatmul.f32.gmra.mxu0 %v122
      %v417 = vpop.f32.mrf.mxu0
      %v418 = vadd.f32 0.0, %v417
      %419 = vmatmul.f32.gmra.mxu0 %v123
      %v420 = vpop.f32.mrf.mxu0
      %v421 = vadd.f32 0.0, %v420
      %422 = vmatmul.f32.gmra.mxu0 %v124
      %v423 = vpop.f32.mrf.mxu0
      %v424 = vadd.f32 0.0, %v423
      %425 = vmatmul.f32.gmra.mxu0 %v125
      %v426 = vpop.f32.mrf.mxu0
      %v427 = vadd.f32 0.0, %v426
      %428 = vmatmul.f32.gmra.mxu0 %v126
      %v429 = vpop.f32.mrf.mxu0
      %v430 = vadd.f32 0.0, %v429
      %431 = vmatmul.f32.gmra.mxu0 %v127
      %v432 = vpop.f32.mrf.mxu0
      %v433 = vadd.f32 0.0, %v432
      %434 = vmatmul.f32.gmra.mxu0 %v128
      %v435 = vpop.f32.mrf.mxu0
      %v436 = vadd.f32 0.0, %v435
      %437 = vmatmul.f32.gmra.mxu0 %v129
      %v438 = vpop.f32.mrf.mxu0
      %v439 = vadd.f32 0.0, %v438
      %440 = vmatmul.f32.gmra.mxu0 %v130
      %v441 = vpop.f32.mrf.mxu0
      %v442 = vadd.f32 0.0, %v441
      %443 = vmatmul.f32.gmra.mxu0 %v131
      %v444 = vpop.f32.mrf.mxu0
      %v445 = vadd.f32 0.0, %v444
      %446 = vmatmul.f32.gmra.mxu0 %v132
      %v447 = vpop.f32.mrf.mxu0
      %v448 = vadd.f32 0.0, %v447
      %449 = vmatmul.f32.gmra.mxu0 %v133
      %v450 = vpop.f32.mrf.mxu0
      %v451 = vadd.f32 0.0, %v450
      %452 = vmatmul.f32.gmra.mxu0 %v134
      %v453 = vpop.f32.mrf.mxu0
      %v454 = vadd.f32 0.0, %v453
      %455 = vmatmul.f32.gmra.mxu0 %v135
      %v456 = vpop.f32.mrf.mxu0
      %v457 = vadd.f32 0.0, %v456
      %458 = vmatmul.f32.gmra.mxu0 %v136
      %v459 = vpop.f32.mrf.mxu0
      %v460 = vadd.f32 0.0, %v459
      %461 = vmatmul.f32.gmra.mxu0 %v137
      %v462 = vpop.f32.mrf.mxu0
      %v463 = vadd.f32 0.0, %v462
      %464 = vmatmul.f32.gmra.mxu0 %v138
      %v465 = vpop.f32.mrf.mxu0
      %v466 = vadd.f32 0.0, %v465
      %467 = vmatmul.f32.gmra.mxu0 %v139
      %v468 = vpop.f32.mrf.mxu0
      %v469 = vadd.f32 0.0, %v468
      %470 = vmatmul.f32.gmra.mxu0 %v140
      %v471 = vpop.f32.mrf.mxu0
      %v472 = vadd.f32 0.0, %v471
      %473 = vmatmul.f32.gmra.mxu0 %v141
      %v474 = vpop.f32.mrf.mxu0
      %v475 = vadd.f32 0.0, %v474
      %476 = vmatmul.f32.gmra.mxu0 %v142
      %v477 = vpop.f32.mrf.mxu0
      %v478 = vadd.f32 0.0, %v477
      %479 = vmatmul.f32.gmra.mxu0 %v143
      %v480 = vpop.f32.mrf.mxu0
      %v481 = vadd.f32 0.0, %v480
      %482 = vmatmul.f32.gmra.mxu0 %v144
      %v483 = vpop.f32.mrf.mxu0
      %v484 = vadd.f32 0.0, %v483
      %485 = vmatmul.f32.gmra.mxu0 %v145
      %v486 = vpop.f32.mrf.mxu0
      %v487 = vadd.f32 0.0, %v486
      %488 = vmatmul.f32.gmra.mxu0 %v146
      %v489 = vpop.f32.mrf.mxu0
      %v490 = vadd.f32 0.0, %v489
      %491 = vmatmul.f32.gmra.mxu0 %v147
      %v492 = vpop.f32.mrf.mxu0
      %v493 = vadd.f32 0.0, %v492
      %494 = vmatmul.f32.gmra.mxu0 %v148
      %v495 = vpop.f32.mrf.mxu0
      %v496 = vadd.f32 0.0, %v495
      %497 = vmatmul.f32.gmra.mxu0 %v149
      %v498 = vpop.f32.mrf.mxu0
      %v499 = vadd.f32 0.0, %v498
      %500 = vmatmul.f32.gmra.mxu0 %v150
      %v501 = vpop.f32.mrf.mxu0
      %v502 = vadd.f32 0.0, %v501
      %503 = vmatmul.f32.gmra.mxu0 %v151
      %v504 = vpop.f32.mrf.mxu0
      %v505 = vadd.f32 0.0, %v504
      %506 = vmatmul.f32.gmra.mxu0 %v152
      %v507 = vpop.f32.mrf.mxu0
      %v508 = vadd.f32 0.0, %v507
      %509 = vmatmul.f32.gmra.mxu0 %v153
      %v510 = vpop.f32.mrf.mxu0
      %v511 = vadd.f32 0.0, %v510
      %512 = vmatmul.f32.gmra.mxu0 %v154
      %v513 = vpop.f32.mrf.mxu0
      %v514 = vadd.f32 0.0, %v513
      %515 = vmatmul.f32.gmra.mxu0 %v155
      %v516 = vpop.f32.mrf.mxu0
      %v517 = vadd.f32 0.0, %v516
      %518 = vmatmul.f32.gmra.mxu0 %v156
      %v519 = vpop.f32.mrf.mxu0
      %v520 = vadd.f32 0.0, %v519
      %521 = vmatmul.f32.gmra.mxu0 %v157
      %v522 = vpop.f32.mrf.mxu0
      %v523 = vadd.f32 0.0, %v522
      %524 = vmatmul.f32.gmra.mxu0 %v158
      %v525 = vpop.f32.mrf.mxu0
      %v526 = vadd.f32 0.0, %v525
      %527 = vmatmul.f32.gmra.mxu0 %v159
      %v528 = vpop.f32.mrf.mxu0
      %v529 = vadd.f32 0.0, %v528
      %530 = vmatmul.f32.gmra.mxu0 %v160
      %v531 = vpop.f32.mrf.mxu0
      %v532 = vadd.f32 0.0, %v531
      %533 = vmatmul.f32.gmra.mxu0 %v161
      %v534 = vpop.f32.mrf.mxu0
      %v535 = vadd.f32 0.0, %v534
      %536 = vmatmul.f32.gmra.mxu0 %v162
      %v537 = vpop.f32.mrf.mxu0
      %v538 = vadd.f32 0.0, %v537
      %539 = vmatmul.f32.gmra.mxu0 %v163
      %v540 = vpop.f32.mrf.mxu0
      %v541 = vadd.f32 0.0, %v540
      %542 = vmatmul.f32.gmra.mxu0 %v164
      %v543 = vpop.f32.mrf.mxu0
      %v544 = vadd.f32 0.0, %v543
      %545 = vmatmul.f32.gmra.mxu0 %v165
      %v546 = vpop.f32.mrf.mxu0
      %v547 = vadd.f32 0.0, %v546
      %548 = vmatmul.f32.gmra.mxu0 %v166
      %v549 = vpop.f32.mrf.mxu0
      %v550 = vadd.f32 0.0, %v549
      %551 = vmatmul.f32.gmra.mxu0 %v167
      %v552 = vpop.f32.mrf.mxu0
      %v553 = vadd.f32 0.0, %v552
      %554 = vmatmul.f32.gmra.mxu0 %v168
      %v555 = vpop.f32.mrf.mxu0
      %v556 = vadd.f32 0.0, %v555
      %557 = vmatmul.f32.gmra.mxu0 %v169
      %v558 = vpop.f32.mrf.mxu0
      %v559 = vadd.f32 0.0, %v558
      %560 = vmatmul.f32.gmra.mxu0 %v170
      %v561 = vpop.f32.mrf.mxu0
      %v562 = vadd.f32 0.0, %v561
      %563 = vmatmul.f32.gmra.mxu0 %v171
      %v564 = vpop.f32.mrf.mxu0
      %v565 = vadd.f32 0.0, %v564
      %566 = vmatmul.f32.gmra.mxu0 %v172
      %v567 = vpop.f32.mrf.mxu0
      %v568 = vadd.f32 0.0, %v567
      %569 = vmatmul.f32.gmra.mxu0 %v173
      %v570 = vpop.f32.mrf.mxu0
      %v571 = vadd.f32 0.0, %v570
      %572 = vmatmul.f32.gmra.mxu0 %v174
      %v573 = vpop.f32.mrf.mxu0
      %v574 = vadd.f32 0.0, %v573
      %575 = vmatmul.f32.gmra.mxu0 %v175
      %v576 = vpop.f32.mrf.mxu0
      %v577 = vadd.f32 0.0, %v576
      %578 = vmatmul.f32.gmra.mxu0 %v176
      %v579 = vpop.f32.mrf.mxu0
      %v580 = vadd.f32 0.0, %v579
      %581 = vmatmul.f32.gmra.mxu0 %v177
      %v582 = vpop.f32.mrf.mxu0
      %v583 = vadd.f32 0.0, %v582
      %584 = vmatmul.f32.gmra.mxu0 %v178
      %v585 = vpop.f32.mrf.mxu0
      %v586 = vadd.f32 0.0, %v585
      %587 = vmatmul.f32.gmra.mxu0 %v179
      %v588 = vpop.f32.mrf.mxu0
      %v589 = vadd.f32 0.0, %v588
      %590 = vmatmul.f32.gmra.mxu0 %v180
      %v591 = vpop.f32.mrf.mxu0
      %v592 = vadd.f32 0.0, %v591
      %593 = vmatmul.f32.gmra.mxu0 %v181
      %v594 = vpop.f32.mrf.mxu0
      %v595 = vadd.f32 0.0, %v594
      %596 = vmatmul.f32.gmra.mxu0 %v182
      %v597 = vpop.f32.mrf.mxu0
      %v598 = vadd.f32 0.0, %v597
      %599 = vdwg.mxu0
      %600 = vst [vmem:[#allocation2] sm:$0xff] %v217
      %601 = vst [vmem:[#allocation2 + $0x8] sm:$0xff] %v409
      %602 = vst [vmem:[#allocation2 + $0x10] sm:$0xff] %v220
      %603 = vst [vmem:[#allocation2 + $0x18] sm:$0xff] %v412
      %604 = vst [vmem:[#allocation2 + $0x20] sm:$0xff] %v223
      %605 = vst [vmem:[#allocation2 + $0x28] sm:$0xff] %v415
      %606 = vst [vmem:[#allocation2 + $0x30] sm:$0xff] %v226
      %607 = vst [vmem:[#allocation2 + $0x38] sm:$0xff] %v418
      %608 = vst [vmem:[#allocation2 + $0x40] sm:$0xff] %v229
      %609 = vst [vmem:[#allocation2 + $0x48] sm:$0xff] %v421
      %610 = vst [vmem:[#allocation2 + $0x50] sm:$0xff] %v232
      %611 = vst [vmem:[#allocation2 + $0x58] sm:$0xff] %v424
      %612 = vst [vmem:[#allocation2 + $0x60] sm:$0xff] %v235
      %613 = vst [vmem:[#allocation2 + $0x68] sm:$0xff] %v427
      %614 = vst [vmem:[#allocation2 + $0x70] sm:$0xff] %v238
      %615 = vst [vmem:[#allocation2 + $0x78] sm:$0xff] %v430
      %616 = vst [vmem:[#allocation2 + $0x80] sm:$0xff] %v241
      %617 = vst [vmem:[#allocation2 + $0x88] sm:$0xff] %v433
      %618 = vst [vmem:[#allocation2 + $0x90] sm:$0xff] %v244
      %619 = vst [vmem:[#allocation2 + $0x98] sm:$0xff] %v436
      %620 = vst [vmem:[#allocation2 + $0xa0] sm:$0xff] %v247
      %621 = vst [vmem:[#allocation2 + $0xa8] sm:$0xff] %v439
      %622 = vst [vmem:[#allocation2 + $0xb0] sm:$0xff] %v250
      %623 = vst [vmem:[#allocation2 + $0xb8] sm:$0xff] %v442
      %624 = vst [vmem:[#allocation2 + $0xc0] sm:$0xff] %v253
      %625 = vst [vmem:[#allocation2 + $0xc8] sm:$0xff] %v445
      %626 = vst [vmem:[#allocation2 + $0xd0] sm:$0xff] %v256
      %627 = vst [vmem:[#allocation2 + $0xd8] sm:$0xff] %v448
      %628 = vst [vmem:[#allocation2 + $0xe0] sm:$0xff] %v259
      %629 = vst [vmem:[#allocation2 + $0xe8] sm:$0xff] %v451
      %630 = vst [vmem:[#allocation2 + $0xf0] sm:$0xff] %v262
      %631 = vst [vmem:[#allocation2 + $0xf8] sm:$0xff] %v454
      %632 = vst [vmem:[#allocation2 + $0x100] sm:$0xff] %v265
      %633 = vst [vmem:[#allocation2 + $0x108] sm:$0xff] %v457
      %634 = vst [vmem:[#allocation2 + $0x110] sm:$0xff] %v268
      %635 = vst [vmem:[#allocation2 + $0x118] sm:$0xff] %v460
      %636 = vst [vmem:[#allocation2 + $0x120] sm:$0xff] %v271
      %637 = vst [vmem:[#allocation2 + $0x128] sm:$0xff] %v463
      %638 = vst [vmem:[#allocation2 + $0x130] sm:$0xff] %v274
      %639 = vst [vmem:[#allocation2 + $0x138] sm:$0xff] %v466
      %640 = vst [vmem:[#allocation2 + $0x140] sm:$0xff] %v277
      %641 = vst [vmem:[#allocation2 + $0x148] sm:$0xff] %v469
      %642 = vst [vmem:[#allocation2 + $0x150] sm:$0xff] %v280
      %643 = vst [vmem:[#allocation2 + $0x158] sm:$0xff] %v472
      %644 = vst [vmem:[#allocation2 + $0x160] sm:$0xff] %v283
      %645 = vst [vmem:[#allocation2 + $0x168] sm:$0xff] %v475
      %646 = vst [vmem:[#allocation2 + $0x170] sm:$0xff] %v286
      %647 = vst [vmem:[#allocation2 + $0x178] sm:$0xff] %v478
      %648 = vst [vmem:[#allocation2 + $0x180] sm:$0xff] %v289
      %649 = vst [vmem:[#allocation2 + $0x188] sm:$0xff] %v481
      %650 = vst [vmem:[#allocation2 + $0x190] sm:$0xff] %v292
      %651 = vst [vmem:[#allocation2 + $0x198] sm:$0xff] %v484
      %652 = vst [vmem:[#allocation2 + $0x1a0] sm:$0xff] %v295
      %653 = vst [vmem:[#allocation2 + $0x1a8] sm:$0xff] %v487
      %654 = vst [vmem:[#allocation2 + $0x1b0] sm:$0xff] %v298
      %655 = vst [vmem:[#allocation2 + $0x1b8] sm:$0xff] %v490
      %656 = vst [vmem:[#allocation2 + $0x1c0] sm:$0xff] %v301
      %657 = vst [vmem:[#allocation2 + $0x1c8] sm:$0xff] %v493
      %658 = vst [vmem:[#allocation2 + $0x1d0] sm:$0xff] %v304
      %659 = vst [vmem:[#allocation2 + $0x1d8] sm:$0xff] %v496
      %660 = vst [vmem:[#allocation2 + $0x1e0] sm:$0xff] %v307
      %661 = vst [vmem:[#allocation2 + $0x1e8] sm:$0xff] %v499
      %662 = vst [vmem:[#allocation2 + $0x1f0] sm:$0xff] %v310
      %663 = vst [vmem:[#allocation2 + $0x1f8] sm:$0xff] %v502
      %664 = vst [vmem:[#allocation2 + $0x200] sm:$0xff] %v313
      %665 = vst [vmem:[#allocation2 + $0x208] sm:$0xff] %v505
      %666 = vst [vmem:[#allocation2 + $0x210] sm:$0xff] %v316
      %667 = vst [vmem:[#allocation2 + $0x218] sm:$0xff] %v508
      %668 = vst [vmem:[#allocation2 + $0x220] sm:$0xff] %v319
      %669 = vst [vmem:[#allocation2 + $0x228] sm:$0xff] %v511
      %670 = vst [vmem:[#allocation2 + $0x230] sm:$0xff] %v322
      %671 = vst [vmem:[#allocation2 + $0x238] sm:$0xff] %v514
      %672 = vst [vmem:[#allocation2 + $0x240] sm:$0xff] %v325
      %673 = vst [vmem:[#allocation2 + $0x248] sm:$0xff] %v517
      %674 = vst [vmem:[#allocation2 + $0x250] sm:$0xff] %v328
      %675 = vst [vmem:[#allocation2 + $0x258] sm:$0xff] %v520
      %676 = vst [vmem:[#allocation2 + $0x260] sm:$0xff] %v331
      %677 = vst [vmem:[#allocation2 + $0x268] sm:$0xff] %v523
      %678 = vst [vmem:[#allocation2 + $0x270] sm:$0xff] %v334
      %679 = vst [vmem:[#allocation2 + $0x278] sm:$0xff] %v526
      %680 = vst [vmem:[#allocation2 + $0x280] sm:$0xff] %v337
      %681 = vst [vmem:[#allocation2 + $0x288] sm:$0xff] %v529
      %682 = vst [vmem:[#allocation2 + $0x290] sm:$0xff] %v340
      %683 = vst [vmem:[#allocation2 + $0x298] sm:$0xff] %v532
      %684 = vst [vmem:[#allocation2 + $0x2a0] sm:$0xff] %v343
      %685 = vst [vmem:[#allocation2 + $0x2a8] sm:$0xff] %v535
      %686 = vst [vmem:[#allocation2 + $0x2b0] sm:$0xff] %v346
      %687 = vst [vmem:[#allocation2 + $0x2b8] sm:$0xff] %v538
      %688 = vst [vmem:[#allocation2 + $0x2c0] sm:$0xff] %v349
      %689 = vst [vmem:[#allocation2 + $0x2c8] sm:$0xff] %v541
      %690 = vst [vmem:[#allocation2 + $0x2d0] sm:$0xff] %v352
      %691 = vst [vmem:[#allocation2 + $0x2d8] sm:$0xff] %v544
      %692 = vst [vmem:[#allocation2 + $0x2e0] sm:$0xff] %v355
      %693 = vst [vmem:[#allocation2 + $0x2e8] sm:$0xff] %v547
      %694 = vst [vmem:[#allocation2 + $0x2f0] sm:$0xff] %v358
      %695 = vst [vmem:[#allocation2 + $0x2f8] sm:$0xff] %v550
      %696 = vst [vmem:[#allocation2 + $0x300] sm:$0xff] %v361
      %697 = vst [vmem:[#allocation2 + $0x308] sm:$0xff] %v553
      %698 = vst [vmem:[#allocation2 + $0x310] sm:$0xff] %v364
      %699 = vst [vmem:[#allocation2 + $0x318] sm:$0xff] %v556
      %700 = vst [vmem:[#allocation2 + $0x320] sm:$0xff] %v367
      %701 = vst [vmem:[#allocation2 + $0x328] sm:$0xff] %v559
      %702 = vst [vmem:[#allocation2 + $0x330] sm:$0xff] %v370
      %703 = vst [vmem:[#allocation2 + $0x338] sm:$0xff] %v562
      %704 = vst [vmem:[#allocation2 + $0x340] sm:$0xff] %v373
      %705 = vst [vmem:[#allocation2 + $0x348] sm:$0xff] %v565
      %706 = vst [vmem:[#allocation2 + $0x350] sm:$0xff] %v376
      %707 = vst [vmem:[#allocation2 + $0x358] sm:$0xff] %v568
      %708 = vst [vmem:[#allocation2 + $0x360] sm:$0xff] %v379
      %709 = vst [vmem:[#allocation2 + $0x368] sm:$0xff] %v571
      %710 = vst [vmem:[#allocation2 + $0x370] sm:$0xff] %v382
      %711 = vst [vmem:[#allocation2 + $0x378] sm:$0xff] %v574
      %712 = vst [vmem:[#allocation2 + $0x380] sm:$0xff] %v385
      %713 = vst [vmem:[#allocation2 + $0x388] sm:$0xff] %v577
      %714 = vst [vmem:[#allocation2 + $0x390] sm:$0xff] %v388
      %715 = vst [vmem:[#allocation2 + $0x398] sm:$0xff] %v580
      %716 = vst [vmem:[#allocation2 + $0x3a0] sm:$0xff] %v391
      %717 = vst [vmem:[#allocation2 + $0x3a8] sm:$0xff] %v583
      %718 = vst [vmem:[#allocation2 + $0x3b0] sm:$0xff] %v394
      %719 = vst [vmem:[#allocation2 + $0x3b8] sm:$0xff] %v586
      %720 = vst [vmem:[#allocation2 + $0x3c0] sm:$0xff] %v397
      %721 = vst [vmem:[#allocation2 + $0x3c8] sm:$0xff] %v589
      %722 = vst [vmem:[#allocation2 + $0x3d0] sm:$0xff] %v400
      %723 = vst [vmem:[#allocation2 + $0x3d8] sm:$0xff] %v592
      %724 = vst [vmem:[#allocation2 + $0x3e0] sm:$0xff] %v403
      %725 = vst [vmem:[#allocation2 + $0x3e8] sm:$0xff] %v595
      %726 = vst [vmem:[#allocation2 + $0x3f0] sm:$0xff] %v406
      %727 = vst [vmem:[#allocation2 + $0x3f8] sm:$0xff] %v598
      %728 = vst [vmem:[#allocation4] sm:$0x1] 0.0
    $region53: #{dgis_forward.1} parent=1 // pred_fallthru
      _
    %v729 = vld [vmem:[#allocation2] sm:$0xff]
    %v730 = vld [vmem:[#allocation2 + $0x8] sm:$0xff]
    %v731 = vld [vmem:[#allocation2 + $0x10] sm:$0xff]
    %v732 = vld [vmem:[#allocation2 + $0x18] sm:$0xff]
    %v733 = vld [vmem:[#allocation2 + $0x20] sm:$0xff]
    %v734 = vld [vmem:[#allocation2 + $0x28] sm:$0xff]
    %v735 = vld [vmem:[#allocation2 + $0x30] sm:$0xff]
    %v736 = vld [vmem:[#allocation2 + $0x38] sm:$0xff]
    %v737 = vld [vmem:[#allocation2 + $0x40] sm:$0xff]
    %v738 = vld [vmem:[#allocation2 + $0x48] sm:$0xff]
    %v739 = vld [vmem:[#allocation2 + $0x50] sm:$0xff]
    %v740 = vld [vmem:[#allocation2 + $0x58] sm:$0xff]
    %v741 = vld [vmem:[#allocation2 + $0x60] sm:$0xff]
    %v742 = vld [vmem:[#allocation2 + $0x68] sm:$0xff]
    %v743 = vld [vmem:[#allocation2 + $0x70] sm:$0xff]
    %v744 = vld [vmem:[#allocation2 + $0x78] sm:$0xff]
    %v745 = vld [vmem:[#allocation2 + $0x80] sm:$0xff]
    %v746 = vld [vmem:[#allocation2 + $0x88] sm:$0xff]
    %v747 = vld [vmem:[#allocation2 + $0x90] sm:$0xff]
    %v748 = vld [vmem:[#allocation2 + $0x98] sm:$0xff]
    %v749 = vld [vmem:[#allocation2 + $0xa0] sm:$0xff]
    %v750 = vld [vmem:[#allocation2 + $0xa8] sm:$0xff]
    %v751 = vld [vmem:[#allocation2 + $0xb0] sm:$0xff]
    %v752 = vld [vmem:[#allocation2 + $0xb8] sm:$0xff]
    %v753 = vld [vmem:[#allocation2 + $0xc0] sm:$0xff]
    %v754 = vld [vmem:[#allocation2 + $0xc8] sm:$0xff]
    %v755 = vld [vmem:[#allocation2 + $0xd0] sm:$0xff]
    %v756 = vld [vmem:[#allocation2 + $0xd8] sm:$0xff]
    %v757 = vld [vmem:[#allocation2 + $0xe0] sm:$0xff]
    %v758 = vld [vmem:[#allocation2 + $0xe8] sm:$0xff]
    %v759 = vld [vmem:[#allocation2 + $0xf0] sm:$0xff]
    %v760 = vld [vmem:[#allocation2 + $0xf8] sm:$0xff]
    %v761 = vld [vmem:[#allocation2 + $0x100] sm:$0xff]
    %v762 = vld [vmem:[#allocation2 + $0x108] sm:$0xff]
    %v763 = vld [vmem:[#allocation2 + $0x110] sm:$0xff]
    %v764 = vld [vmem:[#allocation2 + $0x118] sm:$0xff]
    %v765 = vld [vmem:[#allocation2 + $0x120] sm:$0xff]
    %v766 = vld [vmem:[#allocation2 + $0x128] sm:$0xff]
    %v767 = vld [vmem:[#allocation2 + $0x130] sm:$0xff]
    %v768 = vld [vmem:[#allocation2 + $0x138] sm:$0xff]
    %v769 = vld [vmem:[#allocation2 + $0x140] sm:$0xff]
    %v770 = vld [vmem:[#allocation2 + $0x148] sm:$0xff]
    %v771 = vld [vmem:[#allocation2 + $0x150] sm:$0xff]
    %v772 = vld [vmem:[#allocation2 + $0x158] sm:$0xff]
    %v773 = vld [vmem:[#allocation2 + $0x160] sm:$0xff]
    %v774 = vld [vmem:[#allocation2 + $0x168] sm:$0xff]
    %v775 = vld [vmem:[#allocation2 + $0x170] sm:$0xff]
    %v776 = vld [vmem:[#allocation2 + $0x178] sm:$0xff]
    %v777 = vld [vmem:[#allocation2 + $0x180] sm:$0xff]
    %v778 = vld [vmem:[#allocation2 + $0x188] sm:$0xff]
    %v779 = vld [vmem:[#allocation2 + $0x190] sm:$0xff]
    %v780 = vld [vmem:[#allocation2 + $0x198] sm:$0xff]
    %v781 = vld [vmem:[#allocation2 + $0x1a0] sm:$0xff]
    %v782 = vld [vmem:[#allocation2 + $0x1a8] sm:$0xff]
    %v783 = vld [vmem:[#allocation2 + $0x1b0] sm:$0xff]
    %v784 = vld [vmem:[#allocation2 + $0x1b8] sm:$0xff]
    %v785 = vld [vmem:[#allocation2 + $0x1c0] sm:$0xff]
    %v786 = vld [vmem:[#allocation2 + $0x1c8] sm:$0xff]
    %v787 = vld [vmem:[#allocation2 + $0x1d0] sm:$0xff]
    %v788 = vld [vmem:[#allocation2 + $0x1d8] sm:$0xff]
    %v789 = vld [vmem:[#allocation2 + $0x1e0] sm:$0xff]
    %v790 = vld [vmem:[#allocation2 + $0x1e8] sm:$0xff]
    %v791 = vld [vmem:[#allocation2 + $0x1f0] sm:$0xff]
    %v792 = vld [vmem:[#allocation2 + $0x1f8] sm:$0xff]
    %v793 = vld [vmem:[#allocation2 + $0x200] sm:$0xff]
    %v794 = vld [vmem:[#allocation2 + $0x208] sm:$0xff]
    %v795 = vld [vmem:[#allocation2 + $0x210] sm:$0xff]
    %v796 = vld [vmem:[#allocation2 + $0x218] sm:$0xff]
    %v797 = vld [vmem:[#allocation2 + $0x220] sm:$0xff]
    %v798 = vld [vmem:[#allocation2 + $0x228] sm:$0xff]
    %v799 = vld [vmem:[#allocation2 + $0x230] sm:$0xff]
    %v800 = vld [vmem:[#allocation2 + $0x238] sm:$0xff]
    %v801 = vld [vmem:[#allocation2 + $0x240] sm:$0xff]
    %v802 = vld [vmem:[#allocation2 + $0x248] sm:$0xff]
    %v803 = vld [vmem:[#allocation2 + $0x250] sm:$0xff]
    %v804 = vld [vmem:[#allocation2 + $0x258] sm:$0xff]
    %v805 = vld [vmem:[#allocation2 + $0x260] sm:$0xff]
    %v806 = vld [vmem:[#allocation2 + $0x268] sm:$0xff]
    %v807 = vld [vmem:[#allocation2 + $0x270] sm:$0xff]
    %v808 = vld [vmem:[#allocation2 + $0x278] sm:$0xff]
    %v809 = vld [vmem:[#allocation2 + $0x280] sm:$0xff]
    %v810 = vld [vmem:[#allocation2 + $0x288] sm:$0xff]
    %v811 = vld [vmem:[#allocation2 + $0x290] sm:$0xff]
    %v812 = vld [vmem:[#allocation2 + $0x298] sm:$0xff]
    %v813 = vld [vmem:[#allocation2 + $0x2a0] sm:$0xff]
    %v814 = vld [vmem:[#allocation2 + $0x2a8] sm:$0xff]
    %v815 = vld [vmem:[#allocation2 + $0x2b0] sm:$0xff]
    %v816 = vld [vmem:[#allocation2 + $0x2b8] sm:$0xff]
    %v817 = vld [vmem:[#allocation2 + $0x2c0] sm:$0xff]
    %v818 = vld [vmem:[#allocation2 + $0x2c8] sm:$0xff]
    %v819 = vld [vmem:[#allocation2 + $0x2d0] sm:$0xff]
    %v820 = vld [vmem:[#allocation2 + $0x2d8] sm:$0xff]
    %v821 = vld [vmem:[#allocation2 + $0x2e0] sm:$0xff]
    %v822 = vld [vmem:[#allocation2 + $0x2e8] sm:$0xff]
    %v823 = vld [vmem:[#allocation2 + $0x2f0] sm:$0xff]
    %v824 = vld [vmem:[#allocation2 + $0x2f8] sm:$0xff]
    %v825 = vld [vmem:[#allocation2 + $0x300] sm:$0xff]
    %v826 = vld [vmem:[#allocation2 + $0x308] sm:$0xff]
    %v827 = vld [vmem:[#allocation2 + $0x310] sm:$0xff]
    %v828 = vld [vmem:[#allocation2 + $0x318] sm:$0xff]
    %v829 = vld [vmem:[#allocation2 + $0x320] sm:$0xff]
    %v830 = vld [vmem:[#allocation2 + $0x328] sm:$0xff]
    %v831 = vld [vmem:[#allocation2 + $0x330] sm:$0xff]
    %v832 = vld [vmem:[#allocation2 + $0x338] sm:$0xff]
    %v833 = vld [vmem:[#allocation2 + $0x340] sm:$0xff]
    %v834 = vld [vmem:[#allocation2 + $0x348] sm:$0xff]
    %v835 = vld [vmem:[#allocation2 + $0x350] sm:$0xff]
    %v836 = vld [vmem:[#allocation2 + $0x358] sm:$0xff]
    %v837 = vld [vmem:[#allocation2 + $0x360] sm:$0xff]
    %v838 = vld [vmem:[#allocation2 + $0x368] sm:$0xff]
    %v839 = vld [vmem:[#allocation2 + $0x370] sm:$0xff]
    %v840 = vld [vmem:[#allocation2 + $0x378] sm:$0xff]
    %v841 = vld [vmem:[#allocation2 + $0x380] sm:$0xff]
    %v842 = vld [vmem:[#allocation2 + $0x388] sm:$0xff]
    %v843 = vld [vmem:[#allocation2 + $0x390] sm:$0xff]
    %v844 = vld [vmem:[#allocation2 + $0x398] sm:$0xff]
    %v845 = vld [vmem:[#allocation2 + $0x3a0] sm:$0xff]
    %v846 = vld [vmem:[#allocation2 + $0x3a8] sm:$0xff]
    %v847 = vld [vmem:[#allocation2 + $0x3b0] sm:$0xff]
    %v848 = vld [vmem:[#allocation2 + $0x3b8] sm:$0xff]
    %v849 = vld [vmem:[#allocation2 + $0x3c0] sm:$0xff]
    %v850 = vld [vmem:[#allocation2 + $0x3c8] sm:$0xff]
    %v851 = vld [vmem:[#allocation2 + $0x3d0] sm:$0xff]
    %v852 = vld [vmem:[#allocation2 + $0x3d8] sm:$0xff]
    %v853 = vld [vmem:[#allocation2 + $0x3e0] sm:$0xff]
    %v854 = vld [vmem:[#allocation2 + $0x3e8] sm:$0xff]
    %v855 = vld [vmem:[#allocation2 + $0x3f0] sm:$0xff]
    %v856 = vld [vmem:[#allocation2 + $0x3f8] sm:$0xff]
    %v857 = vld [vmem:[%s0] sm:$0xff]
    %v858 = vld [vmem:[%s0 + $0x8] sm:$0xff]
    %v859 = vld [vmem:[%s0 + $0x10] sm:$0xff]
    %v860 = vld [vmem:[%s0 + $0x18] sm:$0xff]
    %v861 = vld [vmem:[%s0 + $0x20] sm:$0xff]
    %v862 = vld [vmem:[%s0 + $0x28] sm:$0xff]
    %v863 = vld [vmem:[%s0 + $0x30] sm:$0xff]
    %v864 = vld [vmem:[%s0 + $0x38] sm:$0xff]
    %v865 = vld [vmem:[%s0 + $0x40] sm:$0xff]
    %v866 = vld [vmem:[%s0 + $0x48] sm:$0xff]
    %v867 = vld [vmem:[%s0 + $0x50] sm:$0xff]
    %v868 = vld [vmem:[%s0 + $0x58] sm:$0xff]
    %v869 = vld [vmem:[%s0 + $0x60] sm:$0xff]
    %v870 = vld [vmem:[%s0 + $0x68] sm:$0xff]
    %v871 = vld [vmem:[%s0 + $0x70] sm:$0xff]
    %v872 = vld [vmem:[%s0 + $0x78] sm:$0xff]
    %v873 = vld [vmem:[%s0 + $0x80] sm:$0xff]
    %v874 = vld [vmem:[%s0 + $0x88] sm:$0xff]
    %v875 = vld [vmem:[%s0 + $0x90] sm:$0xff]
    %v876 = vld [vmem:[%s0 + $0x98] sm:$0xff]
    %v877 = vld [vmem:[%s0 + $0xa0] sm:$0xff]
    %v878 = vld [vmem:[%s0 + $0xa8] sm:$0xff]
    %v879 = vld [vmem:[%s0 + $0xb0] sm:$0xff]
    %v880 = vld [vmem:[%s0 + $0xb8] sm:$0xff]
    %v881 = vld [vmem:[%s0 + $0xc0] sm:$0xff]
    %v882 = vld [vmem:[%s0 + $0xc8] sm:$0xff]
    %v883 = vld [vmem:[%s0 + $0xd0] sm:$0xff]
    %v884 = vld [vmem:[%s0 + $0xd8] sm:$0xff]
    %v885 = vld [vmem:[%s0 + $0xe0] sm:$0xff]
    %v886 = vld [vmem:[%s0 + $0xe8] sm:$0xff]
    %v887 = vld [vmem:[%s0 + $0xf0] sm:$0xff]
    %v888 = vld [vmem:[%s0 + $0xf8] sm:$0xff]
    %v889 = vld [vmem:[%s0 + $0x100] sm:$0xff]
    %v890 = vld [vmem:[%s0 + $0x108] sm:$0xff]
    %v891 = vld [vmem:[%s0 + $0x110] sm:$0xff]
    %v892 = vld [vmem:[%s0 + $0x118] sm:$0xff]
    %v893 = vld [vmem:[%s0 + $0x120] sm:$0xff]
    %v894 = vld [vmem:[%s0 + $0x128] sm:$0xff]
    %v895 = vld [vmem:[%s0 + $0x130] sm:$0xff]
    %v896 = vld [vmem:[%s0 + $0x138] sm:$0xff]
    %v897 = vld [vmem:[%s0 + $0x140] sm:$0xff]
    %v898 = vld [vmem:[%s0 + $0x148] sm:$0xff]
    %v899 = vld [vmem:[%s0 + $0x150] sm:$0xff]
    %v900 = vld [vmem:[%s0 + $0x158] sm:$0xff]
    %v901 = vld [vmem:[%s0 + $0x160] sm:$0xff]
    %v902 = vld [vmem:[%s0 + $0x168] sm:$0xff]
    %v903 = vld [vmem:[%s0 + $0x170] sm:$0xff]
    %v904 = vld [vmem:[%s0 + $0x178] sm:$0xff]
    %v905 = vld [vmem:[%s0 + $0x180] sm:$0xff]
    %v906 = vld [vmem:[%s0 + $0x188] sm:$0xff]
    %v907 = vld [vmem:[%s0 + $0x190] sm:$0xff]
    %v908 = vld [vmem:[%s0 + $0x198] sm:$0xff]
    %v909 = vld [vmem:[%s0 + $0x1a0] sm:$0xff]
    %v910 = vld [vmem:[%s0 + $0x1a8] sm:$0xff]
    %v911 = vld [vmem:[%s0 + $0x1b0] sm:$0xff]
    %v912 = vld [vmem:[%s0 + $0x1b8] sm:$0xff]
    %v913 = vld [vmem:[%s0 + $0x1c0] sm:$0xff]
    %v914 = vld [vmem:[%s0 + $0x1c8] sm:$0xff]
    %v915 = vld [vmem:[%s0 + $0x1d0] sm:$0xff]
    %v916 = vld [vmem:[%s0 + $0x1d8] sm:$0xff]
    %v917 = vld [vmem:[%s0 + $0x1e0] sm:$0xff]
    %v918 = vld [vmem:[%s0 + $0x1e8] sm:$0xff]
    %v919 = vld [vmem:[%s0 + $0x1f0] sm:$0xff]
    %v920 = vld [vmem:[%s0 + $0x1f8] sm:$0xff]
    %v921 = vld [vmem:[%s4] sm:$0x3]
    %v923 = vperm.slane %v921, 0
    %v924 = vperm.slane %v921, 1
    %v991 = vunpack.c.l.b16 %v857
    %v992 = vunpack.c.h.b16 %v857
    %v993 = vunpack.c.l.b16 %v858
    %v994 = vunpack.c.h.b16 %v858
    %v995 = vunpack.c.l.b16 %v859
    %v996 = vunpack.c.h.b16 %v859
    %v997 = vunpack.c.l.b16 %v860
    %v998 = vunpack.c.h.b16 %v860
    %v999 = vunpack.c.l.b16 %v861
    %v1000 = vunpack.c.h.b16 %v861
    %v1001 = vunpack.c.l.b16 %v862
    %v1002 = vunpack.c.h.b16 %v862
    %v1003 = vunpack.c.l.b16 %v863
    %v1004 = vunpack.c.h.b16 %v863
    %v1005 = vunpack.c.l.b16 %v864
    %v1006 = vunpack.c.h.b16 %v864
    %v1007 = vunpack.c.l.b16 %v865
    %v1008 = vunpack.c.h.b16 %v865
    %v1009 = vunpack.c.l.b16 %v866
    %v1010 = vunpack.c.h.b16 %v866
    %v1011 = vunpack.c.l.b16 %v867
    %v1012 = vunpack.c.h.b16 %v867
    %v1013 = vunpack.c.l.b16 %v868
    %v1014 = vunpack.c.h.b16 %v868
    %v1015 = vunpack.c.l.b16 %v869
    %v1016 = vunpack.c.h.b16 %v869
    %v1017 = vunpack.c.l.b16 %v870
    %v1018 = vunpack.c.h.b16 %v870
    %v1019 = vunpack.c.l.b16 %v871
    %v1020 = vunpack.c.h.b16 %v871
    %v1021 = vunpack.c.l.b16 %v872
    %v1022 = vunpack.c.h.b16 %v872
    %v1023 = vunpack.c.l.b16 %v873
    %v1024 = vunpack.c.h.b16 %v873
    %v1025 = vunpack.c.l.b16 %v874
    %v1026 = vunpack.c.h.b16 %v874
    %v1027 = vunpack.c.l.b16 %v875
    %v1028 = vunpack.c.h.b16 %v875
    %v1029 = vunpack.c.l.b16 %v876
    %v1030 = vunpack.c.h.b16 %v876
    %v1031 = vunpack.c.l.b16 %v877
    %v1032 = vunpack.c.h.b16 %v877
    %v1033 = vunpack.c.l.b16 %v878
    %v1034 = vunpack.c.h.b16 %v878
    %v1035 = vunpack.c.l.b16 %v879
    %v1036 = vunpack.c.h.b16 %v879
    %v1037 = vunpack.c.l.b16 %v880
    %v1038 = vunpack.c.h.b16 %v880
    %v1039 = vunpack.c.l.b16 %v881
    %v1040 = vunpack.c.h.b16 %v881
    %v1041 = vunpack.c.l.b16 %v882
    %v1042 = vunpack.c.h.b16 %v882
    %v1043 = vunpack.c.l.b16 %v883
    %v1044 = vunpack.c.h.b16 %v883
    %v1045 = vunpack.c.l.b16 %v884
    %v1046 = vunpack.c.h.b16 %v884
    %v1047 = vunpack.c.l.b16 %v885
    %v1048 = vunpack.c.h.b16 %v885
    %v1049 = vunpack.c.l.b16 %v886
    %v1050 = vunpack.c.h.b16 %v886
    %v1051 = vunpack.c.l.b16 %v887
    %v1052 = vunpack.c.h.b16 %v887
    %v1053 = vunpack.c.l.b16 %v888
    %v1054 = vunpack.c.h.b16 %v888
    %v1055 = vunpack.c.l.b16 %v889
    %v1056 = vunpack.c.h.b16 %v889
    %v1057 = vunpack.c.l.b16 %v890
    %v1058 = vunpack.c.h.b16 %v890
    %v1059 = vunpack.c.l.b16 %v891
    %v1060 = vunpack.c.h.b16 %v891
    %v1061 = vunpack.c.l.b16 %v892
    %v1062 = vunpack.c.h.b16 %v892
    %v1063 = vunpack.c.l.b16 %v893
    %v1064 = vunpack.c.h.b16 %v893
    %v1065 = vunpack.c.l.b16 %v894
    %v1066 = vunpack.c.h.b16 %v894
    %v1067 = vunpack.c.l.b16 %v895
    %v1068 = vunpack.c.h.b16 %v895
    %v1069 = vunpack.c.l.b16 %v896
    %v1070 = vunpack.c.h.b16 %v896
    %v1071 = vunpack.c.l.b16 %v897
    %v1072 = vunpack.c.h.b16 %v897
    %v1073 = vunpack.c.l.b16 %v898
    %v1074 = vunpack.c.h.b16 %v898
    %v1075 = vunpack.c.l.b16 %v899
    %v1076 = vunpack.c.h.b16 %v899
    %v1077 = vunpack.c.l.b16 %v900
    %v1078 = vunpack.c.h.b16 %v900
    %v1079 = vunpack.c.l.b16 %v901
    %v1080 = vunpack.c.h.b16 %v901
    %v1081 = vunpack.c.l.b16 %v902
    %v1082 = vunpack.c.h.b16 %v902
    %v1083 = vunpack.c.l.b16 %v903
    %v1084 = vunpack.c.h.b16 %v903
    %v1085 = vunpack.c.l.b16 %v904
    %v1086 = vunpack.c.h.b16 %v904
    %v1087 = vunpack.c.l.b16 %v905
    %v1088 = vunpack.c.h.b16 %v905
    %v1089 = vunpack.c.l.b16 %v906
    %v1090 = vunpack.c.h.b16 %v906
    %v1091 = vunpack.c.l.b16 %v907
    %v1092 = vunpack.c.h.b16 %v907
    %v1093 = vunpack.c.l.b16 %v908
    %v1094 = vunpack.c.h.b16 %v908
    %v1095 = vunpack.c.l.b16 %v909
    %v1096 = vunpack.c.h.b16 %v909
    %v1097 = vunpack.c.l.b16 %v910
    %v1098 = vunpack.c.h.b16 %v910
    %v1099 = vunpack.c.l.b16 %v911
    %v1100 = vunpack.c.h.b16 %v911
    %v1101 = vunpack.c.l.b16 %v912
    %v1102 = vunpack.c.h.b16 %v912
    %v1103 = vunpack.c.l.b16 %v913
    %v1104 = vunpack.c.h.b16 %v913
    %v1105 = vunpack.c.l.b16 %v914
    %v1106 = vunpack.c.h.b16 %v914
    %v1107 = vunpack.c.l.b16 %v915
    %v1108 = vunpack.c.h.b16 %v915
    %v1109 = vunpack.c.l.b16 %v916
    %v1110 = vunpack.c.h.b16 %v916
    %v1111 = vunpack.c.l.b16 %v917
    %v1112 = vunpack.c.h.b16 %v917
    %v1113 = vunpack.c.l.b16 %v918
    %v1114 = vunpack.c.h.b16 %v918
    %v1115 = vunpack.c.l.b16 %v919
    %v1116 = vunpack.c.h.b16 %v919
    %v1117 = vunpack.c.l.b16 %v920
    %v1118 = vunpack.c.h.b16 %v920
    %v1119 = vpack.c.b16 %v995, %v991
    %v1120 = vpack.c.b16 %v996, %v992
    %v1121 = vpack.c.b16 %v997, %v993
    %v1122 = vpack.c.b16 %v998, %v994
    %v1123 = vpack.c.b16 %v1003, %v999
    %v1124 = vpack.c.b16 %v1004, %v1000
    %v1125 = vpack.c.b16 %v1005, %v1001
    %v1126 = vpack.c.b16 %v1006, %v1002
    %v1127 = vpack.c.b16 %v1011, %v1007
    %v1128 = vpack.c.b16 %v1012, %v1008
    %v1129 = vpack.c.b16 %v1013, %v1009
    %v1130 = vpack.c.b16 %v1014, %v1010
    %v1131 = vpack.c.b16 %v1019, %v1015
    %v1132 = vpack.c.b16 %v1020, %v1016
    %v1133 = vpack.c.b16 %v1021, %v1017
    %v1134 = vpack.c.b16 %v1022, %v1018
    %v1135 = vpack.c.b16 %v1027, %v1023
    %v1136 = vpack.c.b16 %v1028, %v1024
    %v1137 = vpack.c.b16 %v1029, %v1025
    %v1138 = vpack.c.b16 %v1030, %v1026
    %v1139 = vpack.c.b16 %v1035, %v1031
    %v1140 = vpack.c.b16 %v1036, %v1032
    %v1141 = vpack.c.b16 %v1037, %v1033
    %v1142 = vpack.c.b16 %v1038, %v1034
    %v1143 = vpack.c.b16 %v1043, %v1039
    %v1144 = vpack.c.b16 %v1044, %v1040
    %v1145 = vpack.c.b16 %v1045, %v1041
    %v1146 = vpack.c.b16 %v1046, %v1042
    %v1147 = vpack.c.b16 %v1051, %v1047
    %v1148 = vpack.c.b16 %v1052, %v1048
    %v1149 = vpack.c.b16 %v1053, %v1049
    %v1150 = vpack.c.b16 %v1054, %v1050
    %v1151 = vpack.c.b16 %v1059, %v1055
    %v1152 = vpack.c.b16 %v1060, %v1056
    %v1153 = vpack.c.b16 %v1061, %v1057
    %v1154 = vpack.c.b16 %v1062, %v1058
    %v1155 = vpack.c.b16 %v1067, %v1063
    %v1156 = vpack.c.b16 %v1068, %v1064
    %v1157 = vpack.c.b16 %v1069, %v1065
    %v1158 = vpack.c.b16 %v1070, %v1066
    %v1159 = vpack.c.b16 %v1075, %v1071
    %v1160 = vpack.c.b16 %v1076, %v1072
    %v1161 = vpack.c.b16 %v1077, %v1073
    %v1162 = vpack.c.b16 %v1078, %v1074
    %v1163 = vpack.c.b16 %v1083, %v1079
    %v1164 = vpack.c.b16 %v1084, %v1080
    %v1165 = vpack.c.b16 %v1085, %v1081
    %v1166 = vpack.c.b16 %v1086, %v1082
    %v1167 = vpack.c.b16 %v1091, %v1087
    %v1168 = vpack.c.b16 %v1092, %v1088
    %v1169 = vpack.c.b16 %v1093, %v1089
    %v1170 = vpack.c.b16 %v1094, %v1090
    %v1171 = vpack.c.b16 %v1099, %v1095
    %v1172 = vpack.c.b16 %v1100, %v1096
    %v1173 = vpack.c.b16 %v1101, %v1097
    %v1174 = vpack.c.b16 %v1102, %v1098
    %v1175 = vpack.c.b16 %v1107, %v1103
    %v1176 = vpack.c.b16 %v1108, %v1104
    %v1177 = vpack.c.b16 %v1109, %v1105
    %v1178 = vpack.c.b16 %v1110, %v1106
    %v1179 = vpack.c.b16 %v1115, %v1111
    %v1180 = vpack.c.b16 %v1116, %v1112
    %v1181 = vpack.c.b16 %v1117, %v1113
    %v1182 = vpack.c.b16 %v1118, %v1114
    %1247 = vmatpush.msra.mxu0 %v759
    %1248 = vmatpush.msra.mxu0 %v757
    %1249 = vmatpush.msra.mxu0 %v755
    %1250 = vmatpush.msra.mxu0 %v753
    %1251 = vmatpush.msra.mxu0 %v751
    %1252 = vmatpush.msra.mxu0 %v749
    %1253 = vmatpush.msra.mxu0 %v747
    %1254 = vmatpush.msra.mxu0 %v745
    %1255 = vmatpush.msra.mxu0 %v743
    %1256 = vmatpush.msra.mxu0 %v741
    %1257 = vmatpush.msra.mxu0 %v739
    %1258 = vmatpush.msra.mxu0 %v737
    %1259 = vmatpush.msra.mxu0 %v735
    %1260 = vmatpush.msra.mxu0 %v733
    %1261 = vmatpush.msra.mxu0 %v731
    %1262 = vmatpush.msra.mxu0 %v729
    %1263 = vmatmul.bf16.gmra.mxu0 %v1119
    %v1264 = vpop.f32.mrf.mxu0
    %v1265 = vadd.f32 %v923, %v1264
    %v1266 = vpop.f32.mrf.mxu0
    %v1267 = vadd.f32 %v923, %v1266
    %1268 = vmatmul.bf16.gmra.mxu0 %v1123
    %v1269 = vpop.f32.mrf.mxu0
    %v1270 = vadd.f32 %v923, %v1269
    %v1271 = vpop.f32.mrf.mxu0
    %v1272 = vadd.f32 %v923, %v1271
    %1273 = vmatmul.bf16.gmra.mxu0 %v1127
    %v1274 = vpop.f32.mrf.mxu0
    %v1275 = vadd.f32 %v923, %v1274
    %v1276 = vpop.f32.mrf.mxu0
    %v1277 = vadd.f32 %v923, %v1276
    %1278 = vmatmul.bf16.gmra.mxu0 %v1131
    %v1279 = vpop.f32.mrf.mxu0
    %v1280 = vadd.f32 %v923, %v1279
    %v1281 = vpop.f32.mrf.mxu0
    %v1282 = vadd.f32 %v923, %v1281
    %1283 = vmatmul.bf16.gmra.mxu0 %v1135
    %v1284 = vpop.f32.mrf.mxu0
    %v1285 = vadd.f32 %v923, %v1284
    %v1286 = vpop.f32.mrf.mxu0
    %v1287 = vadd.f32 %v923, %v1286
    %1288 = vmatmul.bf16.gmra.mxu0 %v1139
    %v1289 = vpop.f32.mrf.mxu0
    %v1290 = vadd.f32 %v923, %v1289
    %v1291 = vpop.f32.mrf.mxu0
    %v1292 = vadd.f32 %v923, %v1291
    %1293 = vmatmul.bf16.gmra.mxu0 %v1143
    %v1294 = vpop.f32.mrf.mxu0
    %v1295 = vadd.f32 %v923, %v1294
    %v1296 = vpop.f32.mrf.mxu0
    %v1297 = vadd.f32 %v923, %v1296
    %1298 = vmatmul.bf16.gmra.mxu0 %v1147
    %v1299 = vpop.f32.mrf.mxu0
    %v1300 = vadd.f32 %v923, %v1299
    %v1301 = vpop.f32.mrf.mxu0
    %v1302 = vadd.f32 %v923, %v1301
    %1303 = vmatmul.bf16.gmra.mxu0 %v1151
    %v1304 = vpop.f32.mrf.mxu0
    %v1305 = vadd.f32 %v923, %v1304
    %v1306 = vpop.f32.mrf.mxu0
    %v1307 = vadd.f32 %v923, %v1306
    %1308 = vmatmul.bf16.gmra.mxu0 %v1155
    %v1309 = vpop.f32.mrf.mxu0
    %v1310 = vadd.f32 %v923, %v1309
    %v1311 = vpop.f32.mrf.mxu0
    %v1312 = vadd.f32 %v923, %v1311
    %1313 = vmatmul.bf16.gmra.mxu0 %v1159
    %v1314 = vpop.f32.mrf.mxu0
    %v1315 = vadd.f32 %v923, %v1314
    %v1316 = vpop.f32.mrf.mxu0
    %v1317 = vadd.f32 %v923, %v1316
    %1318 = vmatmul.bf16.gmra.mxu0 %v1163
    %v1319 = vpop.f32.mrf.mxu0
    %v1320 = vadd.f32 %v923, %v1319
    %v1321 = vpop.f32.mrf.mxu0
    %v1322 = vadd.f32 %v923, %v1321
    %1323 = vmatmul.bf16.gmra.mxu0 %v1167
    %v1324 = vpop.f32.mrf.mxu0
    %v1325 = vadd.f32 %v923, %v1324
    %v1326 = vpop.f32.mrf.mxu0
    %v1327 = vadd.f32 %v923, %v1326
    %1328 = vmatmul.bf16.gmra.mxu0 %v1171
    %v1329 = vpop.f32.mrf.mxu0
    %v1330 = vadd.f32 %v923, %v1329
    %v1331 = vpop.f32.mrf.mxu0
    %v1332 = vadd.f32 %v923, %v1331
    %1333 = vmatmul.bf16.gmra.mxu0 %v1175
    %v1334 = vpop.f32.mrf.mxu0
    %v1335 = vadd.f32 %v923, %v1334
    %v1336 = vpop.f32.mrf.mxu0
    %v1337 = vadd.f32 %v923, %v1336
    %1338 = vmatmul.bf16.gmra.mxu0 %v1179
    %v1339 = vpop.f32.mrf.mxu0
    %v1340 = vadd.f32 %v923, %v1339
    %v1341 = vpop.f32.mrf.mxu0
    %v1342 = vadd.f32 %v923, %v1341
    %1343 = vdwg.mxu0
    %1344 = vmatpush.msra.mxu0 %v791
    %1345 = vmatpush.msra.mxu0 %v789
    %1346 = vmatpush.msra.mxu0 %v787
    %1347 = vmatpush.msra.mxu0 %v785
    %1348 = vmatpush.msra.mxu0 %v783
    %1349 = vmatpush.msra.mxu0 %v781
    %1350 = vmatpush.msra.mxu0 %v779
    %1351 = vmatpush.msra.mxu0 %v777
    %1352 = vmatpush.msra.mxu0 %v775
    %1353 = vmatpush.msra.mxu0 %v773
    %1354 = vmatpush.msra.mxu0 %v771
    %1355 = vmatpush.msra.mxu0 %v769
    %1356 = vmatpush.msra.mxu0 %v767
    %1357 = vmatpush.msra.mxu0 %v765
    %1358 = vmatpush.msra.mxu0 %v763
    %1359 = vmatpush.msra.mxu0 %v761
    %1360 = vmatmul.bf16.gmra.mxu0 %v1120
    %v1361 = vpop.f32.mrf.mxu0
    %v1362 = vadd.f32 %v1265, %v1361
    %v1363 = vpop.f32.mrf.mxu0
    %v1364 = vadd.f32 %v1267, %v1363
    %1365 = vmatmul.bf16.gmra.mxu0 %v1124
    %v1366 = vpop.f32.mrf.mxu0
    %v1367 = vadd.f32 %v1270, %v1366
    %v1368 = vpop.f32.mrf.mxu0
    %v1369 = vadd.f32 %v1272, %v1368
    %1370 = vmatmul.bf16.gmra.mxu0 %v1128
    %v1371 = vpop.f32.mrf.mxu0
    %v1372 = vadd.f32 %v1275, %v1371
    %v1373 = vpop.f32.mrf.mxu0
    %v1374 = vadd.f32 %v1277, %v1373
    %1375 = vmatmul.bf16.gmra.mxu0 %v1132
    %v1376 = vpop.f32.mrf.mxu0
    %v1377 = vadd.f32 %v1280, %v1376
    %v1378 = vpop.f32.mrf.mxu0
    %v1379 = vadd.f32 %v1282, %v1378
    %1380 = vmatmul.bf16.gmra.mxu0 %v1136
    %v1381 = vpop.f32.mrf.mxu0
    %v1382 = vadd.f32 %v1285, %v1381
    %v1383 = vpop.f32.mrf.mxu0
    %v1384 = vadd.f32 %v1287, %v1383
    %1385 = vmatmul.bf16.gmra.mxu0 %v1140
    %v1386 = vpop.f32.mrf.mxu0
    %v1387 = vadd.f32 %v1290, %v1386
    %v1388 = vpop.f32.mrf.mxu0
    %v1389 = vadd.f32 %v1292, %v1388
    %1390 = vmatmul.bf16.gmra.mxu0 %v1144
    %v1391 = vpop.f32.mrf.mxu0
    %v1392 = vadd.f32 %v1295, %v1391
    %v1393 = vpop.f32.mrf.mxu0
    %v1394 = vadd.f32 %v1297, %v1393
    %1395 = vmatmul.bf16.gmra.mxu0 %v1148
    %v1396 = vpop.f32.mrf.mxu0
    %v1397 = vadd.f32 %v1300, %v1396
    %v1398 = vpop.f32.mrf.mxu0
    %v1399 = vadd.f32 %v1302, %v1398
    %1400 = vmatmul.bf16.gmra.mxu0 %v1152
    %v1401 = vpop.f32.mrf.mxu0
    %v1402 = vadd.f32 %v1305, %v1401
    %v1403 = vpop.f32.mrf.mxu0
    %v1404 = vadd.f32 %v1307, %v1403
    %1405 = vmatmul.bf16.gmra.mxu0 %v1156
    %v1406 = vpop.f32.mrf.mxu0
    %v1407 = vadd.f32 %v1310, %v1406
    %v1408 = vpop.f32.mrf.mxu0
    %v1409 = vadd.f32 %v1312, %v1408
    %1410 = vmatmul.bf16.gmra.mxu0 %v1160
    %v1411 = vpop.f32.mrf.mxu0
    %v1412 = vadd.f32 %v1315, %v1411
    %v1413 = vpop.f32.mrf.mxu0
    %v1414 = vadd.f32 %v1317, %v1413
    %1415 = vmatmul.bf16.gmra.mxu0 %v1164
    %v1416 = vpop.f32.mrf.mxu0
    %v1417 = vadd.f32 %v1320, %v1416
    %v1418 = vpop.f32.mrf.mxu0
    %v1419 = vadd.f32 %v1322, %v1418
    %1420 = vmatmul.bf16.gmra.mxu0 %v1168
    %v1421 = vpop.f32.mrf.mxu0
    %v1422 = vadd.f32 %v1325, %v1421
    %v1423 = vpop.f32.mrf.mxu0
    %v1424 = vadd.f32 %v1327, %v1423
    %1425 = vmatmul.bf16.gmra.mxu0 %v1172
    %v1426 = vpop.f32.mrf.mxu0
    %v1427 = vadd.f32 %v1330, %v1426
    %v1428 = vpop.f32.mrf.mxu0
    %v1429 = vadd.f32 %v1332, %v1428
    %1430 = vmatmul.bf16.gmra.mxu0 %v1176
    %v1431 = vpop.f32.mrf.mxu0
    %v1432 = vadd.f32 %v1335, %v1431
    %v1433 = vpop.f32.mrf.mxu0
    %v1434 = vadd.f32 %v1337, %v1433
    %1435 = vmatmul.bf16.gmra.mxu0 %v1180
    %v1436 = vpop.f32.mrf.mxu0
    %v1437 = vadd.f32 %v1340, %v1436
    %v1438 = vpop.f32.mrf.mxu0
    %v1439 = vadd.f32 %v1342, %v1438
    %1440 = vdwg.mxu0
    %1441 = vmatpush.msra.mxu0 %v823
    %1442 = vmatpush.msra.mxu0 %v821
    %1443 = vmatpush.msra.mxu0 %v819
    %1444 = vmatpush.msra.mxu0 %v817
    %1445 = vmatpush.msra.mxu0 %v815
    %1446 = vmatpush.msra.mxu0 %v813
    %1447 = vmatpush.msra.mxu0 %v811
    %1448 = vmatpush.msra.mxu0 %v809
    %1449 = vmatpush.msra.mxu0 %v807
    %1450 = vmatpush.msra.mxu0 %v805
    %1451 = vmatpush.msra.mxu0 %v803
    %1452 = vmatpush.msra.mxu0 %v801
    %1453 = vmatpush.msra.mxu0 %v799
    %1454 = vmatpush.msra.mxu0 %v797
    %1455 = vmatpush.msra.mxu0 %v795
    %1456 = vmatpush.msra.mxu0 %v793
    %1457 = vmatmul.bf16.gmra.mxu0 %v1121
    %v1458 = vpop.f32.mrf.mxu0
    %v1459 = vadd.f32 %v1362, %v1458
    %v1460 = vpop.f32.mrf.mxu0
    %v1461 = vadd.f32 %v1364, %v1460
    %1462 = vmatmul.bf16.gmra.mxu0 %v1125
    %v1463 = vpop.f32.mrf.mxu0
    %v1464 = vadd.f32 %v1367, %v1463
    %v1465 = vpop.f32.mrf.mxu0
    %v1466 = vadd.f32 %v1369, %v1465
    %1467 = vmatmul.bf16.gmra.mxu0 %v1129
    %v1468 = vpop.f32.mrf.mxu0
    %v1469 = vadd.f32 %v1372, %v1468
    %v1470 = vpop.f32.mrf.mxu0
    %v1471 = vadd.f32 %v1374, %v1470
    %1472 = vmatmul.bf16.gmra.mxu0 %v1133
    %v1473 = vpop.f32.mrf.mxu0
    %v1474 = vadd.f32 %v1377, %v1473
    %v1475 = vpop.f32.mrf.mxu0
    %v1476 = vadd.f32 %v1379, %v1475
    %1477 = vmatmul.bf16.gmra.mxu0 %v1137
    %v1478 = vpop.f32.mrf.mxu0
    %v1479 = vadd.f32 %v1382, %v1478
    %v1480 = vpop.f32.mrf.mxu0
    %v1481 = vadd.f32 %v1384, %v1480
    %1482 = vmatmul.bf16.gmra.mxu0 %v1141
    %v1483 = vpop.f32.mrf.mxu0
    %v1484 = vadd.f32 %v1387, %v1483
    %v1485 = vpop.f32.mrf.mxu0
    %v1486 = vadd.f32 %v1389, %v1485
    %1487 = vmatmul.bf16.gmra.mxu0 %v1145
    %v1488 = vpop.f32.mrf.mxu0
    %v1489 = vadd.f32 %v1392, %v1488
    %v1490 = vpop.f32.mrf.mxu0
    %v1491 = vadd.f32 %v1394, %v1490
    %1492 = vmatmul.bf16.gmra.mxu0 %v1149
    %v1493 = vpop.f32.mrf.mxu0
    %v1494 = vadd.f32 %v1397, %v1493
    %v1495 = vpop.f32.mrf.mxu0
    %v1496 = vadd.f32 %v1399, %v1495
    %1497 = vmatmul.bf16.gmra.mxu0 %v1153
    %v1498 = vpop.f32.mrf.mxu0
    %v1499 = vadd.f32 %v1402, %v1498
    %v1500 = vpop.f32.mrf.mxu0
    %v1501 = vadd.f32 %v1404, %v1500
    %1502 = vmatmul.bf16.gmra.mxu0 %v1157
    %v1503 = vpop.f32.mrf.mxu0
    %v1504 = vadd.f32 %v1407, %v1503
    %v1505 = vpop.f32.mrf.mxu0
    %v1506 = vadd.f32 %v1409, %v1505
    %1507 = vmatmul.bf16.gmra.mxu0 %v1161
    %v1508 = vpop.f32.mrf.mxu0
    %v1509 = vadd.f32 %v1412, %v1508
    %v1510 = vpop.f32.mrf.mxu0
    %v1511 = vadd.f32 %v1414, %v1510
    %1512 = vmatmul.bf16.gmra.mxu0 %v1165
    %v1513 = vpop.f32.mrf.mxu0
    %v1514 = vadd.f32 %v1417, %v1513
    %v1515 = vpop.f32.mrf.mxu0
    %v1516 = vadd.f32 %v1419, %v1515
    %1517 = vmatmul.bf16.gmra.mxu0 %v1169
    %v1518 = vpop.f32.mrf.mxu0
    %v1519 = vadd.f32 %v1422, %v1518
    %v1520 = vpop.f32.mrf.mxu0
    %v1521 = vadd.f32 %v1424, %v1520
    %1522 = vmatmul.bf16.gmra.mxu0 %v1173
    %v1523 = vpop.f32.mrf.mxu0
    %v1524 = vadd.f32 %v1427, %v1523
    %v1525 = vpop.f32.mrf.mxu0
    %v1526 = vadd.f32 %v1429, %v1525
    %1527 = vmatmul.bf16.gmra.mxu0 %v1177
    %v1528 = vpop.f32.mrf.mxu0
    %v1529 = vadd.f32 %v1432, %v1528
    %v1530 = vpop.f32.mrf.mxu0
    %v1531 = vadd.f32 %v1434, %v1530
    %1532 = vmatmul.bf16.gmra.mxu0 %v1181
    %v1533 = vpop.f32.mrf.mxu0
    %v1534 = vadd.f32 %v1437, %v1533
    %v1535 = vpop.f32.mrf.mxu0
    %v1536 = vadd.f32 %v1439, %v1535
    %1537 = vdwg.mxu0
    %1538 = vmatpush.msra.mxu0 %v855
    %1539 = vmatpush.msra.mxu0 %v853
    %1540 = vmatpush.msra.mxu0 %v851
    %1541 = vmatpush.msra.mxu0 %v849
    %1542 = vmatpush.msra.mxu0 %v847
    %1543 = vmatpush.msra.mxu0 %v845
    %1544 = vmatpush.msra.mxu0 %v843
    %1545 = vmatpush.msra.mxu0 %v841
    %1546 = vmatpush.msra.mxu0 %v839
    %1547 = vmatpush.msra.mxu0 %v837
    %1548 = vmatpush.msra.mxu0 %v835
    %1549 = vmatpush.msra.mxu0 %v833
    %1550 = vmatpush.msra.mxu0 %v831
    %1551 = vmatpush.msra.mxu0 %v829
    %1552 = vmatpush.msra.mxu0 %v827
    %1553 = vmatpush.msra.mxu0 %v825
    %1554 = vmatmul.bf16.gmra.mxu0 %v1122
    %v1555 = vpop.f32.mrf.mxu0
    %v1556 = vadd.f32 %v1459, %v1555
    %v1557 = vpop.f32.mrf.mxu0
    %v1558 = vadd.f32 %v1461, %v1557
    %1559 = vmatmul.bf16.gmra.mxu0 %v1126
    %v1560 = vpop.f32.mrf.mxu0
    %v1561 = vadd.f32 %v1464, %v1560
    %v1562 = vpop.f32.mrf.mxu0
    %v1563 = vadd.f32 %v1466, %v1562
    %1564 = vmatmul.bf16.gmra.mxu0 %v1130
    %v1565 = vpop.f32.mrf.mxu0
    %v1566 = vadd.f32 %v1469, %v1565
    %v1567 = vpop.f32.mrf.mxu0
    %v1568 = vadd.f32 %v1471, %v1567
    %1569 = vmatmul.bf16.gmra.mxu0 %v1134
    %v1570 = vpop.f32.mrf.mxu0
    %v1571 = vadd.f32 %v1474, %v1570
    %v1572 = vpop.f32.mrf.mxu0
    %v1573 = vadd.f32 %v1476, %v1572
    %1574 = vmatmul.bf16.gmra.mxu0 %v1138
    %v1575 = vpop.f32.mrf.mxu0
    %v1576 = vadd.f32 %v1479, %v1575
    %v1577 = vpop.f32.mrf.mxu0
    %v1578 = vadd.f32 %v1481, %v1577
    %1579 = vmatmul.bf16.gmra.mxu0 %v1142
    %v1580 = vpop.f32.mrf.mxu0
    %v1581 = vadd.f32 %v1484, %v1580
    %v1582 = vpop.f32.mrf.mxu0
    %v1583 = vadd.f32 %v1486, %v1582
    %1584 = vmatmul.bf16.gmra.mxu0 %v1146
    %v1585 = vpop.f32.mrf.mxu0
    %v1586 = vadd.f32 %v1489, %v1585
    %v1587 = vpop.f32.mrf.mxu0
    %v1588 = vadd.f32 %v1491, %v1587
    %1589 = vmatmul.bf16.gmra.mxu0 %v1150
    %v1590 = vpop.f32.mrf.mxu0
    %v1591 = vadd.f32 %v1494, %v1590
    %v1592 = vpop.f32.mrf.mxu0
    %v1593 = vadd.f32 %v1496, %v1592
    %1594 = vmatmul.bf16.gmra.mxu0 %v1154
    %v1595 = vpop.f32.mrf.mxu0
    %v1596 = vadd.f32 %v1499, %v1595
    %v1597 = vpop.f32.mrf.mxu0
    %v1598 = vadd.f32 %v1501, %v1597
    %1599 = vmatmul.bf16.gmra.mxu0 %v1158
    %v1600 = vpop.f32.mrf.mxu0
    %v1601 = vadd.f32 %v1504, %v1600
    %v1602 = vpop.f32.mrf.mxu0
    %v1603 = vadd.f32 %v1506, %v1602
    %1604 = vmatmul.bf16.gmra.mxu0 %v1162
    %v1605 = vpop.f32.mrf.mxu0
    %v1606 = vadd.f32 %v1509, %v1605
    %v1607 = vpop.f32.mrf.mxu0
    %v1608 = vadd.f32 %v1511, %v1607
    %1609 = vmatmul.bf16.gmra.mxu0 %v1166
    %v1610 = vpop.f32.mrf.mxu0
    %v1611 = vadd.f32 %v1514, %v1610
    %v1612 = vpop.f32.mrf.mxu0
    %v1613 = vadd.f32 %v1516, %v1612
    %1614 = vmatmul.bf16.gmra.mxu0 %v1170
    %v1615 = vpop.f32.mrf.mxu0
    %v1616 = vadd.f32 %v1519, %v1615
    %v1617 = vpop.f32.mrf.mxu0
    %v1618 = vadd.f32 %v1521, %v1617
    %1619 = vmatmul.bf16.gmra.mxu0 %v1174
    %v1620 = vpop.f32.mrf.mxu0
    %v1621 = vadd.f32 %v1524, %v1620
    %v1622 = vpop.f32.mrf.mxu0
    %v1623 = vadd.f32 %v1526, %v1622
    %1624 = vmatmul.bf16.gmra.mxu0 %v1178
    %v1625 = vpop.f32.mrf.mxu0
    %v1626 = vadd.f32 %v1529, %v1625
    %v1627 = vpop.f32.mrf.mxu0
    %v1628 = vadd.f32 %v1531, %v1627
    %1629 = vmatmul.bf16.gmra.mxu0 %v1182
    %v1630 = vpop.f32.mrf.mxu0
    %v1631 = vadd.f32 %v1534, %v1630
    %v1632 = vpop.f32.mrf.mxu0
    %v1633 = vadd.f32 %v1536, %v1632
    %1634 = vdwg.mxu0
    %1635 = vmatpush.msra.mxu0 %v760
    %1636 = vmatpush.msra.mxu0 %v758
    %1637 = vmatpush.msra.mxu0 %v756
    %1638 = vmatpush.msra.mxu0 %v754
    %1639 = vmatpush.msra.mxu0 %v752
    %1640 = vmatpush.msra.mxu0 %v750
    %1641 = vmatpush.msra.mxu0 %v748
    %1642 = vmatpush.msra.mxu0 %v746
    %1643 = vmatpush.msra.mxu0 %v744
    %1644 = vmatpush.msra.mxu0 %v742
    %1645 = vmatpush.msra.mxu0 %v740
    %1646 = vmatpush.msra.mxu0 %v738
    %1647 = vmatpush.msra.mxu0 %v736
    %1648 = vmatpush.msra.mxu0 %v734
    %1649 = vmatpush.msra.mxu0 %v732
    %1650 = vmatpush.msra.mxu0 %v730
    %1651 = vmatmul.bf16.gmra.mxu0 %v1119
    %v1652 = vpop.f32.mrf.mxu0
    %v1653 = vadd.f32 %v924, %v1652
    %v1654 = vpop.f32.mrf.mxu0
    %v1655 = vadd.f32 %v924, %v1654
    %1656 = vmatmul.bf16.gmra.mxu0 %v1123
    %v1657 = vpop.f32.mrf.mxu0
    %v1658 = vadd.f32 %v924, %v1657
    %v1659 = vpop.f32.mrf.mxu0
    %v1660 = vadd.f32 %v924, %v1659
    %1661 = vmatmul.bf16.gmra.mxu0 %v1127
    %v1662 = vpop.f32.mrf.mxu0
    %v1663 = vadd.f32 %v924, %v1662
    %v1664 = vpop.f32.mrf.mxu0
    %v1665 = vadd.f32 %v924, %v1664
    %1666 = vmatmul.bf16.gmra.mxu0 %v1131
    %v1667 = vpop.f32.mrf.mxu0
    %v1668 = vadd.f32 %v924, %v1667
    %v1669 = vpop.f32.mrf.mxu0
    %v1670 = vadd.f32 %v924, %v1669
    %1671 = vmatmul.bf16.gmra.mxu0 %v1135
    %v1672 = vpop.f32.mrf.mxu0
    %v1673 = vadd.f32 %v924, %v1672
    %v1674 = vpop.f32.mrf.mxu0
    %v1675 = vadd.f32 %v924, %v1674
    %1676 = vmatmul.bf16.gmra.mxu0 %v1139
    %v1677 = vpop.f32.mrf.mxu0
    %v1678 = vadd.f32 %v924, %v1677
    %v1679 = vpop.f32.mrf.mxu0
    %v1680 = vadd.f32 %v924, %v1679
    %1681 = vmatmul.bf16.gmra.mxu0 %v1143
    %v1682 = vpop.f32.mrf.mxu0
    %v1683 = vadd.f32 %v924, %v1682
    %v1684 = vpop.f32.mrf.mxu0
    %v1685 = vadd.f32 %v924, %v1684
    %1686 = vmatmul.bf16.gmra.mxu0 %v1147
    %v1687 = vpop.f32.mrf.mxu0
    %v1688 = vadd.f32 %v924, %v1687
    %v1689 = vpop.f32.mrf.mxu0
    %v1690 = vadd.f32 %v924, %v1689
    %1691 = vmatmul.bf16.gmra.mxu0 %v1151
    %v1692 = vpop.f32.mrf.mxu0
    %v1693 = vadd.f32 %v924, %v1692
    %v1694 = vpop.f32.mrf.mxu0
    %v1695 = vadd.f32 %v924, %v1694
    %1696 = vmatmul.bf16.gmra.mxu0 %v1155
    %v1697 = vpop.f32.mrf.mxu0
    %v1698 = vadd.f32 %v924, %v1697
    %v1699 = vpop.f32.mrf.mxu0
    %v1700 = vadd.f32 %v924, %v1699
    %1701 = vmatmul.bf16.gmra.mxu0 %v1159
    %v1702 = vpop.f32.mrf.mxu0
    %v1703 = vadd.f32 %v924, %v1702
    %v1704 = vpop.f32.mrf.mxu0
    %v1705 = vadd.f32 %v924, %v1704
    %1706 = vmatmul.bf16.gmra.mxu0 %v1163
    %v1707 = vpop.f32.mrf.mxu0
    %v1708 = vadd.f32 %v924, %v1707
    %v1709 = vpop.f32.mrf.mxu0
    %v1710 = vadd.f32 %v924, %v1709
    %1711 = vmatmul.bf16.gmra.mxu0 %v1167
    %v1712 = vpop.f32.mrf.mxu0
    %v1713 = vadd.f32 %v924, %v1712
    %v1714 = vpop.f32.mrf.mxu0
    %v1715 = vadd.f32 %v924, %v1714
    %1716 = vmatmul.bf16.gmra.mxu0 %v1171
    %v1717 = vpop.f32.mrf.mxu0
    %v1718 = vadd.f32 %v924, %v1717
    %v1719 = vpop.f32.mrf.mxu0
    %v1720 = vadd.f32 %v924, %v1719
    %1721 = vmatmul.bf16.gmra.mxu0 %v1175
    %v1722 = vpop.f32.mrf.mxu0
    %v1723 = vadd.f32 %v924, %v1722
    %v1724 = vpop.f32.mrf.mxu0
    %v1725 = vadd.f32 %v924, %v1724
    %1726 = vmatmul.bf16.gmra.mxu0 %v1179
    %v1727 = vpop.f32.mrf.mxu0
    %v1728 = vadd.f32 %v924, %v1727
    %v1729 = vpop.f32.mrf.mxu0
    %v1730 = vadd.f32 %v924, %v1729
    %1731 = vdwg.mxu0
    %1732 = vmatpush.msra.mxu0 %v792
    %1733 = vmatpush.msra.mxu0 %v790
    %1734 = vmatpush.msra.mxu0 %v788
    %1735 = vmatpush.msra.mxu0 %v786
    %1736 = vmatpush.msra.mxu0 %v784
    %1737 = vmatpush.msra.mxu0 %v782
    %1738 = vmatpush.msra.mxu0 %v780
    %1739 = vmatpush.msra.mxu0 %v778
    %1740 = vmatpush.msra.mxu0 %v776
    %1741 = vmatpush.msra.mxu0 %v774
    %1742 = vmatpush.msra.mxu0 %v772
    %1743 = vmatpush.msra.mxu0 %v770
    %1744 = vmatpush.msra.mxu0 %v768
    %1745 = vmatpush.msra.mxu0 %v766
    %1746 = vmatpush.msra.mxu0 %v764
    %1747 = vmatpush.msra.mxu0 %v762
    %1748 = vmatmul.bf16.gmra.mxu0 %v1120
    %v1749 = vpop.f32.mrf.mxu0
    %v1750 = vadd.f32 %v1653, %v1749
    %v1751 = vpop.f32.mrf.mxu0
    %v1752 = vadd.f32 %v1655, %v1751
    %1753 = vmatmul.bf16.gmra.mxu0 %v1124
    %v1754 = vpop.f32.mrf.mxu0
    %v1755 = vadd.f32 %v1658, %v1754
    %v1756 = vpop.f32.mrf.mxu0
    %v1757 = vadd.f32 %v1660, %v1756
    %1758 = vmatmul.bf16.gmra.mxu0 %v1128
    %v1759 = vpop.f32.mrf.mxu0
    %v1760 = vadd.f32 %v1663, %v1759
    %v1761 = vpop.f32.mrf.mxu0
    %v1762 = vadd.f32 %v1665, %v1761
    %1763 = vmatmul.bf16.gmra.mxu0 %v1132
    %v1764 = vpop.f32.mrf.mxu0
    %v1765 = vadd.f32 %v1668, %v1764
    %v1766 = vpop.f32.mrf.mxu0
    %v1767 = vadd.f32 %v1670, %v1766
    %1768 = vmatmul.bf16.gmra.mxu0 %v1136
    %v1769 = vpop.f32.mrf.mxu0
    %v1770 = vadd.f32 %v1673, %v1769
    %v1771 = vpop.f32.mrf.mxu0
    %v1772 = vadd.f32 %v1675, %v1771
    %1773 = vmatmul.bf16.gmra.mxu0 %v1140
    %v1774 = vpop.f32.mrf.mxu0
    %v1775 = vadd.f32 %v1678, %v1774
    %v1776 = vpop.f32.mrf.mxu0
    %v1777 = vadd.f32 %v1680, %v1776
    %1778 = vmatmul.bf16.gmra.mxu0 %v1144
    %v1779 = vpop.f32.mrf.mxu0
    %v1780 = vadd.f32 %v1683, %v1779
    %v1781 = vpop.f32.mrf.mxu0
    %v1782 = vadd.f32 %v1685, %v1781
    %1783 = vmatmul.bf16.gmra.mxu0 %v1148
    %v1784 = vpop.f32.mrf.mxu0
    %v1785 = vadd.f32 %v1688, %v1784
    %v1786 = vpop.f32.mrf.mxu0
    %v1787 = vadd.f32 %v1690, %v1786
    %1788 = vmatmul.bf16.gmra.mxu0 %v1152
    %v1789 = vpop.f32.mrf.mxu0
    %v1790 = vadd.f32 %v1693, %v1789
    %v1791 = vpop.f32.mrf.mxu0
    %v1792 = vadd.f32 %v1695, %v1791
    %1793 = vmatmul.bf16.gmra.mxu0 %v1156
    %v1794 = vpop.f32.mrf.mxu0
    %v1795 = vadd.f32 %v1698, %v1794
    %v1796 = vpop.f32.mrf.mxu0
    %v1797 = vadd.f32 %v1700, %v1796
    %1798 = vmatmul.bf16.gmra.mxu0 %v1160
    %v1799 = vpop.f32.mrf.mxu0
    %v1800 = vadd.f32 %v1703, %v1799
    %v1801 = vpop.f32.mrf.mxu0
    %v1802 = vadd.f32 %v1705, %v1801
    %1803 = vmatmul.bf16.gmra.mxu0 %v1164
    %v1804 = vpop.f32.mrf.mxu0
    %v1805 = vadd.f32 %v1708, %v1804
    %v1806 = vpop.f32.mrf.mxu0
    %v1807 = vadd.f32 %v1710, %v1806
    %1808 = vmatmul.bf16.gmra.mxu0 %v1168
    %v1809 = vpop.f32.mrf.mxu0
    %v1810 = vadd.f32 %v1713, %v1809
    %v1811 = vpop.f32.mrf.mxu0
    %v1812 = vadd.f32 %v1715, %v1811
    %1813 = vmatmul.bf16.gmra.mxu0 %v1172
    %v1814 = vpop.f32.mrf.mxu0
    %v1815 = vadd.f32 %v1718, %v1814
    %v1816 = vpop.f32.mrf.mxu0
    %v1817 = vadd.f32 %v1720, %v1816
    %1818 = vmatmul.bf16.gmra.mxu0 %v1176
    %v1819 = vpop.f32.mrf.mxu0
    %v1820 = vadd.f32 %v1723, %v1819
    %v1821 = vpop.f32.mrf.mxu0
    %v1822 = vadd.f32 %v1725, %v1821
    %1823 = vmatmul.bf16.gmra.mxu0 %v1180
    %v1824 = vpop.f32.mrf.mxu0
    %v1825 = vadd.f32 %v1728, %v1824
    %v1826 = vpop.f32.mrf.mxu0
    %v1827 = vadd.f32 %v1730, %v1826
    %1828 = vdwg.mxu0
    %1829 = vmatpush.msra.mxu0 %v824
    %1830 = vmatpush.msra.mxu0 %v822
    %1831 = vmatpush.msra.mxu0 %v820
    %1832 = vmatpush.msra.mxu0 %v818
    %1833 = vmatpush.msra.mxu0 %v816
    %1834 = vmatpush.msra.mxu0 %v814
    %1835 = vmatpush.msra.mxu0 %v812
    %1836 = vmatpush.msra.mxu0 %v810
    %1837 = vmatpush.msra.mxu0 %v808
    %1838 = vmatpush.msra.mxu0 %v806
    %1839 = vmatpush.msra.mxu0 %v804
    %1840 = vmatpush.msra.mxu0 %v802
    %1841 = vmatpush.msra.mxu0 %v800
    %1842 = vmatpush.msra.mxu0 %v798
    %1843 = vmatpush.msra.mxu0 %v796
    %1844 = vmatpush.msra.mxu0 %v794
    %1845 = vmatmul.bf16.gmra.mxu0 %v1121
    %v1846 = vpop.f32.mrf.mxu0
    %v1847 = vadd.f32 %v1750, %v1846
    %v1848 = vpop.f32.mrf.mxu0
    %v1849 = vadd.f32 %v1752, %v1848
    %1850 = vmatmul.bf16.gmra.mxu0 %v1125
    %v1851 = vpop.f32.mrf.mxu0
    %v1852 = vadd.f32 %v1755, %v1851
    %v1853 = vpop.f32.mrf.mxu0
    %v1854 = vadd.f32 %v1757, %v1853
    %1855 = vmatmul.bf16.gmra.mxu0 %v1129
    %v1856 = vpop.f32.mrf.mxu0
    %v1857 = vadd.f32 %v1760, %v1856
    %v1858 = vpop.f32.mrf.mxu0
    %v1859 = vadd.f32 %v1762, %v1858
    %1860 = vmatmul.bf16.gmra.mxu0 %v1133
    %v1861 = vpop.f32.mrf.mxu0
    %v1862 = vadd.f32 %v1765, %v1861
    %v1863 = vpop.f32.mrf.mxu0
    %v1864 = vadd.f32 %v1767, %v1863
    %1865 = vmatmul.bf16.gmra.mxu0 %v1137
    %v1866 = vpop.f32.mrf.mxu0
    %v1867 = vadd.f32 %v1770, %v1866
    %v1868 = vpop.f32.mrf.mxu0
    %v1869 = vadd.f32 %v1772, %v1868
    %1870 = vmatmul.bf16.gmra.mxu0 %v1141
    %v1871 = vpop.f32.mrf.mxu0
    %v1872 = vadd.f32 %v1775, %v1871
    %v1873 = vpop.f32.mrf.mxu0
    %v1874 = vadd.f32 %v1777, %v1873
    %1875 = vmatmul.bf16.gmra.mxu0 %v1145
    %v1876 = vpop.f32.mrf.mxu0
    %v1877 = vadd.f32 %v1780, %v1876
    %v1878 = vpop.f32.mrf.mxu0
    %v1879 = vadd.f32 %v1782, %v1878
    %1880 = vmatmul.bf16.gmra.mxu0 %v1149
    %v1881 = vpop.f32.mrf.mxu0
    %v1882 = vadd.f32 %v1785, %v1881
    %v1883 = vpop.f32.mrf.mxu0
    %v1884 = vadd.f32 %v1787, %v1883
    %1885 = vmatmul.bf16.gmra.mxu0 %v1153
    %v1886 = vpop.f32.mrf.mxu0
    %v1887 = vadd.f32 %v1790, %v1886
    %v1888 = vpop.f32.mrf.mxu0
    %v1889 = vadd.f32 %v1792, %v1888
    %1890 = vmatmul.bf16.gmra.mxu0 %v1157
    %v1891 = vpop.f32.mrf.mxu0
    %v1892 = vadd.f32 %v1795, %v1891
    %v1893 = vpop.f32.mrf.mxu0
    %v1894 = vadd.f32 %v1797, %v1893
    %1895 = vmatmul.bf16.gmra.mxu0 %v1161
    %v1896 = vpop.f32.mrf.mxu0
    %v1897 = vadd.f32 %v1800, %v1896
    %v1898 = vpop.f32.mrf.mxu0
    %v1899 = vadd.f32 %v1802, %v1898
    %1900 = vmatmul.bf16.gmra.mxu0 %v1165
    %v1901 = vpop.f32.mrf.mxu0
    %v1902 = vadd.f32 %v1805, %v1901
    %v1903 = vpop.f32.mrf.mxu0
    %v1904 = vadd.f32 %v1807, %v1903
    %1905 = vmatmul.bf16.gmra.mxu0 %v1169
    %v1906 = vpop.f32.mrf.mxu0
    %v1907 = vadd.f32 %v1810, %v1906
    %v1908 = vpop.f32.mrf.mxu0
    %v1909 = vadd.f32 %v1812, %v1908
    %1910 = vmatmul.bf16.gmra.mxu0 %v1173
    %v1911 = vpop.f32.mrf.mxu0
    %v1912 = vadd.f32 %v1815, %v1911
    %v1913 = vpop.f32.mrf.mxu0
    %v1914 = vadd.f32 %v1817, %v1913
    %1915 = vmatmul.bf16.gmra.mxu0 %v1177
    %v1916 = vpop.f32.mrf.mxu0
    %v1917 = vadd.f32 %v1820, %v1916
    %v1918 = vpop.f32.mrf.mxu0
    %v1919 = vadd.f32 %v1822, %v1918
    %1920 = vmatmul.bf16.gmra.mxu0 %v1181
    %v1921 = vpop.f32.mrf.mxu0
    %v1922 = vadd.f32 %v1825, %v1921
    %v1923 = vpop.f32.mrf.mxu0
    %v1924 = vadd.f32 %v1827, %v1923
    %1925 = vdwg.mxu0
    %1926 = vmatpush.msra.mxu0 %v856
    %1927 = vmatpush.msra.mxu0 %v854
    %1928 = vmatpush.msra.mxu0 %v852
    %1929 = vmatpush.msra.mxu0 %v850
    %1930 = vmatpush.msra.mxu0 %v848
    %1931 = vmatpush.msra.mxu0 %v846
    %1932 = vmatpush.msra.mxu0 %v844
    %1933 = vmatpush.msra.mxu0 %v842
    %1934 = vmatpush.msra.mxu0 %v840
    %1935 = vmatpush.msra.mxu0 %v838
    %1936 = vmatpush.msra.mxu0 %v836
    %1937 = vmatpush.msra.mxu0 %v834
    %1938 = vmatpush.msra.mxu0 %v832
    %1939 = vmatpush.msra.mxu0 %v830
    %1940 = vmatpush.msra.mxu0 %v828
    %1941 = vmatpush.msra.mxu0 %v826
    %1942 = vmatmul.bf16.gmra.mxu0 %v1122
    %v1943 = vpop.f32.mrf.mxu0
    %v1944 = vadd.f32 %v1847, %v1943
    %v1945 = vpop.f32.mrf.mxu0
    %v1946 = vadd.f32 %v1849, %v1945
    %1947 = vmatmul.bf16.gmra.mxu0 %v1126
    %v1948 = vpop.f32.mrf.mxu0
    %v1949 = vadd.f32 %v1852, %v1948
    %v1950 = vpop.f32.mrf.mxu0
    %v1951 = vadd.f32 %v1854, %v1950
    %1952 = vmatmul.bf16.gmra.mxu0 %v1130
    %v1953 = vpop.f32.mrf.mxu0
    %v1954 = vadd.f32 %v1857, %v1953
    %v1955 = vpop.f32.mrf.mxu0
    %v1956 = vadd.f32 %v1859, %v1955
    %1957 = vmatmul.bf16.gmra.mxu0 %v1134
    %v1958 = vpop.f32.mrf.mxu0
    %v1959 = vadd.f32 %v1862, %v1958
    %v1960 = vpop.f32.mrf.mxu0
    %v1961 = vadd.f32 %v1864, %v1960
    %1962 = vmatmul.bf16.gmra.mxu0 %v1138
    %v1963 = vpop.f32.mrf.mxu0
    %v1964 = vadd.f32 %v1867, %v1963
    %v1965 = vpop.f32.mrf.mxu0
    %v1966 = vadd.f32 %v1869, %v1965
    %1967 = vmatmul.bf16.gmra.mxu0 %v1142
    %v1968 = vpop.f32.mrf.mxu0
    %v1969 = vadd.f32 %v1872, %v1968
    %v1970 = vpop.f32.mrf.mxu0
    %v1971 = vadd.f32 %v1874, %v1970
    %1972 = vmatmul.bf16.gmra.mxu0 %v1146
    %v1973 = vpop.f32.mrf.mxu0
    %v1974 = vadd.f32 %v1877, %v1973
    %v1975 = vpop.f32.mrf.mxu0
    %v1976 = vadd.f32 %v1879, %v1975
    %1977 = vmatmul.bf16.gmra.mxu0 %v1150
    %v1978 = vpop.f32.mrf.mxu0
    %v1979 = vadd.f32 %v1882, %v1978
    %v1980 = vpop.f32.mrf.mxu0
    %v1981 = vadd.f32 %v1884, %v1980
    %1982 = vmatmul.bf16.gmra.mxu0 %v1154
    %v1983 = vpop.f32.mrf.mxu0
    %v1984 = vadd.f32 %v1887, %v1983
    %v1985 = vpop.f32.mrf.mxu0
    %v1986 = vadd.f32 %v1889, %v1985
    %1987 = vmatmul.bf16.gmra.mxu0 %v1158
    %v1988 = vpop.f32.mrf.mxu0
    %v1989 = vadd.f32 %v1892, %v1988
    %v1990 = vpop.f32.mrf.mxu0
    %v1991 = vadd.f32 %v1894, %v1990
    %1992 = vmatmul.bf16.gmra.mxu0 %v1162
    %v1993 = vpop.f32.mrf.mxu0
    %v1994 = vadd.f32 %v1897, %v1993
    %v1995 = vpop.f32.mrf.mxu0
    %v1996 = vadd.f32 %v1899, %v1995
    %1997 = vmatmul.bf16.gmra.mxu0 %v1166
    %v1998 = vpop.f32.mrf.mxu0
    %v1999 = vadd.f32 %v1902, %v1998
    %v2000 = vpop.f32.mrf.mxu0
    %v2001 = vadd.f32 %v1904, %v2000
    %2002 = vmatmul.bf16.gmra.mxu0 %v1170
    %v2003 = vpop.f32.mrf.mxu0
    %v2004 = vadd.f32 %v1907, %v2003
    %v2005 = vpop.f32.mrf.mxu0
    %v2006 = vadd.f32 %v1909, %v2005
    %2007 = vmatmul.bf16.gmra.mxu0 %v1174
    %v2008 = vpop.f32.mrf.mxu0
    %v2009 = vadd.f32 %v1912, %v2008
    %v2010 = vpop.f32.mrf.mxu0
    %v2011 = vadd.f32 %v1914, %v2010
    %2012 = vmatmul.bf16.gmra.mxu0 %v1178
    %v2013 = vpop.f32.mrf.mxu0
    %v2014 = vadd.f32 %v1917, %v2013
    %v2015 = vpop.f32.mrf.mxu0
    %v2016 = vadd.f32 %v1919, %v2015
    %2017 = vmatmul.bf16.gmra.mxu0 %v1182
    %v2018 = vpop.f32.mrf.mxu0
    %v2019 = vadd.f32 %v1922, %v2018
    %v2020 = vpop.f32.mrf.mxu0
    %v2021 = vadd.f32 %v1924, %v2020
    %2022 = vdwg.mxu0
    %v2023 = vmax.f32 %v1556, 0.0
    %v2024 = vmax.f32 %v1944, 0.0
    %v2025 = vmax.f32 %v1558, 0.0
    %v2026 = vmax.f32 %v1946, 0.0
    %v2027 = vmax.f32 %v1561, 0.0
    %v2028 = vmax.f32 %v1949, 0.0
    %v2029 = vmax.f32 %v1563, 0.0
    %v2030 = vmax.f32 %v1951, 0.0
    %v2031 = vmax.f32 %v1566, 0.0
    %v2032 = vmax.f32 %v1954, 0.0
    %v2033 = vmax.f32 %v1568, 0.0
    %v2034 = vmax.f32 %v1956, 0.0
    %v2035 = vmax.f32 %v1571, 0.0
    %v2036 = vmax.f32 %v1959, 0.0
    %v2037 = vmax.f32 %v1573, 0.0
    %v2038 = vmax.f32 %v1961, 0.0
    %v2039 = vmax.f32 %v1576, 0.0
    %v2040 = vmax.f32 %v1964, 0.0
    %v2041 = vmax.f32 %v1578, 0.0
    %v2042 = vmax.f32 %v1966, 0.0
    %v2043 = vmax.f32 %v1581, 0.0
    %v2044 = vmax.f32 %v1969, 0.0
    %v2045 = vmax.f32 %v1583, 0.0
    %v2046 = vmax.f32 %v1971, 0.0
    %v2047 = vmax.f32 %v1586, 0.0
    %v2048 = vmax.f32 %v1974, 0.0
    %v2049 = vmax.f32 %v1588, 0.0
    %v2050 = vmax.f32 %v1976, 0.0
    %v2051 = vmax.f32 %v1591, 0.0
    %v2052 = vmax.f32 %v1979, 0.0
    %v2053 = vmax.f32 %v1593, 0.0
    %v2054 = vmax.f32 %v1981, 0.0
    %v2055 = vmax.f32 %v1596, 0.0
    %v2056 = vmax.f32 %v1984, 0.0
    %v2057 = vmax.f32 %v1598, 0.0
    %v2058 = vmax.f32 %v1986, 0.0
    %v2059 = vmax.f32 %v1601, 0.0
    %v2060 = vmax.f32 %v1989, 0.0
    %v2061 = vmax.f32 %v1603, 0.0
    %v2062 = vmax.f32 %v1991, 0.0
    %v2063 = vmax.f32 %v1606, 0.0
    %v2064 = vmax.f32 %v1994, 0.0
    %v2065 = vmax.f32 %v1608, 0.0
    %v2066 = vmax.f32 %v1996, 0.0
    %v2067 = vmax.f32 %v1611, 0.0
    %v2068 = vmax.f32 %v1999, 0.0
    %v2069 = vmax.f32 %v1613, 0.0
    %v2070 = vmax.f32 %v2001, 0.0
    %v2071 = vmax.f32 %v1616, 0.0
    %v2072 = vmax.f32 %v2004, 0.0
    %v2073 = vmax.f32 %v1618, 0.0
    %v2074 = vmax.f32 %v2006, 0.0
    %v2075 = vmax.f32 %v1621, 0.0
    %v2076 = vmax.f32 %v2009, 0.0
    %v2077 = vmax.f32 %v1623, 0.0
    %v2078 = vmax.f32 %v2011, 0.0
    %v2079 = vmax.f32 %v1626, 0.0
    %v2080 = vmax.f32 %v2014, 0.0
    %v2081 = vmax.f32 %v1628, 0.0
    %v2082 = vmax.f32 %v2016, 0.0
    %v2083 = vmax.f32 %v1631, 0.0
    %v2084 = vmax.f32 %v2019, 0.0
    %v2085 = vmax.f32 %v1633, 0.0
    %v2086 = vmax.f32 %v2021, 0.0
    %v2087 = vld [vmem:[%s1] sm:$0xff]
    %v2088 = vld [vmem:[%s1 + $0x8] sm:$0xff]
    %v2089 = vld [vmem:[%s1 + $0x10] sm:$0xff]
    %v2090 = vld [vmem:[%s1 + $0x18] sm:$0xff]
    %v2091 = vld [vmem:[%s1 + $0x20] sm:$0xff]
    %v2092 = vld [vmem:[%s1 + $0x28] sm:$0xff]
    %v2093 = vld [vmem:[%s1 + $0x30] sm:$0xff]
    %v2094 = vld [vmem:[%s1 + $0x38] sm:$0xff]
    %v2095 = vld [vmem:[%s1 + $0x40] sm:$0xff]
    %v2096 = vld [vmem:[%s1 + $0x48] sm:$0xff]
    %v2097 = vld [vmem:[%s1 + $0x50] sm:$0xff]
    %v2098 = vld [vmem:[%s1 + $0x58] sm:$0xff]
    %v2099 = vld [vmem:[%s1 + $0x60] sm:$0xff]
    %v2100 = vld [vmem:[%s1 + $0x68] sm:$0xff]
    %v2101 = vld [vmem:[%s1 + $0x70] sm:$0xff]
    %v2102 = vld [vmem:[%s1 + $0x78] sm:$0xff]
    %v2103 = vld [vmem:[%s1 + $0x80] sm:$0xff]
    %v2104 = vld [vmem:[%s1 + $0x88] sm:$0xff]
    %v2105 = vld [vmem:[%s1 + $0x90] sm:$0xff]
    %v2106 = vld [vmem:[%s1 + $0x98] sm:$0xff]
    %v2107 = vld [vmem:[%s1 + $0xa0] sm:$0xff]
    %v2108 = vld [vmem:[%s1 + $0xa8] sm:$0xff]
    %v2109 = vld [vmem:[%s1 + $0xb0] sm:$0xff]
    %v2110 = vld [vmem:[%s1 + $0xb8] sm:$0xff]
    %v2111 = vld [vmem:[%s1 + $0xc0] sm:$0xff]
    %v2112 = vld [vmem:[%s1 + $0xc8] sm:$0xff]
    %v2113 = vld [vmem:[%s1 + $0xd0] sm:$0xff]
    %v2114 = vld [vmem:[%s1 + $0xd8] sm:$0xff]
    %v2115 = vld [vmem:[%s1 + $0xe0] sm:$0xff]
    %v2116 = vld [vmem:[%s1 + $0xe8] sm:$0xff]
    %v2117 = vld [vmem:[%s1 + $0xf0] sm:$0xff]
    %v2118 = vld [vmem:[%s1 + $0xf8] sm:$0xff]
    %v2119 = vld [vmem:[%s1 + $0x100] sm:$0xff]
    %v2120 = vld [vmem:[%s1 + $0x108] sm:$0xff]
    %v2121 = vld [vmem:[%s1 + $0x110] sm:$0xff]
    %v2122 = vld [vmem:[%s1 + $0x118] sm:$0xff]
    %v2123 = vld [vmem:[%s1 + $0x120] sm:$0xff]
    %v2124 = vld [vmem:[%s1 + $0x128] sm:$0xff]
    %v2125 = vld [vmem:[%s1 + $0x130] sm:$0xff]
    %v2126 = vld [vmem:[%s1 + $0x138] sm:$0xff]
    %v2127 = vld [vmem:[%s1 + $0x140] sm:$0xff]
    %v2128 = vld [vmem:[%s1 + $0x148] sm:$0xff]
    %v2129 = vld [vmem:[%s1 + $0x150] sm:$0xff]
    %v2130 = vld [vmem:[%s1 + $0x158] sm:$0xff]
    %v2131 = vld [vmem:[%s1 + $0x160] sm:$0xff]
    %v2132 = vld [vmem:[%s1 + $0x168] sm:$0xff]
    %v2133 = vld [vmem:[%s1 + $0x170] sm:$0xff]
    %v2134 = vld [vmem:[%s1 + $0x178] sm:$0xff]
    %v2135 = vld [vmem:[%s1 + $0x180] sm:$0xff]
    %v2136 = vld [vmem:[%s1 + $0x188] sm:$0xff]
    %v2137 = vld [vmem:[%s1 + $0x190] sm:$0xff]
    %v2138 = vld [vmem:[%s1 + $0x198] sm:$0xff]
    %v2139 = vld [vmem:[%s1 + $0x1a0] sm:$0xff]
    %v2140 = vld [vmem:[%s1 + $0x1a8] sm:$0xff]
    %v2141 = vld [vmem:[%s1 + $0x1b0] sm:$0xff]
    %v2142 = vld [vmem:[%s1 + $0x1b8] sm:$0xff]
    %v2143 = vld [vmem:[%s1 + $0x1c0] sm:$0xff]
    %v2144 = vld [vmem:[%s1 + $0x1c8] sm:$0xff]
    %v2145 = vld [vmem:[%s1 + $0x1d0] sm:$0xff]
    %v2146 = vld [vmem:[%s1 + $0x1d8] sm:$0xff]
    %v2147 = vld [vmem:[%s1 + $0x1e0] sm:$0xff]
    %v2148 = vld [vmem:[%s1 + $0x1e8] sm:$0xff]
    %v2149 = vld [vmem:[%s1 + $0x1f0] sm:$0xff]
    %v2150 = vld [vmem:[%s1 + $0x1f8] sm:$0xff]
    %v2215 = vunpack.c.l.b16 %v2087
    %v2216 = vunpack.c.h.b16 %v2087
    %v2217 = vunpack.c.l.b16 %v2088
    %v2218 = vunpack.c.h.b16 %v2088
    %v2219 = vunpack.c.l.b16 %v2089
    %v2220 = vunpack.c.h.b16 %v2089
    %v2221 = vunpack.c.l.b16 %v2090
    %v2222 = vunpack.c.h.b16 %v2090
    %v2223 = vunpack.c.l.b16 %v2091
    %v2224 = vunpack.c.h.b16 %v2091
    %v2225 = vunpack.c.l.b16 %v2092
    %v2226 = vunpack.c.h.b16 %v2092
    %v2227 = vunpack.c.l.b16 %v2093
    %v2228 = vunpack.c.h.b16 %v2093
    %v2229 = vunpack.c.l.b16 %v2094
    %v2230 = vunpack.c.h.b16 %v2094
    %v2231 = vunpack.c.l.b16 %v2095
    %v2232 = vunpack.c.h.b16 %v2095
    %v2233 = vunpack.c.l.b16 %v2096
    %v2234 = vunpack.c.h.b16 %v2096
    %v2235 = vunpack.c.l.b16 %v2097
    %v2236 = vunpack.c.h.b16 %v2097
    %v2237 = vunpack.c.l.b16 %v2098
    %v2238 = vunpack.c.h.b16 %v2098
    %v2239 = vunpack.c.l.b16 %v2099
    %v2240 = vunpack.c.h.b16 %v2099
    %v2241 = vunpack.c.l.b16 %v2100
    %v2242 = vunpack.c.h.b16 %v2100
    %v2243 = vunpack.c.l.b16 %v2101
    %v2244 = vunpack.c.h.b16 %v2101
    %v2245 = vunpack.c.l.b16 %v2102
    %v2246 = vunpack.c.h.b16 %v2102
    %v2247 = vunpack.c.l.b16 %v2103
    %v2248 = vunpack.c.h.b16 %v2103
    %v2249 = vunpack.c.l.b16 %v2104
    %v2250 = vunpack.c.h.b16 %v2104
    %v2251 = vunpack.c.l.b16 %v2105
    %v2252 = vunpack.c.h.b16 %v2105
    %v2253 = vunpack.c.l.b16 %v2106
    %v2254 = vunpack.c.h.b16 %v2106
    %v2255 = vunpack.c.l.b16 %v2107
    %v2256 = vunpack.c.h.b16 %v2107
    %v2257 = vunpack.c.l.b16 %v2108
    %v2258 = vunpack.c.h.b16 %v2108
    %v2259 = vunpack.c.l.b16 %v2109
    %v2260 = vunpack.c.h.b16 %v2109
    %v2261 = vunpack.c.l.b16 %v2110
    %v2262 = vunpack.c.h.b16 %v2110
    %v2263 = vunpack.c.l.b16 %v2111
    %v2264 = vunpack.c.h.b16 %v2111
    %v2265 = vunpack.c.l.b16 %v2112
    %v2266 = vunpack.c.h.b16 %v2112
    %v2267 = vunpack.c.l.b16 %v2113
    %v2268 = vunpack.c.h.b16 %v2113
    %v2269 = vunpack.c.l.b16 %v2114
    %v2270 = vunpack.c.h.b16 %v2114
    %v2271 = vunpack.c.l.b16 %v2115
    %v2272 = vunpack.c.h.b16 %v2115
    %v2273 = vunpack.c.l.b16 %v2116
    %v2274 = vunpack.c.h.b16 %v2116
    %v2275 = vunpack.c.l.b16 %v2117
    %v2276 = vunpack.c.h.b16 %v2117
    %v2277 = vunpack.c.l.b16 %v2118
    %v2278 = vunpack.c.h.b16 %v2118
    %v2279 = vunpack.c.l.b16 %v2119
    %v2280 = vunpack.c.h.b16 %v2119
    %v2281 = vunpack.c.l.b16 %v2120
    %v2282 = vunpack.c.h.b16 %v2120
    %v2283 = vunpack.c.l.b16 %v2121
    %v2284 = vunpack.c.h.b16 %v2121
    %v2285 = vunpack.c.l.b16 %v2122
    %v2286 = vunpack.c.h.b16 %v2122
    %v2287 = vunpack.c.l.b16 %v2123
    %v2288 = vunpack.c.h.b16 %v2123
    %v2289 = vunpack.c.l.b16 %v2124
    %v2290 = vunpack.c.h.b16 %v2124
    %v2291 = vunpack.c.l.b16 %v2125
    %v2292 = vunpack.c.h.b16 %v2125
    %v2293 = vunpack.c.l.b16 %v2126
    %v2294 = vunpack.c.h.b16 %v2126
    %v2295 = vunpack.c.l.b16 %v2127
    %v2296 = vunpack.c.h.b16 %v2127
    %v2297 = vunpack.c.l.b16 %v2128
    %v2298 = vunpack.c.h.b16 %v2128
    %v2299 = vunpack.c.l.b16 %v2129
    %v2300 = vunpack.c.h.b16 %v2129
    %v2301 = vunpack.c.l.b16 %v2130
    %v2302 = vunpack.c.h.b16 %v2130
    %v2303 = vunpack.c.l.b16 %v2131
    %v2304 = vunpack.c.h.b16 %v2131
    %v2305 = vunpack.c.l.b16 %v2132
    %v2306 = vunpack.c.h.b16 %v2132
    %v2307 = vunpack.c.l.b16 %v2133
    %v2308 = vunpack.c.h.b16 %v2133
    %v2309 = vunpack.c.l.b16 %v2134
    %v2310 = vunpack.c.h.b16 %v2134
    %v2311 = vunpack.c.l.b16 %v2135
    %v2312 = vunpack.c.h.b16 %v2135
    %v2313 = vunpack.c.l.b16 %v2136
    %v2314 = vunpack.c.h.b16 %v2136
    %v2315 = vunpack.c.l.b16 %v2137
    %v2316 = vunpack.c.h.b16 %v2137
    %v2317 = vunpack.c.l.b16 %v2138
    %v2318 = vunpack.c.h.b16 %v2138
    %v2319 = vunpack.c.l.b16 %v2139
    %v2320 = vunpack.c.h.b16 %v2139
    %v2321 = vunpack.c.l.b16 %v2140
    %v2322 = vunpack.c.h.b16 %v2140
    %v2323 = vunpack.c.l.b16 %v2141
    %v2324 = vunpack.c.h.b16 %v2141
    %v2325 = vunpack.c.l.b16 %v2142
    %v2326 = vunpack.c.h.b16 %v2142
    %v2327 = vunpack.c.l.b16 %v2143
    %v2328 = vunpack.c.h.b16 %v2143
    %v2329 = vunpack.c.l.b16 %v2144
    %v2330 = vunpack.c.h.b16 %v2144
    %v2331 = vunpack.c.l.b16 %v2145
    %v2332 = vunpack.c.h.b16 %v2145
    %v2333 = vunpack.c.l.b16 %v2146
    %v2334 = vunpack.c.h.b16 %v2146
    %v2335 = vunpack.c.l.b16 %v2147
    %v2336 = vunpack.c.h.b16 %v2147
    %v2337 = vunpack.c.l.b16 %v2148
    %v2338 = vunpack.c.h.b16 %v2148
    %v2339 = vunpack.c.l.b16 %v2149
    %v2340 = vunpack.c.h.b16 %v2149
    %v2341 = vunpack.c.l.b16 %v2150
    %v2342 = vunpack.c.h.b16 %v2150
    %v2343 = vpack.c.b16 %v2219, %v2215
    %v2344 = vpack.c.b16 %v2220, %v2216
    %v2345 = vpack.c.b16 %v2221, %v2217
    %v2346 = vpack.c.b16 %v2222, %v2218
    %v2347 = vpack.c.b16 %v2227, %v2223
    %v2348 = vpack.c.b16 %v2228, %v2224
    %v2349 = vpack.c.b16 %v2229, %v2225
    %v2350 = vpack.c.b16 %v2230, %v2226
    %v2351 = vpack.c.b16 %v2235, %v2231
    %v2352 = vpack.c.b16 %v2236, %v2232
    %v2353 = vpack.c.b16 %v2237, %v2233
    %v2354 = vpack.c.b16 %v2238, %v2234
    %v2355 = vpack.c.b16 %v2243, %v2239
    %v2356 = vpack.c.b16 %v2244, %v2240
    %v2357 = vpack.c.b16 %v2245, %v2241
    %v2358 = vpack.c.b16 %v2246, %v2242
    %v2359 = vpack.c.b16 %v2251, %v2247
    %v2360 = vpack.c.b16 %v2252, %v2248
    %v2361 = vpack.c.b16 %v2253, %v2249
    %v2362 = vpack.c.b16 %v2254, %v2250
    %v2363 = vpack.c.b16 %v2259, %v2255
    %v2364 = vpack.c.b16 %v2260, %v2256
    %v2365 = vpack.c.b16 %v2261, %v2257
    %v2366 = vpack.c.b16 %v2262, %v2258
    %v2367 = vpack.c.b16 %v2267, %v2263
    %v2368 = vpack.c.b16 %v2268, %v2264
    %v2369 = vpack.c.b16 %v2269, %v2265
    %v2370 = vpack.c.b16 %v2270, %v2266
    %v2371 = vpack.c.b16 %v2275, %v2271
    %v2372 = vpack.c.b16 %v2276, %v2272
    %v2373 = vpack.c.b16 %v2277, %v2273
    %v2374 = vpack.c.b16 %v2278, %v2274
    %v2375 = vpack.c.b16 %v2283, %v2279
    %v2376 = vpack.c.b16 %v2284, %v2280
    %v2377 = vpack.c.b16 %v2285, %v2281
    %v2378 = vpack.c.b16 %v2286, %v2282
    %v2379 = vpack.c.b16 %v2291, %v2287
    %v2380 = vpack.c.b16 %v2292, %v2288
    %v2381 = vpack.c.b16 %v2293, %v2289
    %v2382 = vpack.c.b16 %v2294, %v2290
    %v2383 = vpack.c.b16 %v2299, %v2295
    %v2384 = vpack.c.b16 %v2300, %v2296
    %v2385 = vpack.c.b16 %v2301, %v2297
    %v2386 = vpack.c.b16 %v2302, %v2298
    %v2387 = vpack.c.b16 %v2307, %v2303
    %v2388 = vpack.c.b16 %v2308, %v2304
    %v2389 = vpack.c.b16 %v2309, %v2305
    %v2390 = vpack.c.b16 %v2310, %v2306
    %v2391 = vpack.c.b16 %v2315, %v2311
    %v2392 = vpack.c.b16 %v2316, %v2312
    %v2393 = vpack.c.b16 %v2317, %v2313
    %v2394 = vpack.c.b16 %v2318, %v2314
    %v2395 = vpack.c.b16 %v2323, %v2319
    %v2396 = vpack.c.b16 %v2324, %v2320
    %v2397 = vpack.c.b16 %v2325, %v2321
    %v2398 = vpack.c.b16 %v2326, %v2322
    %v2399 = vpack.c.b16 %v2331, %v2327
    %v2400 = vpack.c.b16 %v2332, %v2328
    %v2401 = vpack.c.b16 %v2333, %v2329
    %v2402 = vpack.c.b16 %v2334, %v2330
    %v2403 = vpack.c.b16 %v2339, %v2335
    %v2404 = vpack.c.b16 %v2340, %v2336
    %v2405 = vpack.c.b16 %v2341, %v2337
    %v2406 = vpack.c.b16 %v2342, %v2338
    %2471 = vmatpush.msra.mxu0 %v759
    %2472 = vmatpush.msra.mxu0 %v757
    %2473 = vmatpush.msra.mxu0 %v755
    %2474 = vmatpush.msra.mxu0 %v753
    %2475 = vmatpush.msra.mxu0 %v751
    %2476 = vmatpush.msra.mxu0 %v749
    %2477 = vmatpush.msra.mxu0 %v747
    %2478 = vmatpush.msra.mxu0 %v745
    %2479 = vmatpush.msra.mxu0 %v743
    %2480 = vmatpush.msra.mxu0 %v741
    %2481 = vmatpush.msra.mxu0 %v739
    %2482 = vmatpush.msra.mxu0 %v737
    %2483 = vmatpush.msra.mxu0 %v735
    %2484 = vmatpush.msra.mxu0 %v733
    %2485 = vmatpush.msra.mxu0 %v731
    %2486 = vmatpush.msra.mxu0 %v729
    %2487 = vmatmul.bf16.gmra.mxu0 %v2343
    %v2488 = vpop.f32.mrf.mxu0
    %v2489 = vadd.f32 %v923, %v2488
    %v2490 = vpop.f32.mrf.mxu0
    %v2491 = vadd.f32 %v923, %v2490
    %2492 = vmatmul.bf16.gmra.mxu0 %v2347
    %v2493 = vpop.f32.mrf.mxu0
    %v2494 = vadd.f32 %v923, %v2493
    %v2495 = vpop.f32.mrf.mxu0
    %v2496 = vadd.f32 %v923, %v2495
    %2497 = vmatmul.bf16.gmra.mxu0 %v2351
    %v2498 = vpop.f32.mrf.mxu0
    %v2499 = vadd.f32 %v923, %v2498
    %v2500 = vpop.f32.mrf.mxu0
    %v2501 = vadd.f32 %v923, %v2500
    %2502 = vmatmul.bf16.gmra.mxu0 %v2355
    %v2503 = vpop.f32.mrf.mxu0
    %v2504 = vadd.f32 %v923, %v2503
    %v2505 = vpop.f32.mrf.mxu0
    %v2506 = vadd.f32 %v923, %v2505
    %2507 = vmatmul.bf16.gmra.mxu0 %v2359
    %v2508 = vpop.f32.mrf.mxu0
    %v2509 = vadd.f32 %v923, %v2508
    %v2510 = vpop.f32.mrf.mxu0
    %v2511 = vadd.f32 %v923, %v2510
    %2512 = vmatmul.bf16.gmra.mxu0 %v2363
    %v2513 = vpop.f32.mrf.mxu0
    %v2514 = vadd.f32 %v923, %v2513
    %v2515 = vpop.f32.mrf.mxu0
    %v2516 = vadd.f32 %v923, %v2515
    %2517 = vmatmul.bf16.gmra.mxu0 %v2367
    %v2518 = vpop.f32.mrf.mxu0
    %v2519 = vadd.f32 %v923, %v2518
    %v2520 = vpop.f32.mrf.mxu0
    %v2521 = vadd.f32 %v923, %v2520
    %2522 = vmatmul.bf16.gmra.mxu0 %v2371
    %v2523 = vpop.f32.mrf.mxu0
    %v2524 = vadd.f32 %v923, %v2523
    %v2525 = vpop.f32.mrf.mxu0
    %v2526 = vadd.f32 %v923, %v2525
    %2527 = vmatmul.bf16.gmra.mxu0 %v2375
    %v2528 = vpop.f32.mrf.mxu0
    %v2529 = vadd.f32 %v923, %v2528
    %v2530 = vpop.f32.mrf.mxu0
    %v2531 = vadd.f32 %v923, %v2530
    %2532 = vmatmul.bf16.gmra.mxu0 %v2379
    %v2533 = vpop.f32.mrf.mxu0
    %v2534 = vadd.f32 %v923, %v2533
    %v2535 = vpop.f32.mrf.mxu0
    %v2536 = vadd.f32 %v923, %v2535
    %2537 = vmatmul.bf16.gmra.mxu0 %v2383
    %v2538 = vpop.f32.mrf.mxu0
    %v2539 = vadd.f32 %v923, %v2538
    %v2540 = vpop.f32.mrf.mxu0
    %v2541 = vadd.f32 %v923, %v2540
    %2542 = vmatmul.bf16.gmra.mxu0 %v2387
    %v2543 = vpop.f32.mrf.mxu0
    %v2544 = vadd.f32 %v923, %v2543
    %v2545 = vpop.f32.mrf.mxu0
    %v2546 = vadd.f32 %v923, %v2545
    %2547 = vmatmul.bf16.gmra.mxu0 %v2391
    %v2548 = vpop.f32.mrf.mxu0
    %v2549 = vadd.f32 %v923, %v2548
    %v2550 = vpop.f32.mrf.mxu0
    %v2551 = vadd.f32 %v923, %v2550
    %2552 = vmatmul.bf16.gmra.mxu0 %v2395
    %v2553 = vpop.f32.mrf.mxu0
    %v2554 = vadd.f32 %v923, %v2553
    %v2555 = vpop.f32.mrf.mxu0
    %v2556 = vadd.f32 %v923, %v2555
    %2557 = vmatmul.bf16.gmra.mxu0 %v2399
    %v2558 = vpop.f32.mrf.mxu0
    %v2559 = vadd.f32 %v923, %v2558
    %v2560 = vpop.f32.mrf.mxu0
    %v2561 = vadd.f32 %v923, %v2560
    %2562 = vmatmul.bf16.gmra.mxu0 %v2403
    %v2563 = vpop.f32.mrf.mxu0
    %v2564 = vadd.f32 %v923, %v2563
    %v2565 = vpop.f32.mrf.mxu0
    %v2566 = vadd.f32 %v923, %v2565
    %2567 = vdwg.mxu0
    %2568 = vmatpush.msra.mxu0 %v791
    %2569 = vmatpush.msra.mxu0 %v789
    %2570 = vmatpush.msra.mxu0 %v787
    %2571 = vmatpush.msra.mxu0 %v785
    %2572 = vmatpush.msra.mxu0 %v783
    %2573 = vmatpush.msra.mxu0 %v781
    %2574 = vmatpush.msra.mxu0 %v779
    %2575 = vmatpush.msra.mxu0 %v777
    %2576 = vmatpush.msra.mxu0 %v775
    %2577 = vmatpush.msra.mxu0 %v773
    %2578 = vmatpush.msra.mxu0 %v771
    %2579 = vmatpush.msra.mxu0 %v769
    %2580 = vmatpush.msra.mxu0 %v767
    %2581 = vmatpush.msra.mxu0 %v765
    %2582 = vmatpush.msra.mxu0 %v763
    %2583 = vmatpush.msra.mxu0 %v761
    %2584 = vmatmul.bf16.gmra.mxu0 %v2344
    %v2585 = vpop.f32.mrf.mxu0
    %v2586 = vadd.f32 %v2489, %v2585
    %v2587 = vpop.f32.mrf.mxu0
    %v2588 = vadd.f32 %v2491, %v2587
    %2589 = vmatmul.bf16.gmra.mxu0 %v2348
    %v2590 = vpop.f32.mrf.mxu0
    %v2591 = vadd.f32 %v2494, %v2590
    %v2592 = vpop.f32.mrf.mxu0
    %v2593 = vadd.f32 %v2496, %v2592
    %2594 = vmatmul.bf16.gmra.mxu0 %v2352
    %v2595 = vpop.f32.mrf.mxu0
    %v2596 = vadd.f32 %v2499, %v2595
    %v2597 = vpop.f32.mrf.mxu0
    %v2598 = vadd.f32 %v2501, %v2597
    %2599 = vmatmul.bf16.gmra.mxu0 %v2356
    %v2600 = vpop.f32.mrf.mxu0
    %v2601 = vadd.f32 %v2504, %v2600
    %v2602 = vpop.f32.mrf.mxu0
    %v2603 = vadd.f32 %v2506, %v2602
    %2604 = vmatmul.bf16.gmra.mxu0 %v2360
    %v2605 = vpop.f32.mrf.mxu0
    %v2606 = vadd.f32 %v2509, %v2605
    %v2607 = vpop.f32.mrf.mxu0
    %v2608 = vadd.f32 %v2511, %v2607
    %2609 = vmatmul.bf16.gmra.mxu0 %v2364
    %v2610 = vpop.f32.mrf.mxu0
    %v2611 = vadd.f32 %v2514, %v2610
    %v2612 = vpop.f32.mrf.mxu0
    %v2613 = vadd.f32 %v2516, %v2612
    %2614 = vmatmul.bf16.gmra.mxu0 %v2368
    %v2615 = vpop.f32.mrf.mxu0
    %v2616 = vadd.f32 %v2519, %v2615
    %v2617 = vpop.f32.mrf.mxu0
    %v2618 = vadd.f32 %v2521, %v2617
    %2619 = vmatmul.bf16.gmra.mxu0 %v2372
    %v2620 = vpop.f32.mrf.mxu0
    %v2621 = vadd.f32 %v2524, %v2620
    %v2622 = vpop.f32.mrf.mxu0
    %v2623 = vadd.f32 %v2526, %v2622
    %2624 = vmatmul.bf16.gmra.mxu0 %v2376
    %v2625 = vpop.f32.mrf.mxu0
    %v2626 = vadd.f32 %v2529, %v2625
    %v2627 = vpop.f32.mrf.mxu0
    %v2628 = vadd.f32 %v2531, %v2627
    %2629 = vmatmul.bf16.gmra.mxu0 %v2380
    %v2630 = vpop.f32.mrf.mxu0
    %v2631 = vadd.f32 %v2534, %v2630
    %v2632 = vpop.f32.mrf.mxu0
    %v2633 = vadd.f32 %v2536, %v2632
    %2634 = vmatmul.bf16.gmra.mxu0 %v2384
    %v2635 = vpop.f32.mrf.mxu0
    %v2636 = vadd.f32 %v2539, %v2635
    %v2637 = vpop.f32.mrf.mxu0
    %v2638 = vadd.f32 %v2541, %v2637
    %2639 = vmatmul.bf16.gmra.mxu0 %v2388
    %v2640 = vpop.f32.mrf.mxu0
    %v2641 = vadd.f32 %v2544, %v2640
    %v2642 = vpop.f32.mrf.mxu0
    %v2643 = vadd.f32 %v2546, %v2642
    %2644 = vmatmul.bf16.gmra.mxu0 %v2392
    %v2645 = vpop.f32.mrf.mxu0
    %v2646 = vadd.f32 %v2549, %v2645
    %v2647 = vpop.f32.mrf.mxu0
    %v2648 = vadd.f32 %v2551, %v2647
    %2649 = vmatmul.bf16.gmra.mxu0 %v2396
    %v2650 = vpop.f32.mrf.mxu0
    %v2651 = vadd.f32 %v2554, %v2650
    %v2652 = vpop.f32.mrf.mxu0
    %v2653 = vadd.f32 %v2556, %v2652
    %2654 = vmatmul.bf16.gmra.mxu0 %v2400
    %v2655 = vpop.f32.mrf.mxu0
    %v2656 = vadd.f32 %v2559, %v2655
    %v2657 = vpop.f32.mrf.mxu0
    %v2658 = vadd.f32 %v2561, %v2657
    %2659 = vmatmul.bf16.gmra.mxu0 %v2404
    %v2660 = vpop.f32.mrf.mxu0
    %v2661 = vadd.f32 %v2564, %v2660
    %v2662 = vpop.f32.mrf.mxu0
    %v2663 = vadd.f32 %v2566, %v2662
    %2664 = vdwg.mxu0
    %2665 = vmatpush.msra.mxu0 %v823
    %2666 = vmatpush.msra.mxu0 %v821
    %2667 = vmatpush.msra.mxu0 %v819
    %2668 = vmatpush.msra.mxu0 %v817
    %2669 = vmatpush.msra.mxu0 %v815
    %2670 = vmatpush.msra.mxu0 %v813
    %2671 = vmatpush.msra.mxu0 %v811
    %2672 = vmatpush.msra.mxu0 %v809
    %2673 = vmatpush.msra.mxu0 %v807
    %2674 = vmatpush.msra.mxu0 %v805
    %2675 = vmatpush.msra.mxu0 %v803
    %2676 = vmatpush.msra.mxu0 %v801
    %2677 = vmatpush.msra.mxu0 %v799
    %2678 = vmatpush.msra.mxu0 %v797
    %2679 = vmatpush.msra.mxu0 %v795
    %2680 = vmatpush.msra.mxu0 %v793
    %2681 = vmatmul.bf16.gmra.mxu0 %v2345
    %v2682 = vpop.f32.mrf.mxu0
    %v2683 = vadd.f32 %v2586, %v2682
    %v2684 = vpop.f32.mrf.mxu0
    %v2685 = vadd.f32 %v2588, %v2684
    %2686 = vmatmul.bf16.gmra.mxu0 %v2349
    %v2687 = vpop.f32.mrf.mxu0
    %v2688 = vadd.f32 %v2591, %v2687
    %v2689 = vpop.f32.mrf.mxu0
    %v2690 = vadd.f32 %v2593, %v2689
    %2691 = vmatmul.bf16.gmra.mxu0 %v2353
    %v2692 = vpop.f32.mrf.mxu0
    %v2693 = vadd.f32 %v2596, %v2692
    %v2694 = vpop.f32.mrf.mxu0
    %v2695 = vadd.f32 %v2598, %v2694
    %2696 = vmatmul.bf16.gmra.mxu0 %v2357
    %v2697 = vpop.f32.mrf.mxu0
    %v2698 = vadd.f32 %v2601, %v2697
    %v2699 = vpop.f32.mrf.mxu0
    %v2700 = vadd.f32 %v2603, %v2699
    %2701 = vmatmul.bf16.gmra.mxu0 %v2361
    %v2702 = vpop.f32.mrf.mxu0
    %v2703 = vadd.f32 %v2606, %v2702
    %v2704 = vpop.f32.mrf.mxu0
    %v2705 = vadd.f32 %v2608, %v2704
    %2706 = vmatmul.bf16.gmra.mxu0 %v2365
    %v2707 = vpop.f32.mrf.mxu0
    %v2708 = vadd.f32 %v2611, %v2707
    %v2709 = vpop.f32.mrf.mxu0
    %v2710 = vadd.f32 %v2613, %v2709
    %2711 = vmatmul.bf16.gmra.mxu0 %v2369
    %v2712 = vpop.f32.mrf.mxu0
    %v2713 = vadd.f32 %v2616, %v2712
    %v2714 = vpop.f32.mrf.mxu0
    %v2715 = vadd.f32 %v2618, %v2714
    %2716 = vmatmul.bf16.gmra.mxu0 %v2373
    %v2717 = vpop.f32.mrf.mxu0
    %v2718 = vadd.f32 %v2621, %v2717
    %v2719 = vpop.f32.mrf.mxu0
    %v2720 = vadd.f32 %v2623, %v2719
    %2721 = vmatmul.bf16.gmra.mxu0 %v2377
    %v2722 = vpop.f32.mrf.mxu0
    %v2723 = vadd.f32 %v2626, %v2722
    %v2724 = vpop.f32.mrf.mxu0
    %v2725 = vadd.f32 %v2628, %v2724
    %2726 = vmatmul.bf16.gmra.mxu0 %v2381
    %v2727 = vpop.f32.mrf.mxu0
    %v2728 = vadd.f32 %v2631, %v2727
    %v2729 = vpop.f32.mrf.mxu0
    %v2730 = vadd.f32 %v2633, %v2729
    %2731 = vmatmul.bf16.gmra.mxu0 %v2385
    %v2732 = vpop.f32.mrf.mxu0
    %v2733 = vadd.f32 %v2636, %v2732
    %v2734 = vpop.f32.mrf.mxu0
    %v2735 = vadd.f32 %v2638, %v2734
    %2736 = vmatmul.bf16.gmra.mxu0 %v2389
    %v2737 = vpop.f32.mrf.mxu0
    %v2738 = vadd.f32 %v2641, %v2737
    %v2739 = vpop.f32.mrf.mxu0
    %v2740 = vadd.f32 %v2643, %v2739
    %2741 = vmatmul.bf16.gmra.mxu0 %v2393
    %v2742 = vpop.f32.mrf.mxu0
    %v2743 = vadd.f32 %v2646, %v2742
    %v2744 = vpop.f32.mrf.mxu0
    %v2745 = vadd.f32 %v2648, %v2744
    %2746 = vmatmul.bf16.gmra.mxu0 %v2397
    %v2747 = vpop.f32.mrf.mxu0
    %v2748 = vadd.f32 %v2651, %v2747
    %v2749 = vpop.f32.mrf.mxu0
    %v2750 = vadd.f32 %v2653, %v2749
    %2751 = vmatmul.bf16.gmra.mxu0 %v2401
    %v2752 = vpop.f32.mrf.mxu0
    %v2753 = vadd.f32 %v2656, %v2752
    %v2754 = vpop.f32.mrf.mxu0
    %v2755 = vadd.f32 %v2658, %v2754
    %2756 = vmatmul.bf16.gmra.mxu0 %v2405
    %v2757 = vpop.f32.mrf.mxu0
    %v2758 = vadd.f32 %v2661, %v2757
    %v2759 = vpop.f32.mrf.mxu0
    %v2760 = vadd.f32 %v2663, %v2759
    %2761 = vdwg.mxu0
    %2762 = vmatpush.msra.mxu0 %v855
    %2763 = vmatpush.msra.mxu0 %v853
    %2764 = vmatpush.msra.mxu0 %v851
    %2765 = vmatpush.msra.mxu0 %v849
    %2766 = vmatpush.msra.mxu0 %v847
    %2767 = vmatpush.msra.mxu0 %v845
    %2768 = vmatpush.msra.mxu0 %v843
    %2769 = vmatpush.msra.mxu0 %v841
    %2770 = vmatpush.msra.mxu0 %v839
    %2771 = vmatpush.msra.mxu0 %v837
    %2772 = vmatpush.msra.mxu0 %v835
    %2773 = vmatpush.msra.mxu0 %v833
    %2774 = vmatpush.msra.mxu0 %v831
    %2775 = vmatpush.msra.mxu0 %v829
    %2776 = vmatpush.msra.mxu0 %v827
    %2777 = vmatpush.msra.mxu0 %v825
    %2778 = vmatmul.bf16.gmra.mxu0 %v2346
    %v2779 = vpop.f32.mrf.mxu0
    %v2780 = vadd.f32 %v2683, %v2779
    %v2781 = vpop.f32.mrf.mxu0
    %v2782 = vadd.f32 %v2685, %v2781
    %2783 = vmatmul.bf16.gmra.mxu0 %v2350
    %v2784 = vpop.f32.mrf.mxu0
    %v2785 = vadd.f32 %v2688, %v2784
    %v2786 = vpop.f32.mrf.mxu0
    %v2787 = vadd.f32 %v2690, %v2786
    %2788 = vmatmul.bf16.gmra.mxu0 %v2354
    %v2789 = vpop.f32.mrf.mxu0
    %v2790 = vadd.f32 %v2693, %v2789
    %v2791 = vpop.f32.mrf.mxu0
    %v2792 = vadd.f32 %v2695, %v2791
    %2793 = vmatmul.bf16.gmra.mxu0 %v2358
    %v2794 = vpop.f32.mrf.mxu0
    %v2795 = vadd.f32 %v2698, %v2794
    %v2796 = vpop.f32.mrf.mxu0
    %v2797 = vadd.f32 %v2700, %v2796
    %2798 = vmatmul.bf16.gmra.mxu0 %v2362
    %v2799 = vpop.f32.mrf.mxu0
    %v2800 = vadd.f32 %v2703, %v2799
    %v2801 = vpop.f32.mrf.mxu0
    %v2802 = vadd.f32 %v2705, %v2801
    %2803 = vmatmul.bf16.gmra.mxu0 %v2366
    %v2804 = vpop.f32.mrf.mxu0
    %v2805 = vadd.f32 %v2708, %v2804
    %v2806 = vpop.f32.mrf.mxu0
    %v2807 = vadd.f32 %v2710, %v2806
    %2808 = vmatmul.bf16.gmra.mxu0 %v2370
    %v2809 = vpop.f32.mrf.mxu0
    %v2810 = vadd.f32 %v2713, %v2809
    %v2811 = vpop.f32.mrf.mxu0
    %v2812 = vadd.f32 %v2715, %v2811
    %2813 = vmatmul.bf16.gmra.mxu0 %v2374
    %v2814 = vpop.f32.mrf.mxu0
    %v2815 = vadd.f32 %v2718, %v2814
    %v2816 = vpop.f32.mrf.mxu0
    %v2817 = vadd.f32 %v2720, %v2816
    %2818 = vmatmul.bf16.gmra.mxu0 %v2378
    %v2819 = vpop.f32.mrf.mxu0
    %v2820 = vadd.f32 %v2723, %v2819
    %v2821 = vpop.f32.mrf.mxu0
    %v2822 = vadd.f32 %v2725, %v2821
    %2823 = vmatmul.bf16.gmra.mxu0 %v2382
    %v2824 = vpop.f32.mrf.mxu0
    %v2825 = vadd.f32 %v2728, %v2824
    %v2826 = vpop.f32.mrf.mxu0
    %v2827 = vadd.f32 %v2730, %v2826
    %2828 = vmatmul.bf16.gmra.mxu0 %v2386
    %v2829 = vpop.f32.mrf.mxu0
    %v2830 = vadd.f32 %v2733, %v2829
    %v2831 = vpop.f32.mrf.mxu0
    %v2832 = vadd.f32 %v2735, %v2831
    %2833 = vmatmul.bf16.gmra.mxu0 %v2390
    %v2834 = vpop.f32.mrf.mxu0
    %v2835 = vadd.f32 %v2738, %v2834
    %v2836 = vpop.f32.mrf.mxu0
    %v2837 = vadd.f32 %v2740, %v2836
    %2838 = vmatmul.bf16.gmra.mxu0 %v2394
    %v2839 = vpop.f32.mrf.mxu0
    %v2840 = vadd.f32 %v2743, %v2839
    %v2841 = vpop.f32.mrf.mxu0
    %v2842 = vadd.f32 %v2745, %v2841
    %2843 = vmatmul.bf16.gmra.mxu0 %v2398
    %v2844 = vpop.f32.mrf.mxu0
    %v2845 = vadd.f32 %v2748, %v2844
    %v2846 = vpop.f32.mrf.mxu0
    %v2847 = vadd.f32 %v2750, %v2846
    %2848 = vmatmul.bf16.gmra.mxu0 %v2402
    %v2849 = vpop.f32.mrf.mxu0
    %v2850 = vadd.f32 %v2753, %v2849
    %v2851 = vpop.f32.mrf.mxu0
    %v2852 = vadd.f32 %v2755, %v2851
    %2853 = vmatmul.bf16.gmra.mxu0 %v2406
    %v2854 = vpop.f32.mrf.mxu0
    %v2855 = vadd.f32 %v2758, %v2854
    %v2856 = vpop.f32.mrf.mxu0
    %v2857 = vadd.f32 %v2760, %v2856
    %2858 = vdwg.mxu0
    %2859 = vmatpush.msra.mxu0 %v760
    %2860 = vmatpush.msra.mxu0 %v758
    %2861 = vmatpush.msra.mxu0 %v756
    %2862 = vmatpush.msra.mxu0 %v754
    %2863 = vmatpush.msra.mxu0 %v752
    %2864 = vmatpush.msra.mxu0 %v750
    %2865 = vmatpush.msra.mxu0 %v748
    %2866 = vmatpush.msra.mxu0 %v746
    %2867 = vmatpush.msra.mxu0 %v744
    %2868 = vmatpush.msra.mxu0 %v742
    %2869 = vmatpush.msra.mxu0 %v740
    %2870 = vmatpush.msra.mxu0 %v738
    %2871 = vmatpush.msra.mxu0 %v736
    %2872 = vmatpush.msra.mxu0 %v734
    %2873 = vmatpush.msra.mxu0 %v732
    %2874 = vmatpush.msra.mxu0 %v730
    %2875 = vmatmul.bf16.gmra.mxu0 %v2343
    %v2876 = vpop.f32.mrf.mxu0
    %v2877 = vadd.f32 %v924, %v2876
    %v2878 = vpop.f32.mrf.mxu0
    %v2879 = vadd.f32 %v924, %v2878
    %2880 = vmatmul.bf16.gmra.mxu0 %v2347
    %v2881 = vpop.f32.mrf.mxu0
    %v2882 = vadd.f32 %v924, %v2881
    %v2883 = vpop.f32.mrf.mxu0
    %v2884 = vadd.f32 %v924, %v2883
    %2885 = vmatmul.bf16.gmra.mxu0 %v2351
    %v2886 = vpop.f32.mrf.mxu0
    %v2887 = vadd.f32 %v924, %v2886
    %v2888 = vpop.f32.mrf.mxu0
    %v2889 = vadd.f32 %v924, %v2888
    %2890 = vmatmul.bf16.gmra.mxu0 %v2355
    %v2891 = vpop.f32.mrf.mxu0
    %v2892 = vadd.f32 %v924, %v2891
    %v2893 = vpop.f32.mrf.mxu0
    %v2894 = vadd.f32 %v924, %v2893
    %2895 = vmatmul.bf16.gmra.mxu0 %v2359
    %v2896 = vpop.f32.mrf.mxu0
    %v2897 = vadd.f32 %v924, %v2896
    %v2898 = vpop.f32.mrf.mxu0
    %v2899 = vadd.f32 %v924, %v2898
    %2900 = vmatmul.bf16.gmra.mxu0 %v2363
    %v2901 = vpop.f32.mrf.mxu0
    %v2902 = vadd.f32 %v924, %v2901
    %v2903 = vpop.f32.mrf.mxu0
    %v2904 = vadd.f32 %v924, %v2903
    %2905 = vmatmul.bf16.gmra.mxu0 %v2367
    %v2906 = vpop.f32.mrf.mxu0
    %v2907 = vadd.f32 %v924, %v2906
    %v2908 = vpop.f32.mrf.mxu0
    %v2909 = vadd.f32 %v924, %v2908
    %2910 = vmatmul.bf16.gmra.mxu0 %v2371
    %v2911 = vpop.f32.mrf.mxu0
    %v2912 = vadd.f32 %v924, %v2911
    %v2913 = vpop.f32.mrf.mxu0
    %v2914 = vadd.f32 %v924, %v2913
    %2915 = vmatmul.bf16.gmra.mxu0 %v2375
    %v2916 = vpop.f32.mrf.mxu0
    %v2917 = vadd.f32 %v924, %v2916
    %v2918 = vpop.f32.mrf.mxu0
    %v2919 = vadd.f32 %v924, %v2918
    %2920 = vmatmul.bf16.gmra.mxu0 %v2379
    %v2921 = vpop.f32.mrf.mxu0
    %v2922 = vadd.f32 %v924, %v2921
    %v2923 = vpop.f32.mrf.mxu0
    %v2924 = vadd.f32 %v924, %v2923
    %2925 = vmatmul.bf16.gmra.mxu0 %v2383
    %v2926 = vpop.f32.mrf.mxu0
    %v2927 = vadd.f32 %v924, %v2926
    %v2928 = vpop.f32.mrf.mxu0
    %v2929 = vadd.f32 %v924, %v2928
    %2930 = vmatmul.bf16.gmra.mxu0 %v2387
    %v2931 = vpop.f32.mrf.mxu0
    %v2932 = vadd.f32 %v924, %v2931
    %v2933 = vpop.f32.mrf.mxu0
    %v2934 = vadd.f32 %v924, %v2933
    %2935 = vmatmul.bf16.gmra.mxu0 %v2391
    %v2936 = vpop.f32.mrf.mxu0
    %v2937 = vadd.f32 %v924, %v2936
    %v2938 = vpop.f32.mrf.mxu0
    %v2939 = vadd.f32 %v924, %v2938
    %2940 = vmatmul.bf16.gmra.mxu0 %v2395
    %v2941 = vpop.f32.mrf.mxu0
    %v2942 = vadd.f32 %v924, %v2941
    %v2943 = vpop.f32.mrf.mxu0
    %v2944 = vadd.f32 %v924, %v2943
    %2945 = vmatmul.bf16.gmra.mxu0 %v2399
    %v2946 = vpop.f32.mrf.mxu0
    %v2947 = vadd.f32 %v924, %v2946
    %v2948 = vpop.f32.mrf.mxu0
    %v2949 = vadd.f32 %v924, %v2948
    %2950 = vmatmul.bf16.gmra.mxu0 %v2403
    %v2951 = vpop.f32.mrf.mxu0
    %v2952 = vadd.f32 %v924, %v2951
    %v2953 = vpop.f32.mrf.mxu0
    %v2954 = vadd.f32 %v924, %v2953
    %2955 = vdwg.mxu0
    %2956 = vmatpush.msra.mxu0 %v792
    %2957 = vmatpush.msra.mxu0 %v790
    %2958 = vmatpush.msra.mxu0 %v788
    %2959 = vmatpush.msra.mxu0 %v786
    %2960 = vmatpush.msra.mxu0 %v784
    %2961 = vmatpush.msra.mxu0 %v782
    %2962 = vmatpush.msra.mxu0 %v780
    %2963 = vmatpush.msra.mxu0 %v778
    %2964 = vmatpush.msra.mxu0 %v776
    %2965 = vmatpush.msra.mxu0 %v774
    %2966 = vmatpush.msra.mxu0 %v772
    %2967 = vmatpush.msra.mxu0 %v770
    %2968 = vmatpush.msra.mxu0 %v768
    %2969 = vmatpush.msra.mxu0 %v766
    %2970 = vmatpush.msra.mxu0 %v764
    %2971 = vmatpush.msra.mxu0 %v762
    %2972 = vmatmul.bf16.gmra.mxu0 %v2344
    %v2973 = vpop.f32.mrf.mxu0
    %v2974 = vadd.f32 %v2877, %v2973
    %v2975 = vpop.f32.mrf.mxu0
    %v2976 = vadd.f32 %v2879, %v2975
    %2977 = vmatmul.bf16.gmra.mxu0 %v2348
    %v2978 = vpop.f32.mrf.mxu0
    %v2979 = vadd.f32 %v2882, %v2978
    %v2980 = vpop.f32.mrf.mxu0
    %v2981 = vadd.f32 %v2884, %v2980
    %2982 = vmatmul.bf16.gmra.mxu0 %v2352
    %v2983 = vpop.f32.mrf.mxu0
    %v2984 = vadd.f32 %v2887, %v2983
    %v2985 = vpop.f32.mrf.mxu0
    %v2986 = vadd.f32 %v2889, %v2985
    %2987 = vmatmul.bf16.gmra.mxu0 %v2356
    %v2988 = vpop.f32.mrf.mxu0
    %v2989 = vadd.f32 %v2892, %v2988
    %v2990 = vpop.f32.mrf.mxu0
    %v2991 = vadd.f32 %v2894, %v2990
    %2992 = vmatmul.bf16.gmra.mxu0 %v2360
    %v2993 = vpop.f32.mrf.mxu0
    %v2994 = vadd.f32 %v2897, %v2993
    %v2995 = vpop.f32.mrf.mxu0
    %v2996 = vadd.f32 %v2899, %v2995
    %2997 = vmatmul.bf16.gmra.mxu0 %v2364
    %v2998 = vpop.f32.mrf.mxu0
    %v2999 = vadd.f32 %v2902, %v2998
    %v3000 = vpop.f32.mrf.mxu0
    %v3001 = vadd.f32 %v2904, %v3000
    %3002 = vmatmul.bf16.gmra.mxu0 %v2368
    %v3003 = vpop.f32.mrf.mxu0
    %v3004 = vadd.f32 %v2907, %v3003
    %v3005 = vpop.f32.mrf.mxu0
    %v3006 = vadd.f32 %v2909, %v3005
    %3007 = vmatmul.bf16.gmra.mxu0 %v2372
    %v3008 = vpop.f32.mrf.mxu0
    %v3009 = vadd.f32 %v2912, %v3008
    %v3010 = vpop.f32.mrf.mxu0
    %v3011 = vadd.f32 %v2914, %v3010
    %3012 = vmatmul.bf16.gmra.mxu0 %v2376
    %v3013 = vpop.f32.mrf.mxu0
    %v3014 = vadd.f32 %v2917, %v3013
    %v3015 = vpop.f32.mrf.mxu0
    %v3016 = vadd.f32 %v2919, %v3015
    %3017 = vmatmul.bf16.gmra.mxu0 %v2380
    %v3018 = vpop.f32.mrf.mxu0
    %v3019 = vadd.f32 %v2922, %v3018
    %v3020 = vpop.f32.mrf.mxu0
    %v3021 = vadd.f32 %v2924, %v3020
    %3022 = vmatmul.bf16.gmra.mxu0 %v2384
    %v3023 = vpop.f32.mrf.mxu0
    %v3024 = vadd.f32 %v2927, %v3023
    %v3025 = vpop.f32.mrf.mxu0
    %v3026 = vadd.f32 %v2929, %v3025
    %3027 = vmatmul.bf16.gmra.mxu0 %v2388
    %v3028 = vpop.f32.mrf.mxu0
    %v3029 = vadd.f32 %v2932, %v3028
    %v3030 = vpop.f32.mrf.mxu0
    %v3031 = vadd.f32 %v2934, %v3030
    %3032 = vmatmul.bf16.gmra.mxu0 %v2392
    %v3033 = vpop.f32.mrf.mxu0
    %v3034 = vadd.f32 %v2937, %v3033
    %v3035 = vpop.f32.mrf.mxu0
    %v3036 = vadd.f32 %v2939, %v3035
    %3037 = vmatmul.bf16.gmra.mxu0 %v2396
    %v3038 = vpop.f32.mrf.mxu0
    %v3039 = vadd.f32 %v2942, %v3038
    %v3040 = vpop.f32.mrf.mxu0
    %v3041 = vadd.f32 %v2944, %v3040
    %3042 = vmatmul.bf16.gmra.mxu0 %v2400
    %v3043 = vpop.f32.mrf.mxu0
    %v3044 = vadd.f32 %v2947, %v3043
    %v3045 = vpop.f32.mrf.mxu0
    %v3046 = vadd.f32 %v2949, %v3045
    %3047 = vmatmul.bf16.gmra.mxu0 %v2404
    %v3048 = vpop.f32.mrf.mxu0
    %v3049 = vadd.f32 %v2952, %v3048
    %v3050 = vpop.f32.mrf.mxu0
    %v3051 = vadd.f32 %v2954, %v3050
    %3052 = vdwg.mxu0
    %3053 = vmatpush.msra.mxu0 %v824
    %3054 = vmatpush.msra.mxu0 %v822
    %3055 = vmatpush.msra.mxu0 %v820
    %3056 = vmatpush.msra.mxu0 %v818
    %3057 = vmatpush.msra.mxu0 %v816
    %3058 = vmatpush.msra.mxu0 %v814
    %3059 = vmatpush.msra.mxu0 %v812
    %3060 = vmatpush.msra.mxu0 %v810
    %3061 = vmatpush.msra.mxu0 %v808
    %3062 = vmatpush.msra.mxu0 %v806
    %3063 = vmatpush.msra.mxu0 %v804
    %3064 = vmatpush.msra.mxu0 %v802
    %3065 = vmatpush.msra.mxu0 %v800
    %3066 = vmatpush.msra.mxu0 %v798
    %3067 = vmatpush.msra.mxu0 %v796
    %3068 = vmatpush.msra.mxu0 %v794
    %3069 = vmatmul.bf16.gmra.mxu0 %v2345
    %v3070 = vpop.f32.mrf.mxu0
    %v3071 = vadd.f32 %v2974, %v3070
    %v3072 = vpop.f32.mrf.mxu0
    %v3073 = vadd.f32 %v2976, %v3072
    %3074 = vmatmul.bf16.gmra.mxu0 %v2349
    %v3075 = vpop.f32.mrf.mxu0
    %v3076 = vadd.f32 %v2979, %v3075
    %v3077 = vpop.f32.mrf.mxu0
    %v3078 = vadd.f32 %v2981, %v3077
    %3079 = vmatmul.bf16.gmra.mxu0 %v2353
    %v3080 = vpop.f32.mrf.mxu0
    %v3081 = vadd.f32 %v2984, %v3080
    %v3082 = vpop.f32.mrf.mxu0
    %v3083 = vadd.f32 %v2986, %v3082
    %3084 = vmatmul.bf16.gmra.mxu0 %v2357
    %v3085 = vpop.f32.mrf.mxu0
    %v3086 = vadd.f32 %v2989, %v3085
    %v3087 = vpop.f32.mrf.mxu0
    %v3088 = vadd.f32 %v2991, %v3087
    %3089 = vmatmul.bf16.gmra.mxu0 %v2361
    %v3090 = vpop.f32.mrf.mxu0
    %v3091 = vadd.f32 %v2994, %v3090
    %v3092 = vpop.f32.mrf.mxu0
    %v3093 = vadd.f32 %v2996, %v3092
    %3094 = vmatmul.bf16.gmra.mxu0 %v2365
    %v3095 = vpop.f32.mrf.mxu0
    %v3096 = vadd.f32 %v2999, %v3095
    %v3097 = vpop.f32.mrf.mxu0
    %v3098 = vadd.f32 %v3001, %v3097
    %3099 = vmatmul.bf16.gmra.mxu0 %v2369
    %v3100 = vpop.f32.mrf.mxu0
    %v3101 = vadd.f32 %v3004, %v3100
    %v3102 = vpop.f32.mrf.mxu0
    %v3103 = vadd.f32 %v3006, %v3102
    %3104 = vmatmul.bf16.gmra.mxu0 %v2373
    %v3105 = vpop.f32.mrf.mxu0
    %v3106 = vadd.f32 %v3009, %v3105
    %v3107 = vpop.f32.mrf.mxu0
    %v3108 = vadd.f32 %v3011, %v3107
    %3109 = vmatmul.bf16.gmra.mxu0 %v2377
    %v3110 = vpop.f32.mrf.mxu0
    %v3111 = vadd.f32 %v3014, %v3110
    %v3112 = vpop.f32.mrf.mxu0
    %v3113 = vadd.f32 %v3016, %v3112
    %3114 = vmatmul.bf16.gmra.mxu0 %v2381
    %v3115 = vpop.f32.mrf.mxu0
    %v3116 = vadd.f32 %v3019, %v3115
    %v3117 = vpop.f32.mrf.mxu0
    %v3118 = vadd.f32 %v3021, %v3117
    %3119 = vmatmul.bf16.gmra.mxu0 %v2385
    %v3120 = vpop.f32.mrf.mxu0
    %v3121 = vadd.f32 %v3024, %v3120
    %v3122 = vpop.f32.mrf.mxu0
    %v3123 = vadd.f32 %v3026, %v3122
    %3124 = vmatmul.bf16.gmra.mxu0 %v2389
    %v3125 = vpop.f32.mrf.mxu0
    %v3126 = vadd.f32 %v3029, %v3125
    %v3127 = vpop.f32.mrf.mxu0
    %v3128 = vadd.f32 %v3031, %v3127
    %3129 = vmatmul.bf16.gmra.mxu0 %v2393
    %v3130 = vpop.f32.mrf.mxu0
    %v3131 = vadd.f32 %v3034, %v3130
    %v3132 = vpop.f32.mrf.mxu0
    %v3133 = vadd.f32 %v3036, %v3132
    %3134 = vmatmul.bf16.gmra.mxu0 %v2397
    %v3135 = vpop.f32.mrf.mxu0
    %v3136 = vadd.f32 %v3039, %v3135
    %v3137 = vpop.f32.mrf.mxu0
    %v3138 = vadd.f32 %v3041, %v3137
    %3139 = vmatmul.bf16.gmra.mxu0 %v2401
    %v3140 = vpop.f32.mrf.mxu0
    %v3141 = vadd.f32 %v3044, %v3140
    %v3142 = vpop.f32.mrf.mxu0
    %v3143 = vadd.f32 %v3046, %v3142
    %3144 = vmatmul.bf16.gmra.mxu0 %v2405
    %v3145 = vpop.f32.mrf.mxu0
    %v3146 = vadd.f32 %v3049, %v3145
    %v3147 = vpop.f32.mrf.mxu0
    %v3148 = vadd.f32 %v3051, %v3147
    %3149 = vdwg.mxu0
    %3150 = vmatpush.msra.mxu0 %v856
    %3151 = vmatpush.msra.mxu0 %v854
    %3152 = vmatpush.msra.mxu0 %v852
    %3153 = vmatpush.msra.mxu0 %v850
    %3154 = vmatpush.msra.mxu0 %v848
    %3155 = vmatpush.msra.mxu0 %v846
    %3156 = vmatpush.msra.mxu0 %v844
    %3157 = vmatpush.msra.mxu0 %v842
    %3158 = vmatpush.msra.mxu0 %v840
    %3159 = vmatpush.msra.mxu0 %v838
    %3160 = vmatpush.msra.mxu0 %v836
    %3161 = vmatpush.msra.mxu0 %v834
    %3162 = vmatpush.msra.mxu0 %v832
    %3163 = vmatpush.msra.mxu0 %v830
    %3164 = vmatpush.msra.mxu0 %v828
    %3165 = vmatpush.msra.mxu0 %v826
    %3166 = vmatmul.bf16.gmra.mxu0 %v2346
    %v3167 = vpop.f32.mrf.mxu0
    %v3168 = vadd.f32 %v3071, %v3167
    %v3169 = vpop.f32.mrf.mxu0
    %v3170 = vadd.f32 %v3073, %v3169
    %3171 = vmatmul.bf16.gmra.mxu0 %v2350
    %v3172 = vpop.f32.mrf.mxu0
    %v3173 = vadd.f32 %v3076, %v3172
    %v3174 = vpop.f32.mrf.mxu0
    %v3175 = vadd.f32 %v3078, %v3174
    %3176 = vmatmul.bf16.gmra.mxu0 %v2354
    %v3177 = vpop.f32.mrf.mxu0
    %v3178 = vadd.f32 %v3081, %v3177
    %v3179 = vpop.f32.mrf.mxu0
    %v3180 = vadd.f32 %v3083, %v3179
    %3181 = vmatmul.bf16.gmra.mxu0 %v2358
    %v3182 = vpop.f32.mrf.mxu0
    %v3183 = vadd.f32 %v3086, %v3182
    %v3184 = vpop.f32.mrf.mxu0
    %v3185 = vadd.f32 %v3088, %v3184
    %3186 = vmatmul.bf16.gmra.mxu0 %v2362
    %v3187 = vpop.f32.mrf.mxu0
    %v3188 = vadd.f32 %v3091, %v3187
    %v3189 = vpop.f32.mrf.mxu0
    %v3190 = vadd.f32 %v3093, %v3189
    %3191 = vmatmul.bf16.gmra.mxu0 %v2366
    %v3192 = vpop.f32.mrf.mxu0
    %v3193 = vadd.f32 %v3096, %v3192
    %v3194 = vpop.f32.mrf.mxu0
    %v3195 = vadd.f32 %v3098, %v3194
    %3196 = vmatmul.bf16.gmra.mxu0 %v2370
    %v3197 = vpop.f32.mrf.mxu0
    %v3198 = vadd.f32 %v3101, %v3197
    %v3199 = vpop.f32.mrf.mxu0
    %v3200 = vadd.f32 %v3103, %v3199
    %3201 = vmatmul.bf16.gmra.mxu0 %v2374
    %v3202 = vpop.f32.mrf.mxu0
    %v3203 = vadd.f32 %v3106, %v3202
    %v3204 = vpop.f32.mrf.mxu0
    %v3205 = vadd.f32 %v3108, %v3204
    %3206 = vmatmul.bf16.gmra.mxu0 %v2378
    %v3207 = vpop.f32.mrf.mxu0
    %v3208 = vadd.f32 %v3111, %v3207
    %v3209 = vpop.f32.mrf.mxu0
    %v3210 = vadd.f32 %v3113, %v3209
    %3211 = vmatmul.bf16.gmra.mxu0 %v2382
    %v3212 = vpop.f32.mrf.mxu0
    %v3213 = vadd.f32 %v3116, %v3212
    %v3214 = vpop.f32.mrf.mxu0
    %v3215 = vadd.f32 %v3118, %v3214
    %3216 = vmatmul.bf16.gmra.mxu0 %v2386
    %v3217 = vpop.f32.mrf.mxu0
    %v3218 = vadd.f32 %v3121, %v3217
    %v3219 = vpop.f32.mrf.mxu0
    %v3220 = vadd.f32 %v3123, %v3219
    %3221 = vmatmul.bf16.gmra.mxu0 %v2390
    %v3222 = vpop.f32.mrf.mxu0
    %v3223 = vadd.f32 %v3126, %v3222
    %v3224 = vpop.f32.mrf.mxu0
    %v3225 = vadd.f32 %v3128, %v3224
    %3226 = vmatmul.bf16.gmra.mxu0 %v2394
    %v3227 = vpop.f32.mrf.mxu0
    %v3228 = vadd.f32 %v3131, %v3227
    %v3229 = vpop.f32.mrf.mxu0
    %v3230 = vadd.f32 %v3133, %v3229
    %3231 = vmatmul.bf16.gmra.mxu0 %v2398
    %v3232 = vpop.f32.mrf.mxu0
    %v3233 = vadd.f32 %v3136, %v3232
    %v3234 = vpop.f32.mrf.mxu0
    %v3235 = vadd.f32 %v3138, %v3234
    %3236 = vmatmul.bf16.gmra.mxu0 %v2402
    %v3237 = vpop.f32.mrf.mxu0
    %v3238 = vadd.f32 %v3141, %v3237
    %v3239 = vpop.f32.mrf.mxu0
    %v3240 = vadd.f32 %v3143, %v3239
    %3241 = vmatmul.bf16.gmra.mxu0 %v2406
    %v3242 = vpop.f32.mrf.mxu0
    %v3243 = vadd.f32 %v3146, %v3242
    %v3244 = vpop.f32.mrf.mxu0
    %v3245 = vadd.f32 %v3148, %v3244
    %3246 = vdwg.mxu0
    %v3247 = vmax.f32 %v2780, 0.0
    %v3248 = vmax.f32 %v3168, 0.0
    %v3249 = vmax.f32 %v2782, 0.0
    %v3250 = vmax.f32 %v3170, 0.0
    %v3251 = vmax.f32 %v2785, 0.0
    %v3252 = vmax.f32 %v3173, 0.0
    %v3253 = vmax.f32 %v2787, 0.0
    %v3254 = vmax.f32 %v3175, 0.0
    %v3255 = vmax.f32 %v2790, 0.0
    %v3256 = vmax.f32 %v3178, 0.0
    %v3257 = vmax.f32 %v2792, 0.0
    %v3258 = vmax.f32 %v3180, 0.0
    %v3259 = vmax.f32 %v2795, 0.0
    %v3260 = vmax.f32 %v3183, 0.0
    %v3261 = vmax.f32 %v2797, 0.0
    %v3262 = vmax.f32 %v3185, 0.0
    %v3263 = vmax.f32 %v2800, 0.0
    %v3264 = vmax.f32 %v3188, 0.0
    %v3265 = vmax.f32 %v2802, 0.0
    %v3266 = vmax.f32 %v3190, 0.0
    %v3267 = vmax.f32 %v2805, 0.0
    %v3268 = vmax.f32 %v3193, 0.0
    %v3269 = vmax.f32 %v2807, 0.0
    %v3270 = vmax.f32 %v3195, 0.0
    %v3271 = vmax.f32 %v2810, 0.0
    %v3272 = vmax.f32 %v3198, 0.0
    %v3273 = vmax.f32 %v2812, 0.0
    %v3274 = vmax.f32 %v3200, 0.0
    %v3275 = vmax.f32 %v2815, 0.0
    %v3276 = vmax.f32 %v3203, 0.0
    %v3277 = vmax.f32 %v2817, 0.0
    %v3278 = vmax.f32 %v3205, 0.0
    %v3279 = vmax.f32 %v2820, 0.0
    %v3280 = vmax.f32 %v3208, 0.0
    %v3281 = vmax.f32 %v2822, 0.0
    %v3282 = vmax.f32 %v3210, 0.0
    %v3283 = vmax.f32 %v2825, 0.0
    %v3284 = vmax.f32 %v3213, 0.0
    %v3285 = vmax.f32 %v2827, 0.0
    %v3286 = vmax.f32 %v3215, 0.0
    %v3287 = vmax.f32 %v2830, 0.0
    %v3288 = vmax.f32 %v3218, 0.0
    %v3289 = vmax.f32 %v2832, 0.0
    %v3290 = vmax.f32 %v3220, 0.0
    %v3291 = vmax.f32 %v2835, 0.0
    %v3292 = vmax.f32 %v3223, 0.0
    %v3293 = vmax.f32 %v2837, 0.0
    %v3294 = vmax.f32 %v3225, 0.0
    %v3295 = vmax.f32 %v2840, 0.0
    %v3296 = vmax.f32 %v3228, 0.0
    %v3297 = vmax.f32 %v2842, 0.0
    %v3298 = vmax.f32 %v3230, 0.0
    %v3299 = vmax.f32 %v2845, 0.0
    %v3300 = vmax.f32 %v3233, 0.0
    %v3301 = vmax.f32 %v2847, 0.0
    %v3302 = vmax.f32 %v3235, 0.0
    %v3303 = vmax.f32 %v2850, 0.0
    %v3304 = vmax.f32 %v3238, 0.0
    %v3305 = vmax.f32 %v2852, 0.0
    %v3306 = vmax.f32 %v3240, 0.0
    %v3307 = vmax.f32 %v2855, 0.0
    %v3308 = vmax.f32 %v3243, 0.0
    %v3309 = vmax.f32 %v2857, 0.0
    %v3310 = vmax.f32 %v3245, 0.0
    %v3311 = vld [vmem:[%s5] sm:$0xff]
    %v3312 = vld [vmem:[%s5 + $0x8] sm:$0xff]
    %v3313 = vld [vmem:[%s5 + $0x10] sm:$0xff]
    %v3314 = vld [vmem:[%s5 + $0x18] sm:$0xff]
    %v3315 = vld [vmem:[%s5 + $0x20] sm:$0xff]
    %v3316 = vld [vmem:[%s5 + $0x28] sm:$0xff]
    %v3317 = vld [vmem:[%s5 + $0x30] sm:$0xff]
    %v3318 = vld [vmem:[%s5 + $0x38] sm:$0xff]
    %v3319 = vld [vmem:[%s5 + $0x40] sm:$0xff]
    %v3320 = vld [vmem:[%s5 + $0x48] sm:$0xff]
    %v3321 = vld [vmem:[%s5 + $0x50] sm:$0xff]
    %v3322 = vld [vmem:[%s5 + $0x58] sm:$0xff]
    %v3323 = vld [vmem:[%s5 + $0x60] sm:$0xff]
    %v3324 = vld [vmem:[%s5 + $0x68] sm:$0xff]
    %v3325 = vld [vmem:[%s5 + $0x70] sm:$0xff]
    %v3326 = vld [vmem:[%s5 + $0x78] sm:$0xff]
    %v3327 = vld [vmem:[%s5 + $0x80] sm:$0xff]
    %v3328 = vld [vmem:[%s5 + $0x88] sm:$0xff]
    %v3329 = vld [vmem:[%s5 + $0x90] sm:$0xff]
    %v3330 = vld [vmem:[%s5 + $0x98] sm:$0xff]
    %v3331 = vld [vmem:[%s5 + $0xa0] sm:$0xff]
    %v3332 = vld [vmem:[%s5 + $0xa8] sm:$0xff]
    %v3333 = vld [vmem:[%s5 + $0xb0] sm:$0xff]
    %v3334 = vld [vmem:[%s5 + $0xb8] sm:$0xff]
    %v3335 = vld [vmem:[%s5 + $0xc0] sm:$0xff]
    %v3336 = vld [vmem:[%s5 + $0xc8] sm:$0xff]
    %v3337 = vld [vmem:[%s5 + $0xd0] sm:$0xff]
    %v3338 = vld [vmem:[%s5 + $0xd8] sm:$0xff]
    %v3339 = vld [vmem:[%s5 + $0xe0] sm:$0xff]
    %v3340 = vld [vmem:[%s5 + $0xe8] sm:$0xff]
    %v3341 = vld [vmem:[%s5 + $0xf0] sm:$0xff]
    %v3342 = vld [vmem:[%s5 + $0xf8] sm:$0xff]
    %v3343 = vld [vmem:[%s6] sm:$0x1]
    %v3345 = vperm.slane %v3343, 0
    %3347 = vmatpush.msra.mxu0 %v3326
    %3348 = vmatpush.msra.mxu0 %v3325
    %3349 = vmatpush.msra.mxu0 %v3324
    %3350 = vmatpush.msra.mxu0 %v3323
    %3351 = vmatpush.msra.mxu0 %v3322
    %3352 = vmatpush.msra.mxu0 %v3321
    %3353 = vmatpush.msra.mxu0 %v3320
    %3354 = vmatpush.msra.mxu0 %v3319
    %3355 = vmatpush.msra.mxu0 %v3318
    %3356 = vmatpush.msra.mxu0 %v3317
    %3357 = vmatpush.msra.mxu0 %v3316
    %3358 = vmatpush.msra.mxu0 %v3315
    %3359 = vmatpush.msra.mxu0 %v3314
    %3360 = vmatpush.msra.mxu0 %v3313
    %3361 = vmatpush.msra.mxu0 %v3312
    %3362 = vmatpush.msra.mxu0 %v3311
    %3363 = vmatmul.f32.gmra.mxu0 %v2023
    %v3364 = vpop.f32.mrf.mxu0
    %v3365 = vadd.f32 %v3345, %v3364
    %3366 = vmatmul.f32.gmra.mxu0 %v2025
    %v3367 = vpop.f32.mrf.mxu0
    %v3368 = vadd.f32 %v3345, %v3367
    %3369 = vmatmul.f32.gmra.mxu0 %v2027
    %v3370 = vpop.f32.mrf.mxu0
    %v3371 = vadd.f32 %v3345, %v3370
    %3372 = vmatmul.f32.gmra.mxu0 %v2029
    %v3373 = vpop.f32.mrf.mxu0
    %v3374 = vadd.f32 %v3345, %v3373
    %3375 = vmatmul.f32.gmra.mxu0 %v2031
    %v3376 = vpop.f32.mrf.mxu0
    %v3377 = vadd.f32 %v3345, %v3376
    %3378 = vmatmul.f32.gmra.mxu0 %v2033
    %v3379 = vpop.f32.mrf.mxu0
    %v3380 = vadd.f32 %v3345, %v3379
    %3381 = vmatmul.f32.gmra.mxu0 %v2035
    %v3382 = vpop.f32.mrf.mxu0
    %v3383 = vadd.f32 %v3345, %v3382
    %3384 = vmatmul.f32.gmra.mxu0 %v2037
    %v3385 = vpop.f32.mrf.mxu0
    %v3386 = vadd.f32 %v3345, %v3385
    %3387 = vmatmul.f32.gmra.mxu0 %v2039
    %v3388 = vpop.f32.mrf.mxu0
    %v3389 = vadd.f32 %v3345, %v3388
    %3390 = vmatmul.f32.gmra.mxu0 %v2041
    %v3391 = vpop.f32.mrf.mxu0
    %v3392 = vadd.f32 %v3345, %v3391
    %3393 = vmatmul.f32.gmra.mxu0 %v2043
    %v3394 = vpop.f32.mrf.mxu0
    %v3395 = vadd.f32 %v3345, %v3394
    %3396 = vmatmul.f32.gmra.mxu0 %v2045
    %v3397 = vpop.f32.mrf.mxu0
    %v3398 = vadd.f32 %v3345, %v3397
    %3399 = vmatmul.f32.gmra.mxu0 %v2047
    %v3400 = vpop.f32.mrf.mxu0
    %v3401 = vadd.f32 %v3345, %v3400
    %3402 = vmatmul.f32.gmra.mxu0 %v2049
    %v3403 = vpop.f32.mrf.mxu0
    %v3404 = vadd.f32 %v3345, %v3403
    %3405 = vmatmul.f32.gmra.mxu0 %v2051
    %v3406 = vpop.f32.mrf.mxu0
    %v3407 = vadd.f32 %v3345, %v3406
    %3408 = vmatmul.f32.gmra.mxu0 %v2053
    %v3409 = vpop.f32.mrf.mxu0
    %v3410 = vadd.f32 %v3345, %v3409
    %3411 = vmatmul.f32.gmra.mxu0 %v2055
    %v3412 = vpop.f32.mrf.mxu0
    %v3413 = vadd.f32 %v3345, %v3412
    %3414 = vmatmul.f32.gmra.mxu0 %v2057
    %v3415 = vpop.f32.mrf.mxu0
    %v3416 = vadd.f32 %v3345, %v3415
    %3417 = vmatmul.f32.gmra.mxu0 %v2059
    %v3418 = vpop.f32.mrf.mxu0
    %v3419 = vadd.f32 %v3345, %v3418
    %3420 = vmatmul.f32.gmra.mxu0 %v2061
    %v3421 = vpop.f32.mrf.mxu0
    %v3422 = vadd.f32 %v3345, %v3421
    %3423 = vmatmul.f32.gmra.mxu0 %v2063
    %v3424 = vpop.f32.mrf.mxu0
    %v3425 = vadd.f32 %v3345, %v3424
    %3426 = vmatmul.f32.gmra.mxu0 %v2065
    %v3427 = vpop.f32.mrf.mxu0
    %v3428 = vadd.f32 %v3345, %v3427
    %3429 = vmatmul.f32.gmra.mxu0 %v2067
    %v3430 = vpop.f32.mrf.mxu0
    %v3431 = vadd.f32 %v3345, %v3430
    %3432 = vmatmul.f32.gmra.mxu0 %v2069
    %v3433 = vpop.f32.mrf.mxu0
    %v3434 = vadd.f32 %v3345, %v3433
    %3435 = vmatmul.f32.gmra.mxu0 %v2071
    %v3436 = vpop.f32.mrf.mxu0
    %v3437 = vadd.f32 %v3345, %v3436
    %3438 = vmatmul.f32.gmra.mxu0 %v2073
    %v3439 = vpop.f32.mrf.mxu0
    %v3440 = vadd.f32 %v3345, %v3439
    %3441 = vmatmul.f32.gmra.mxu0 %v2075
    %v3442 = vpop.f32.mrf.mxu0
    %v3443 = vadd.f32 %v3345, %v3442
    %3444 = vmatmul.f32.gmra.mxu0 %v2077
    %v3445 = vpop.f32.mrf.mxu0
    %v3446 = vadd.f32 %v3345, %v3445
    %3447 = vmatmul.f32.gmra.mxu0 %v2079
    %v3448 = vpop.f32.mrf.mxu0
    %v3449 = vadd.f32 %v3345, %v3448
    %3450 = vmatmul.f32.gmra.mxu0 %v2081
    %v3451 = vpop.f32.mrf.mxu0
    %v3452 = vadd.f32 %v3345, %v3451
    %3453 = vmatmul.f32.gmra.mxu0 %v2083
    %v3454 = vpop.f32.mrf.mxu0
    %v3455 = vadd.f32 %v3345, %v3454
    %3456 = vmatmul.f32.gmra.mxu0 %v2085
    %v3457 = vpop.f32.mrf.mxu0
    %v3458 = vadd.f32 %v3345, %v3457
    %3459 = vdwg.mxu0
    %3460 = vmatpush.msra.mxu0 %v3342
    %3461 = vmatpush.msra.mxu0 %v3341
    %3462 = vmatpush.msra.mxu0 %v3340
    %3463 = vmatpush.msra.mxu0 %v3339
    %3464 = vmatpush.msra.mxu0 %v3338
    %3465 = vmatpush.msra.mxu0 %v3337
    %3466 = vmatpush.msra.mxu0 %v3336
    %3467 = vmatpush.msra.mxu0 %v3335
    %3468 = vmatpush.msra.mxu0 %v3334
    %3469 = vmatpush.msra.mxu0 %v3333
    %3470 = vmatpush.msra.mxu0 %v3332
    %3471 = vmatpush.msra.mxu0 %v3331
    %3472 = vmatpush.msra.mxu0 %v3330
    %3473 = vmatpush.msra.mxu0 %v3329
    %3474 = vmatpush.msra.mxu0 %v3328
    %3475 = vmatpush.msra.mxu0 %v3327
    %3476 = vmatmul.f32.gmra.mxu0 %v3247
    %v3477 = vpop.f32.mrf.mxu0
    %v3478 = vadd.f32 %v3365, %v3477
    %3479 = vmatmul.f32.gmra.mxu0 %v3249
    %v3480 = vpop.f32.mrf.mxu0
    %v3481 = vadd.f32 %v3368, %v3480
    %3482 = vmatmul.f32.gmra.mxu0 %v3251
    %v3483 = vpop.f32.mrf.mxu0
    %v3484 = vadd.f32 %v3371, %v3483
    %3485 = vmatmul.f32.gmra.mxu0 %v3253
    %v3486 = vpop.f32.mrf.mxu0
    %v3487 = vadd.f32 %v3374, %v3486
    %3488 = vmatmul.f32.gmra.mxu0 %v3255
    %v3489 = vpop.f32.mrf.mxu0
    %v3490 = vadd.f32 %v3377, %v3489
    %3491 = vmatmul.f32.gmra.mxu0 %v3257
    %v3492 = vpop.f32.mrf.mxu0
    %v3493 = vadd.f32 %v3380, %v3492
    %3494 = vmatmul.f32.gmra.mxu0 %v3259
    %v3495 = vpop.f32.mrf.mxu0
    %v3496 = vadd.f32 %v3383, %v3495
    %3497 = vmatmul.f32.gmra.mxu0 %v3261
    %v3498 = vpop.f32.mrf.mxu0
    %v3499 = vadd.f32 %v3386, %v3498
    %3500 = vmatmul.f32.gmra.mxu0 %v3263
    %v3501 = vpop.f32.mrf.mxu0
    %v3502 = vadd.f32 %v3389, %v3501
    %3503 = vmatmul.f32.gmra.mxu0 %v3265
    %v3504 = vpop.f32.mrf.mxu0
    %v3505 = vadd.f32 %v3392, %v3504
    %3506 = vmatmul.f32.gmra.mxu0 %v3267
    %v3507 = vpop.f32.mrf.mxu0
    %v3508 = vadd.f32 %v3395, %v3507
    %3509 = vmatmul.f32.gmra.mxu0 %v3269
    %v3510 = vpop.f32.mrf.mxu0
    %v3511 = vadd.f32 %v3398, %v3510
    %3512 = vmatmul.f32.gmra.mxu0 %v3271
    %v3513 = vpop.f32.mrf.mxu0
    %v3514 = vadd.f32 %v3401, %v3513
    %3515 = vmatmul.f32.gmra.mxu0 %v3273
    %v3516 = vpop.f32.mrf.mxu0
    %v3517 = vadd.f32 %v3404, %v3516
    %3518 = vmatmul.f32.gmra.mxu0 %v3275
    %v3519 = vpop.f32.mrf.mxu0
    %v3520 = vadd.f32 %v3407, %v3519
    %3521 = vmatmul.f32.gmra.mxu0 %v3277
    %v3522 = vpop.f32.mrf.mxu0
    %v3523 = vadd.f32 %v3410, %v3522
    %3524 = vmatmul.f32.gmra.mxu0 %v3279
    %v3525 = vpop.f32.mrf.mxu0
    %v3526 = vadd.f32 %v3413, %v3525
    %3527 = vmatmul.f32.gmra.mxu0 %v3281
    %v3528 = vpop.f32.mrf.mxu0
    %v3529 = vadd.f32 %v3416, %v3528
    %3530 = vmatmul.f32.gmra.mxu0 %v3283
    %v3531 = vpop.f32.mrf.mxu0
    %v3532 = vadd.f32 %v3419, %v3531
    %3533 = vmatmul.f32.gmra.mxu0 %v3285
    %v3534 = vpop.f32.mrf.mxu0
    %v3535 = vadd.f32 %v3422, %v3534
    %3536 = vmatmul.f32.gmra.mxu0 %v3287
    %v3537 = vpop.f32.mrf.mxu0
    %v3538 = vadd.f32 %v3425, %v3537
    %3539 = vmatmul.f32.gmra.mxu0 %v3289
    %v3540 = vpop.f32.mrf.mxu0
    %v3541 = vadd.f32 %v3428, %v3540
    %3542 = vmatmul.f32.gmra.mxu0 %v3291
    %v3543 = vpop.f32.mrf.mxu0
    %v3544 = vadd.f32 %v3431, %v3543
    %3545 = vmatmul.f32.gmra.mxu0 %v3293
    %v3546 = vpop.f32.mrf.mxu0
    %v3547 = vadd.f32 %v3434, %v3546
    %3548 = vmatmul.f32.gmra.mxu0 %v3295
    %v3549 = vpop.f32.mrf.mxu0
    %v3550 = vadd.f32 %v3437, %v3549
    %3551 = vmatmul.f32.gmra.mxu0 %v3297
    %v3552 = vpop.f32.mrf.mxu0
    %v3553 = vadd.f32 %v3440, %v3552
    %3554 = vmatmul.f32.gmra.mxu0 %v3299
    %v3555 = vpop.f32.mrf.mxu0
    %v3556 = vadd.f32 %v3443, %v3555
    %3557 = vmatmul.f32.gmra.mxu0 %v3301
    %v3558 = vpop.f32.mrf.mxu0
    %v3559 = vadd.f32 %v3446, %v3558
    %3560 = vmatmul.f32.gmra.mxu0 %v3303
    %v3561 = vpop.f32.mrf.mxu0
    %v3562 = vadd.f32 %v3449, %v3561
    %3563 = vmatmul.f32.gmra.mxu0 %v3305
    %v3564 = vpop.f32.mrf.mxu0
    %v3565 = vadd.f32 %v3452, %v3564
    %3566 = vmatmul.f32.gmra.mxu0 %v3307
    %v3567 = vpop.f32.mrf.mxu0
    %v3568 = vadd.f32 %v3455, %v3567
    %3569 = vmatmul.f32.gmra.mxu0 %v3309
    %v3570 = vpop.f32.mrf.mxu0
    %v3571 = vadd.f32 %v3458, %v3570
    %3572 = vdwg.mxu0
    %v3573 = vmax.f32 %v3478, 0.0
    %v3574 = vmax.f32 %v3481, 0.0
    %v3575 = vmax.f32 %v3484, 0.0
    %v3576 = vmax.f32 %v3487, 0.0
    %v3577 = vmax.f32 %v3490, 0.0
    %v3578 = vmax.f32 %v3493, 0.0
    %v3579 = vmax.f32 %v3496, 0.0
    %v3580 = vmax.f32 %v3499, 0.0
    %v3581 = vmax.f32 %v3502, 0.0
    %v3582 = vmax.f32 %v3505, 0.0
    %v3583 = vmax.f32 %v3508, 0.0
    %v3584 = vmax.f32 %v3511, 0.0
    %v3585 = vmax.f32 %v3514, 0.0
    %v3586 = vmax.f32 %v3517, 0.0
    %v3587 = vmax.f32 %v3520, 0.0
    %v3588 = vmax.f32 %v3523, 0.0
    %v3589 = vmax.f32 %v3526, 0.0
    %v3590 = vmax.f32 %v3529, 0.0
    %v3591 = vmax.f32 %v3532, 0.0
    %v3592 = vmax.f32 %v3535, 0.0
    %v3593 = vmax.f32 %v3538, 0.0
    %v3594 = vmax.f32 %v3541, 0.0
    %v3595 = vmax.f32 %v3544, 0.0
    %v3596 = vmax.f32 %v3547, 0.0
    %v3597 = vmax.f32 %v3550, 0.0
    %v3598 = vmax.f32 %v3553, 0.0
    %v3599 = vmax.f32 %v3556, 0.0
    %v3600 = vmax.f32 %v3559, 0.0
    %v3601 = vmax.f32 %v3562, 0.0
    %v3602 = vmax.f32 %v3565, 0.0
    %v3603 = vmax.f32 %v3568, 0.0
    %v3604 = vmax.f32 %v3571, 0.0
    %3605 = vmatpush.msra.mxu0 %v3326
    %3606 = vmatpush.msra.mxu0 %v3325
    %3607 = vmatpush.msra.mxu0 %v3324
    %3608 = vmatpush.msra.mxu0 %v3323
    %3609 = vmatpush.msra.mxu0 %v3322
    %3610 = vmatpush.msra.mxu0 %v3321
    %3611 = vmatpush.msra.mxu0 %v3320
    %3612 = vmatpush.msra.mxu0 %v3319
    %3613 = vmatpush.msra.mxu0 %v3318
    %3614 = vmatpush.msra.mxu0 %v3317
    %3615 = vmatpush.msra.mxu0 %v3316
    %3616 = vmatpush.msra.mxu0 %v3315
    %3617 = vmatpush.msra.mxu0 %v3314
    %3618 = vmatpush.msra.mxu0 %v3313
    %3619 = vmatpush.msra.mxu0 %v3312
    %3620 = vmatpush.msra.mxu0 %v3311
    %3621 = vmatmul.f32.gmra.mxu0 %v2024
    %v3622 = vpop.f32.mrf.mxu0
    %v3623 = vadd.f32 %v3345, %v3622
    %3624 = vmatmul.f32.gmra.mxu0 %v2026
    %v3625 = vpop.f32.mrf.mxu0
    %v3626 = vadd.f32 %v3345, %v3625
    %3627 = vmatmul.f32.gmra.mxu0 %v2028
    %v3628 = vpop.f32.mrf.mxu0
    %v3629 = vadd.f32 %v3345, %v3628
    %3630 = vmatmul.f32.gmra.mxu0 %v2030
    %v3631 = vpop.f32.mrf.mxu0
    %v3632 = vadd.f32 %v3345, %v3631
    %3633 = vmatmul.f32.gmra.mxu0 %v2032
    %v3634 = vpop.f32.mrf.mxu0
    %v3635 = vadd.f32 %v3345, %v3634
    %3636 = vmatmul.f32.gmra.mxu0 %v2034
    %v3637 = vpop.f32.mrf.mxu0
    %v3638 = vadd.f32 %v3345, %v3637
    %3639 = vmatmul.f32.gmra.mxu0 %v2036
    %v3640 = vpop.f32.mrf.mxu0
    %v3641 = vadd.f32 %v3345, %v3640
    %3642 = vmatmul.f32.gmra.mxu0 %v2038
    %v3643 = vpop.f32.mrf.mxu0
    %v3644 = vadd.f32 %v3345, %v3643
    %3645 = vmatmul.f32.gmra.mxu0 %v2040
    %v3646 = vpop.f32.mrf.mxu0
    %v3647 = vadd.f32 %v3345, %v3646
    %3648 = vmatmul.f32.gmra.mxu0 %v2042
    %v3649 = vpop.f32.mrf.mxu0
    %v3650 = vadd.f32 %v3345, %v3649
    %3651 = vmatmul.f32.gmra.mxu0 %v2044
    %v3652 = vpop.f32.mrf.mxu0
    %v3653 = vadd.f32 %v3345, %v3652
    %3654 = vmatmul.f32.gmra.mxu0 %v2046
    %v3655 = vpop.f32.mrf.mxu0
    %v3656 = vadd.f32 %v3345, %v3655
    %3657 = vmatmul.f32.gmra.mxu0 %v2048
    %v3658 = vpop.f32.mrf.mxu0
    %v3659 = vadd.f32 %v3345, %v3658
    %3660 = vmatmul.f32.gmra.mxu0 %v2050
    %v3661 = vpop.f32.mrf.mxu0
    %v3662 = vadd.f32 %v3345, %v3661
    %3663 = vmatmul.f32.gmra.mxu0 %v2052
    %v3664 = vpop.f32.mrf.mxu0
    %v3665 = vadd.f32 %v3345, %v3664
    %3666 = vmatmul.f32.gmra.mxu0 %v2054
    %v3667 = vpop.f32.mrf.mxu0
    %v3668 = vadd.f32 %v3345, %v3667
    %3669 = vmatmul.f32.gmra.mxu0 %v2056
    %v3670 = vpop.f32.mrf.mxu0
    %v3671 = vadd.f32 %v3345, %v3670
    %3672 = vmatmul.f32.gmra.mxu0 %v2058
    %v3673 = vpop.f32.mrf.mxu0
    %v3674 = vadd.f32 %v3345, %v3673
    %3675 = vmatmul.f32.gmra.mxu0 %v2060
    %v3676 = vpop.f32.mrf.mxu0
    %v3677 = vadd.f32 %v3345, %v3676
    %3678 = vmatmul.f32.gmra.mxu0 %v2062
    %v3679 = vpop.f32.mrf.mxu0
    %v3680 = vadd.f32 %v3345, %v3679
    %3681 = vmatmul.f32.gmra.mxu0 %v2064
    %v3682 = vpop.f32.mrf.mxu0
    %v3683 = vadd.f32 %v3345, %v3682
    %3684 = vmatmul.f32.gmra.mxu0 %v2066
    %v3685 = vpop.f32.mrf.mxu0
    %v3686 = vadd.f32 %v3345, %v3685
    %3687 = vmatmul.f32.gmra.mxu0 %v2068
    %v3688 = vpop.f32.mrf.mxu0
    %v3689 = vadd.f32 %v3345, %v3688
    %3690 = vmatmul.f32.gmra.mxu0 %v2070
    %v3691 = vpop.f32.mrf.mxu0
    %v3692 = vadd.f32 %v3345, %v3691
    %3693 = vmatmul.f32.gmra.mxu0 %v2072
    %v3694 = vpop.f32.mrf.mxu0
    %v3695 = vadd.f32 %v3345, %v3694
    %3696 = vmatmul.f32.gmra.mxu0 %v2074
    %v3697 = vpop.f32.mrf.mxu0
    %v3698 = vadd.f32 %v3345, %v3697
    %3699 = vmatmul.f32.gmra.mxu0 %v2076
    %v3700 = vpop.f32.mrf.mxu0
    %v3701 = vadd.f32 %v3345, %v3700
    %3702 = vmatmul.f32.gmra.mxu0 %v2078
    %v3703 = vpop.f32.mrf.mxu0
    %v3704 = vadd.f32 %v3345, %v3703
    %3705 = vmatmul.f32.gmra.mxu0 %v2080
    %v3706 = vpop.f32.mrf.mxu0
    %v3707 = vadd.f32 %v3345, %v3706
    %3708 = vmatmul.f32.gmra.mxu0 %v2082
    %v3709 = vpop.f32.mrf.mxu0
    %v3710 = vadd.f32 %v3345, %v3709
    %3711 = vmatmul.f32.gmra.mxu0 %v2084
    %v3712 = vpop.f32.mrf.mxu0
    %v3713 = vadd.f32 %v3345, %v3712
    %3714 = vmatmul.f32.gmra.mxu0 %v2086
    %v3715 = vpop.f32.mrf.mxu0
    %v3716 = vadd.f32 %v3345, %v3715
    %3717 = vdwg.mxu0
    %3718 = vmatpush.msra.mxu0 %v3342
    %3719 = vmatpush.msra.mxu0 %v3341
    %3720 = vmatpush.msra.mxu0 %v3340
    %3721 = vmatpush.msra.mxu0 %v3339
    %3722 = vmatpush.msra.mxu0 %v3338
    %3723 = vmatpush.msra.mxu0 %v3337
    %3724 = vmatpush.msra.mxu0 %v3336
    %3725 = vmatpush.msra.mxu0 %v3335
    %3726 = vmatpush.msra.mxu0 %v3334
    %3727 = vmatpush.msra.mxu0 %v3333
    %3728 = vmatpush.msra.mxu0 %v3332
    %3729 = vmatpush.msra.mxu0 %v3331
    %3730 = vmatpush.msra.mxu0 %v3330
    %3731 = vmatpush.msra.mxu0 %v3329
    %3732 = vmatpush.msra.mxu0 %v3328
    %3733 = vmatpush.msra.mxu0 %v3327
    %3734 = vmatmul.f32.gmra.mxu0 %v3248
    %v3735 = vpop.f32.mrf.mxu0
    %v3736 = vadd.f32 %v3623, %v3735
    %3737 = vmatmul.f32.gmra.mxu0 %v3250
    %v3738 = vpop.f32.mrf.mxu0
    %v3739 = vadd.f32 %v3626, %v3738
    %3740 = vmatmul.f32.gmra.mxu0 %v3252
    %v3741 = vpop.f32.mrf.mxu0
    %v3742 = vadd.f32 %v3629, %v3741
    %3743 = vmatmul.f32.gmra.mxu0 %v3254
    %v3744 = vpop.f32.mrf.mxu0
    %v3745 = vadd.f32 %v3632, %v3744
    %3746 = vmatmul.f32.gmra.mxu0 %v3256
    %v3747 = vpop.f32.mrf.mxu0
    %v3748 = vadd.f32 %v3635, %v3747
    %3749 = vmatmul.f32.gmra.mxu0 %v3258
    %v3750 = vpop.f32.mrf.mxu0
    %v3751 = vadd.f32 %v3638, %v3750
    %3752 = vmatmul.f32.gmra.mxu0 %v3260
    %v3753 = vpop.f32.mrf.mxu0
    %v3754 = vadd.f32 %v3641, %v3753
    %3755 = vmatmul.f32.gmra.mxu0 %v3262
    %v3756 = vpop.f32.mrf.mxu0
    %v3757 = vadd.f32 %v3644, %v3756
    %3758 = vmatmul.f32.gmra.mxu0 %v3264
    %v3759 = vpop.f32.mrf.mxu0
    %v3760 = vadd.f32 %v3647, %v3759
    %3761 = vmatmul.f32.gmra.mxu0 %v3266
    %v3762 = vpop.f32.mrf.mxu0
    %v3763 = vadd.f32 %v3650, %v3762
    %3764 = vmatmul.f32.gmra.mxu0 %v3268
    %v3765 = vpop.f32.mrf.mxu0
    %v3766 = vadd.f32 %v3653, %v3765
    %3767 = vmatmul.f32.gmra.mxu0 %v3270
    %v3768 = vpop.f32.mrf.mxu0
    %v3769 = vadd.f32 %v3656, %v3768
    %3770 = vmatmul.f32.gmra.mxu0 %v3272
    %v3771 = vpop.f32.mrf.mxu0
    %v3772 = vadd.f32 %v3659, %v3771
    %3773 = vmatmul.f32.gmra.mxu0 %v3274
    %v3774 = vpop.f32.mrf.mxu0
    %v3775 = vadd.f32 %v3662, %v3774
    %3776 = vmatmul.f32.gmra.mxu0 %v3276
    %v3777 = vpop.f32.mrf.mxu0
    %v3778 = vadd.f32 %v3665, %v3777
    %3779 = vmatmul.f32.gmra.mxu0 %v3278
    %v3780 = vpop.f32.mrf.mxu0
    %v3781 = vadd.f32 %v3668, %v3780
    %3782 = vmatmul.f32.gmra.mxu0 %v3280
    %v3783 = vpop.f32.mrf.mxu0
    %v3784 = vadd.f32 %v3671, %v3783
    %3785 = vmatmul.f32.gmra.mxu0 %v3282
    %v3786 = vpop.f32.mrf.mxu0
    %v3787 = vadd.f32 %v3674, %v3786
    %3788 = vmatmul.f32.gmra.mxu0 %v3284
    %v3789 = vpop.f32.mrf.mxu0
    %v3790 = vadd.f32 %v3677, %v3789
    %3791 = vmatmul.f32.gmra.mxu0 %v3286
    %v3792 = vpop.f32.mrf.mxu0
    %v3793 = vadd.f32 %v3680, %v3792
    %3794 = vmatmul.f32.gmra.mxu0 %v3288
    %v3795 = vpop.f32.mrf.mxu0
    %v3796 = vadd.f32 %v3683, %v3795
    %3797 = vmatmul.f32.gmra.mxu0 %v3290
    %v3798 = vpop.f32.mrf.mxu0
    %v3799 = vadd.f32 %v3686, %v3798
    %3800 = vmatmul.f32.gmra.mxu0 %v3292
    %v3801 = vpop.f32.mrf.mxu0
    %v3802 = vadd.f32 %v3689, %v3801
    %3803 = vmatmul.f32.gmra.mxu0 %v3294
    %v3804 = vpop.f32.mrf.mxu0
    %v3805 = vadd.f32 %v3692, %v3804
    %3806 = vmatmul.f32.gmra.mxu0 %v3296
    %v3807 = vpop.f32.mrf.mxu0
    %v3808 = vadd.f32 %v3695, %v3807
    %3809 = vmatmul.f32.gmra.mxu0 %v3298
    %v3810 = vpop.f32.mrf.mxu0
    %v3811 = vadd.f32 %v3698, %v3810
    %3812 = vmatmul.f32.gmra.mxu0 %v3300
    %v3813 = vpop.f32.mrf.mxu0
    %v3814 = vadd.f32 %v3701, %v3813
    %3815 = vmatmul.f32.gmra.mxu0 %v3302
    %v3816 = vpop.f32.mrf.mxu0
    %v3817 = vadd.f32 %v3704, %v3816
    %3818 = vmatmul.f32.gmra.mxu0 %v3304
    %v3819 = vpop.f32.mrf.mxu0
    %v3820 = vadd.f32 %v3707, %v3819
    %3821 = vmatmul.f32.gmra.mxu0 %v3306
    %v3822 = vpop.f32.mrf.mxu0
    %v3823 = vadd.f32 %v3710, %v3822
    %3824 = vmatmul.f32.gmra.mxu0 %v3308
    %v3825 = vpop.f32.mrf.mxu0
    %v3826 = vadd.f32 %v3713, %v3825
    %3827 = vmatmul.f32.gmra.mxu0 %v3310
    %v3828 = vpop.f32.mrf.mxu0
    %v3829 = vadd.f32 %v3716, %v3828
    %3830 = vdwg.mxu0
    %v3831 = vmax.f32 %v3736, 0.0
    %v3832 = vmax.f32 %v3739, 0.0
    %v3833 = vmax.f32 %v3742, 0.0
    %v3834 = vmax.f32 %v3745, 0.0
    %v3835 = vmax.f32 %v3748, 0.0
    %v3836 = vmax.f32 %v3751, 0.0
    %v3837 = vmax.f32 %v3754, 0.0
    %v3838 = vmax.f32 %v3757, 0.0
    %v3839 = vmax.f32 %v3760, 0.0
    %v3840 = vmax.f32 %v3763, 0.0
    %v3841 = vmax.f32 %v3766, 0.0
    %v3842 = vmax.f32 %v3769, 0.0
    %v3843 = vmax.f32 %v3772, 0.0
    %v3844 = vmax.f32 %v3775, 0.0
    %v3845 = vmax.f32 %v3778, 0.0
    %v3846 = vmax.f32 %v3781, 0.0
    %v3847 = vmax.f32 %v3784, 0.0
    %v3848 = vmax.f32 %v3787, 0.0
    %v3849 = vmax.f32 %v3790, 0.0
    %v3850 = vmax.f32 %v3793, 0.0
    %v3851 = vmax.f32 %v3796, 0.0
    %v3852 = vmax.f32 %v3799, 0.0
    %v3853 = vmax.f32 %v3802, 0.0
    %v3854 = vmax.f32 %v3805, 0.0
    %v3855 = vmax.f32 %v3808, 0.0
    %v3856 = vmax.f32 %v3811, 0.0
    %v3857 = vmax.f32 %v3814, 0.0
    %v3858 = vmax.f32 %v3817, 0.0
    %v3859 = vmax.f32 %v3820, 0.0
    %v3860 = vmax.f32 %v3823, 0.0
    %v3861 = vmax.f32 %v3826, 0.0
    %v3862 = vmax.f32 %v3829, 0.0
    %s3863 = smul.u32 0, 256
    %s3864 = sshra.s32 %s3863, 3
    %s3865 = sand.u32 %s3863, 7
    %s3866 = smul.u32 %s3864, 2
    %s3867 = smul.addr %s3866, 8
    %s3868 = scalar_lea.vmem [#allocation3], %s3867
    %3869 = vst [vmem:[%s3868] sm:$0xff] %v3573
    %3870 = vst [vmem:[%s3868 + $0x8] sm:$0xff] %v3831
    %3871 = vst [vmem:[%s3868 + $0x10] sm:$0xff] %v3574
    %3872 = vst [vmem:[%s3868 + $0x18] sm:$0xff] %v3832
    %3873 = vst [vmem:[%s3868 + $0x20] sm:$0xff] %v3575
    %3874 = vst [vmem:[%s3868 + $0x28] sm:$0xff] %v3833
    %3875 = vst [vmem:[%s3868 + $0x30] sm:$0xff] %v3576
    %3876 = vst [vmem:[%s3868 + $0x38] sm:$0xff] %v3834
    %3877 = vst [vmem:[%s3868 + $0x40] sm:$0xff] %v3577
    %3878 = vst [vmem:[%s3868 + $0x48] sm:$0xff] %v3835
    %3879 = vst [vmem:[%s3868 + $0x50] sm:$0xff] %v3578
    %3880 = vst [vmem:[%s3868 + $0x58] sm:$0xff] %v3836
    %3881 = vst [vmem:[%s3868 + $0x60] sm:$0xff] %v3579
    %3882 = vst [vmem:[%s3868 + $0x68] sm:$0xff] %v3837
    %3883 = vst [vmem:[%s3868 + $0x70] sm:$0xff] %v3580
    %3884 = vst [vmem:[%s3868 + $0x78] sm:$0xff] %v3838
    %3885 = vst [vmem:[%s3868 + $0x80] sm:$0xff] %v3581
    %3886 = vst [vmem:[%s3868 + $0x88] sm:$0xff] %v3839
    %3887 = vst [vmem:[%s3868 + $0x90] sm:$0xff] %v3582
    %3888 = vst [vmem:[%s3868 + $0x98] sm:$0xff] %v3840
    %3889 = vst [vmem:[%s3868 + $0xa0] sm:$0xff] %v3583
    %3890 = vst [vmem:[%s3868 + $0xa8] sm:$0xff] %v3841
    %3891 = vst [vmem:[%s3868 + $0xb0] sm:$0xff] %v3584
    %3892 = vst [vmem:[%s3868 + $0xb8] sm:$0xff] %v3842
    %3893 = vst [vmem:[%s3868 + $0xc0] sm:$0xff] %v3585
    %3894 = vst [vmem:[%s3868 + $0xc8] sm:$0xff] %v3843
    %3895 = vst [vmem:[%s3868 + $0xd0] sm:$0xff] %v3586
    %3896 = vst [vmem:[%s3868 + $0xd8] sm:$0xff] %v3844
    %3897 = vst [vmem:[%s3868 + $0xe0] sm:$0xff] %v3587
    %3898 = vst [vmem:[%s3868 + $0xe8] sm:$0xff] %v3845
    %3899 = vst [vmem:[%s3868 + $0xf0] sm:$0xff] %v3588
    %3900 = vst [vmem:[%s3868 + $0xf8] sm:$0xff] %v3846
    %3901 = vst [vmem:[%s3868 + $0x100] sm:$0xff] %v3589
    %3902 = vst [vmem:[%s3868 + $0x108] sm:$0xff] %v3847
    %3903 = vst [vmem:[%s3868 + $0x110] sm:$0xff] %v3590
    %3904 = vst [vmem:[%s3868 + $0x118] sm:$0xff] %v3848
    %3905 = vst [vmem:[%s3868 + $0x120] sm:$0xff] %v3591
    %3906 = vst [vmem:[%s3868 + $0x128] sm:$0xff] %v3849
    %3907 = vst [vmem:[%s3868 + $0x130] sm:$0xff] %v3592
    %3908 = vst [vmem:[%s3868 + $0x138] sm:$0xff] %v3850
    %3909 = vst [vmem:[%s3868 + $0x140] sm:$0xff] %v3593
    %3910 = vst [vmem:[%s3868 + $0x148] sm:$0xff] %v3851
    %3911 = vst [vmem:[%s3868 + $0x150] sm:$0xff] %v3594
    %3912 = vst [vmem:[%s3868 + $0x158] sm:$0xff] %v3852
    %3913 = vst [vmem:[%s3868 + $0x160] sm:$0xff] %v3595
    %3914 = vst [vmem:[%s3868 + $0x168] sm:$0xff] %v3853
    %3915 = vst [vmem:[%s3868 + $0x170] sm:$0xff] %v3596
    %3916 = vst [vmem:[%s3868 + $0x178] sm:$0xff] %v3854
    %3917 = vst [vmem:[%s3868 + $0x180] sm:$0xff] %v3597
    %3918 = vst [vmem:[%s3868 + $0x188] sm:$0xff] %v3855
    %3919 = vst [vmem:[%s3868 + $0x190] sm:$0xff] %v3598
    %3920 = vst [vmem:[%s3868 + $0x198] sm:$0xff] %v3856
    %3921 = vst [vmem:[%s3868 + $0x1a0] sm:$0xff] %v3599
    %3922 = vst [vmem:[%s3868 + $0x1a8] sm:$0xff] %v3857
    %3923 = vst [vmem:[%s3868 + $0x1b0] sm:$0xff] %v3600
    %3924 = vst [vmem:[%s3868 + $0x1b8] sm:$0xff] %v3858
    %3925 = vst [vmem:[%s3868 + $0x1c0] sm:$0xff] %v3601
    %3926 = vst [vmem:[%s3868 + $0x1c8] sm:$0xff] %v3859
    %3927 = vst [vmem:[%s3868 + $0x1d0] sm:$0xff] %v3602
    %3928 = vst [vmem:[%s3868 + $0x1d8] sm:$0xff] %v3860
    %3929 = vst [vmem:[%s3868 + $0x1e0] sm:$0xff] %v3603
    %3930 = vst [vmem:[%s3868 + $0x1e8] sm:$0xff] %v3861
    %3931 = vst [vmem:[%s3868 + $0x1f0] sm:$0xff] %v3604
    %3932 = vst [vmem:[%s3868 + $0x1f8] sm:$0xff] %v3862
    %v3933 = vld [vmem:[#allocation4] sm:$0x1]
    %v3934 = vld [vmem:[%s8] sm:$0xff]
    %v3935 = vld [vmem:[%s8 + $0x8] sm:$0xff]
    %v3936 = vld [vmem:[%s8 + $0x10] sm:$0xff]
    %v3937 = vld [vmem:[%s8 + $0x18] sm:$0xff]
    %v3938 = vld [vmem:[%s8 + $0x20] sm:$0xff]
    %v3939 = vld [vmem:[%s8 + $0x28] sm:$0xff]
    %v3940 = vld [vmem:[%s8 + $0x30] sm:$0xff]
    %v3941 = vld [vmem:[%s8 + $0x38] sm:$0xff]
    %v3942 = vld [vmem:[%s8 + $0x40] sm:$0xff]
    %v3943 = vld [vmem:[%s8 + $0x48] sm:$0xff]
    %v3944 = vld [vmem:[%s8 + $0x50] sm:$0xff]
    %v3945 = vld [vmem:[%s8 + $0x58] sm:$0xff]
    %v3946 = vld [vmem:[%s8 + $0x60] sm:$0xff]
    %v3947 = vld [vmem:[%s8 + $0x68] sm:$0xff]
    %v3948 = vld [vmem:[%s8 + $0x70] sm:$0xff]
    %v3949 = vld [vmem:[%s8 + $0x78] sm:$0xff]
    %v3950 = vld [vmem:[%s8 + $0x80] sm:$0xff]
    %v3951 = vld [vmem:[%s8 + $0x88] sm:$0xff]
    %v3952 = vld [vmem:[%s8 + $0x90] sm:$0xff]
    %v3953 = vld [vmem:[%s8 + $0x98] sm:$0xff]
    %v3954 = vld [vmem:[%s8 + $0xa0] sm:$0xff]
    %v3955 = vld [vmem:[%s8 + $0xa8] sm:$0xff]
    %v3956 = vld [vmem:[%s8 + $0xb0] sm:$0xff]
    %v3957 = vld [vmem:[%s8 + $0xb8] sm:$0xff]
    %v3958 = vld [vmem:[%s8 + $0xc0] sm:$0xff]
    %v3959 = vld [vmem:[%s8 + $0xc8] sm:$0xff]
    %v3960 = vld [vmem:[%s8 + $0xd0] sm:$0xff]
    %v3961 = vld [vmem:[%s8 + $0xd8] sm:$0xff]
    %v3962 = vld [vmem:[%s8 + $0xe0] sm:$0xff]
    %v3963 = vld [vmem:[%s8 + $0xe8] sm:$0xff]
    %v3964 = vld [vmem:[%s8 + $0xf0] sm:$0xff]
    %v3965 = vld [vmem:[%s8 + $0xf8] sm:$0xff]
    %3967 = vset.pattern.permute.xlu0 0
    %3968 = vperm.xlu0 %3967, %v3934
    %v3969 = vpop.permute.xlu0 %3968
    %3972 = vset.pattern.permute.xlu0 0
    %3973 = vperm.xlu0 %3972, %v3935
    %v3974 = vpop.permute.xlu0 %3973
    %3977 = vset.pattern.permute.xlu0 0
    %3978 = vperm.xlu0 %3977, %v3936
    %v3979 = vpop.permute.xlu0 %3978
    %3982 = vset.pattern.permute.xlu0 0
    %3983 = vperm.xlu0 %3982, %v3937
    %v3984 = vpop.permute.xlu0 %3983
    %3987 = vset.pattern.permute.xlu0 0
    %3988 = vperm.xlu0 %3987, %v3938
    %v3989 = vpop.permute.xlu0 %3988
    %3992 = vset.pattern.permute.xlu0 0
    %3993 = vperm.xlu0 %3992, %v3939
    %v3994 = vpop.permute.xlu0 %3993
    %3997 = vset.pattern.permute.xlu0 0
    %3998 = vperm.xlu0 %3997, %v3940
    %v3999 = vpop.permute.xlu0 %3998
    %4002 = vset.pattern.permute.xlu0 0
    %4003 = vperm.xlu0 %4002, %v3941
    %v4004 = vpop.permute.xlu0 %4003
    %4007 = vset.pattern.permute.xlu0 0
    %4008 = vperm.xlu0 %4007, %v3942
    %v4009 = vpop.permute.xlu0 %4008
    %4012 = vset.pattern.permute.xlu0 0
    %4013 = vperm.xlu0 %4012, %v3943
    %v4014 = vpop.permute.xlu0 %4013
    %4017 = vset.pattern.permute.xlu0 0
    %4018 = vperm.xlu0 %4017, %v3944
    %v4019 = vpop.permute.xlu0 %4018
    %4022 = vset.pattern.permute.xlu0 0
    %4023 = vperm.xlu0 %4022, %v3945
    %v4024 = vpop.permute.xlu0 %4023
    %4027 = vset.pattern.permute.xlu0 0
    %4028 = vperm.xlu0 %4027, %v3946
    %v4029 = vpop.permute.xlu0 %4028
    %4032 = vset.pattern.permute.xlu0 0
    %4033 = vperm.xlu0 %4032, %v3947
    %v4034 = vpop.permute.xlu0 %4033
    %4037 = vset.pattern.permute.xlu0 0
    %4038 = vperm.xlu0 %4037, %v3948
    %v4039 = vpop.permute.xlu0 %4038
    %4042 = vset.pattern.permute.xlu0 0
    %4043 = vperm.xlu0 %4042, %v3949
    %v4044 = vpop.permute.xlu0 %4043
    %4047 = vset.pattern.permute.xlu0 0
    %4048 = vperm.xlu0 %4047, %v3950
    %v4049 = vpop.permute.xlu0 %4048
    %4052 = vset.pattern.permute.xlu0 0
    %4053 = vperm.xlu0 %4052, %v3951
    %v4054 = vpop.permute.xlu0 %4053
    %4057 = vset.pattern.permute.xlu0 0
    %4058 = vperm.xlu0 %4057, %v3952
    %v4059 = vpop.permute.xlu0 %4058
    %4062 = vset.pattern.permute.xlu0 0
    %4063 = vperm.xlu0 %4062, %v3953
    %v4064 = vpop.permute.xlu0 %4063
    %4067 = vset.pattern.permute.xlu0 0
    %4068 = vperm.xlu0 %4067, %v3954
    %v4069 = vpop.permute.xlu0 %4068
    %4072 = vset.pattern.permute.xlu0 0
    %4073 = vperm.xlu0 %4072, %v3955
    %v4074 = vpop.permute.xlu0 %4073
    %4077 = vset.pattern.permute.xlu0 0
    %4078 = vperm.xlu0 %4077, %v3956
    %v4079 = vpop.permute.xlu0 %4078
    %4082 = vset.pattern.permute.xlu0 0
    %4083 = vperm.xlu0 %4082, %v3957
    %v4084 = vpop.permute.xlu0 %4083
    %4087 = vset.pattern.permute.xlu0 0
    %4088 = vperm.xlu0 %4087, %v3958
    %v4089 = vpop.permute.xlu0 %4088
    %4092 = vset.pattern.permute.xlu0 0
    %4093 = vperm.xlu0 %4092, %v3959
    %v4094 = vpop.permute.xlu0 %4093
    %4097 = vset.pattern.permute.xlu0 0
    %4098 = vperm.xlu0 %4097, %v3960
    %v4099 = vpop.permute.xlu0 %4098
    %4102 = vset.pattern.permute.xlu0 0
    %4103 = vperm.xlu0 %4102, %v3961
    %v4104 = vpop.permute.xlu0 %4103
    %4107 = vset.pattern.permute.xlu0 0
    %4108 = vperm.xlu0 %4107, %v3962
    %v4109 = vpop.permute.xlu0 %4108
    %4112 = vset.pattern.permute.xlu0 0
    %4113 = vperm.xlu0 %4112, %v3963
    %v4114 = vpop.permute.xlu0 %4113
    %4117 = vset.pattern.permute.xlu0 0
    %4118 = vperm.xlu0 %4117, %v3964
    %v4119 = vpop.permute.xlu0 %4118
    %4122 = vset.pattern.permute.xlu0 0
    %4123 = vperm.xlu0 %4122, %v3965
    %v4124 = vpop.permute.xlu0 %4123
    %v4126 = vmul.f32 %v3573, %v3969
    %v4127 = vmul.f32 %v3574, %v3974
    %v4128 = vmul.f32 %v3575, %v3979
    %v4129 = vmul.f32 %v3576, %v3984
    %v4130 = vmul.f32 %v3577, %v3989
    %v4131 = vmul.f32 %v3578, %v3994
    %v4132 = vmul.f32 %v3579, %v3999
    %v4133 = vmul.f32 %v3580, %v4004
    %v4134 = vmul.f32 %v3581, %v4009
    %v4135 = vmul.f32 %v3582, %v4014
    %v4136 = vmul.f32 %v3583, %v4019
    %v4137 = vmul.f32 %v3584, %v4024
    %v4138 = vmul.f32 %v3585, %v4029
    %v4139 = vmul.f32 %v3586, %v4034
    %v4140 = vmul.f32 %v3587, %v4039
    %v4141 = vmul.f32 %v3588, %v4044
    %v4142 = vmul.f32 %v3589, %v4049
    %v4143 = vmul.f32 %v3590, %v4054
    %v4144 = vmul.f32 %v3591, %v4059
    %v4145 = vmul.f32 %v3592, %v4064
    %v4146 = vmul.f32 %v3593, %v4069
    %v4147 = vmul.f32 %v3594, %v4074
    %v4148 = vmul.f32 %v3595, %v4079
    %v4149 = vmul.f32 %v3596, %v4084
    %v4150 = vmul.f32 %v3597, %v4089
    %v4151 = vmul.f32 %v3598, %v4094
    %v4152 = vmul.f32 %v3599, %v4099
    %v4153 = vmul.f32 %v3600, %v4104
    %v4154 = vmul.f32 %v3601, %v4109
    %v4155 = vmul.f32 %v3602, %v4114
    %v4156 = vmul.f32 %v3603, %v4119
    %v4157 = vmul.f32 %v3604, %v4124
    %v4158 = vadd.f32 %v4126, %v4127
    %v4159 = vadd.f32 %v4158, %v4128
    %v4160 = vadd.f32 %v4159, %v4129
    %v4161 = vadd.f32 %v4160, %v4130
    %v4162 = vadd.f32 %v4161, %v4131
    %v4163 = vadd.f32 %v4162, %v4132
    %v4164 = vadd.f32 %v4163, %v4133
    %v4165 = vadd.f32 %v4164, %v4134
    %v4166 = vadd.f32 %v4165, %v4135
    %v4167 = vadd.f32 %v4166, %v4136
    %v4168 = vadd.f32 %v4167, %v4137
    %v4169 = vadd.f32 %v4168, %v4138
    %v4170 = vadd.f32 %v4169, %v4139
    %v4171 = vadd.f32 %v4170, %v4140
    %v4172 = vadd.f32 %v4171, %v4141
    %v4173 = vadd.f32 %v4172, %v4142
    %v4174 = vadd.f32 %v4173, %v4143
    %v4175 = vadd.f32 %v4174, %v4144
    %v4176 = vadd.f32 %v4175, %v4145
    %v4177 = vadd.f32 %v4176, %v4146
    %v4178 = vadd.f32 %v4177, %v4147
    %v4179 = vadd.f32 %v4178, %v4148
    %v4180 = vadd.f32 %v4179, %v4149
    %v4181 = vadd.f32 %v4180, %v4150
    %v4182 = vadd.f32 %v4181, %v4151
    %v4183 = vadd.f32 %v4182, %v4152
    %v4184 = vadd.f32 %v4183, %v4153
    %v4185 = vadd.f32 %v4184, %v4154
    %v4186 = vadd.f32 %v4185, %v4155
    %v4187 = vadd.f32 %v4186, %v4156
    %v4188 = vadd.f32 %v4187, %v4157
    %v4189 = vrot.slane %v4188, 4
    %v4190 = vadd.f32 %v4188, %v4189
    %v4191 = vrot.slane %v4190, 2
    %v4192 = vadd.f32 %v4190, %v4191
    %v4193 = vrot.slane %v4192, 1
    %v4194 = vadd.f32 %v4192, %v4193
    %v4195 = vadd.f32 %v3933, %v4194
    %4196 = vst [vmem:[#allocation4] sm:$0x1] %v4195
    // Predicated region
    $region54: #{dgis_forward.1} parent=1 // pred_check
      %p4197 = pneg %p51
    $region55: #{dgis_forward.1} parent=1 // pred_check_branch
      %4199 = sbr.rel (%p4197) target = $region57
    $region56: #{dgis_forward.1} parent=1 // pred_region
      %s4200 = sld [smem:[#allocation5]]
      %s4201 = sld [smem:[#allocation5 + $0x1]]
      %v4202 = vld [vmem:[#allocation4] sm:$0x1]
      %v4203 = vstv %s4201
      %v4204 = vmul.f32 %v4202, %v4203
      %v4205 = vxor.u32 %v4204, 2147483648
      %v4206 = vmul.f32 %v4205, 1.442695
      %v4207 = vpow.pop %v4206
      %v4208 = vadd.f32 %v4207, 1.0
      %v4209 = vrcp.pop %v4208
      %v4210 = vmul.f32 %v4208, %v4209
      %v4211 = vsub.f32 1.0, %v4210
      %v4212 = vmul.f32 %v4209, %v4211
      %v4213 = vadd.f32 %v4209, %v4212
      %vm4214 = vweird.f32 %v4208
      %vm4215 = vweird.f32 %v4209
      %vm4216 = vmor %vm4214, %vm4215
      %v4217 = vsel %vm4216, %v4209, %v4213
      %v4218 = vand.u32 2147483647, %v4208
      %vm4219 = vcmp.eq.f32.partialorder %v4218, 8.507059e+37
      %v4220 = vand.u32 %v4208, 2147483648
      %v4221 = vor.u32 1.1754944e-38, %v4220
      %v4222 = vsel %vm4219, %v4221, %v4217
      %v4223 = vmul.f32 1.0, %v4222
      %v4224 = vld [vmem:[%s7] sm:$0xff]
      %v4225 = vld [vmem:[%s7 + $0x8] sm:$0xff]
      %v4226 = vld [vmem:[%s7 + $0x10] sm:$0xff]
      %v4227 = vld [vmem:[%s7 + $0x18] sm:$0xff]
      %v4228 = vld [vmem:[%s7 + $0x20] sm:$0xff]
      %v4229 = vld [vmem:[%s7 + $0x28] sm:$0xff]
      %v4230 = vld [vmem:[%s7 + $0x30] sm:$0xff]
      %v4231 = vld [vmem:[%s7 + $0x38] sm:$0xff]
      %v4232 = vld [vmem:[%s7 + $0x40] sm:$0xff]
      %v4233 = vld [vmem:[%s7 + $0x48] sm:$0xff]
      %v4234 = vld [vmem:[%s7 + $0x50] sm:$0xff]
      %v4235 = vld [vmem:[%s7 + $0x58] sm:$0xff]
      %v4236 = vld [vmem:[%s7 + $0x60] sm:$0xff]
      %v4237 = vld [vmem:[%s7 + $0x68] sm:$0xff]
      %v4238 = vld [vmem:[%s7 + $0x70] sm:$0xff]
      %v4239 = vld [vmem:[%s7 + $0x78] sm:$0xff]
      %4240 = vmatpush.msra.mxu0 %v4239
      %4241 = vmatpush.msra.mxu0 %v4238
      %4242 = vmatpush.msra.mxu0 %v4237
      %4243 = vmatpush.msra.mxu0 %v4236
      %4244 = vmatpush.msra.mxu0 %v4235
      %4245 = vmatpush.msra.mxu0 %v4234
      %4246 = vmatpush.msra.mxu0 %v4233
      %4247 = vmatpush.msra.mxu0 %v4232
      %4248 = vmatpush.msra.mxu0 %v4231
      %4249 = vmatpush.msra.mxu0 %v4230
      %4250 = vmatpush.msra.mxu0 %v4229
      %4251 = vmatpush.msra.mxu0 %v4228
      %4252 = vmatpush.msra.mxu0 %v4227
      %4253 = vmatpush.msra.mxu0 %v4226
      %4254 = vmatpush.msra.mxu0 %v4225
      %4255 = vmatpush.msra.mxu0 %v4224
      %4256 = vmatmul.f32.gmra.mxu0 %v4223
      %v4257 = vpop.f32.mrf.mxu0
      %v4258 = vadd.f32 0.0, %v4257
      %4259 = vdwg.mxu0
      %v4262 = vrot.slane 0.0, 7
      %v4263 = vrot.slane %v4258, 7
      %vm4266 = vcmask 1040384
      %v4267 = vsel %vm4266, %v4258, %v4262
      %v4268 = vsel %vm4266, 0.0, %v4263
      %v4269 = vld [vmem:[#allocation3] sm:$0xff]
      %v4270 = vld [vmem:[#allocation3 + $0x8] sm:$0xff]
      %v4271 = vld [vmem:[#allocation3 + $0x10] sm:$0xff]
      %v4272 = vld [vmem:[#allocation3 + $0x18] sm:$0xff]
      %v4273 = vld [vmem:[#allocation3 + $0x20] sm:$0xff]
      %v4274 = vld [vmem:[#allocation3 + $0x28] sm:$0xff]
      %v4275 = vld [vmem:[#allocation3 + $0x30] sm:$0xff]
      %v4276 = vld [vmem:[#allocation3 + $0x38] sm:$0xff]
      %v4277 = vld [vmem:[#allocation3 + $0x40] sm:$0xff]
      %v4278 = vld [vmem:[#allocation3 + $0x48] sm:$0xff]
      %v4279 = vld [vmem:[#allocation3 + $0x50] sm:$0xff]
      %v4280 = vld [vmem:[#allocation3 + $0x58] sm:$0xff]
      %v4281 = vld [vmem:[#allocation3 + $0x60] sm:$0xff]
      %v4282 = vld [vmem:[#allocation3 + $0x68] sm:$0xff]
      %v4283 = vld [vmem:[#allocation3 + $0x70] sm:$0xff]
      %v4284 = vld [vmem:[#allocation3 + $0x78] sm:$0xff]
      %v4285 = vld [vmem:[#allocation3 + $0x80] sm:$0xff]
      %v4286 = vld [vmem:[#allocation3 + $0x88] sm:$0xff]
      %v4287 = vld [vmem:[#allocation3 + $0x90] sm:$0xff]
      %v4288 = vld [vmem:[#allocation3 + $0x98] sm:$0xff]
      %v4289 = vld [vmem:[#allocation3 + $0xa0] sm:$0xff]
      %v4290 = vld [vmem:[#allocation3 + $0xa8] sm:$0xff]
      %v4291 = vld [vmem:[#allocation3 + $0xb0] sm:$0xff]
      %v4292 = vld [vmem:[#allocation3 + $0xb8] sm:$0xff]
      %v4293 = vld [vmem:[#allocation3 + $0xc0] sm:$0xff]
      %v4294 = vld [vmem:[#allocation3 + $0xc8] sm:$0xff]
      %v4295 = vld [vmem:[#allocation3 + $0xd0] sm:$0xff]
      %v4296 = vld [vmem:[#allocation3 + $0xd8] sm:$0xff]
      %v4297 = vld [vmem:[#allocation3 + $0xe0] sm:$0xff]
      %v4298 = vld [vmem:[#allocation3 + $0xe8] sm:$0xff]
      %v4299 = vld [vmem:[#allocation3 + $0xf0] sm:$0xff]
      %v4300 = vld [vmem:[#allocation3 + $0xf8] sm:$0xff]
      %v4301 = vld [vmem:[#allocation3 + $0x100] sm:$0xff]
      %v4302 = vld [vmem:[#allocation3 + $0x108] sm:$0xff]
      %v4303 = vld [vmem:[#allocation3 + $0x110] sm:$0xff]
      %v4304 = vld [vmem:[#allocation3 + $0x118] sm:$0xff]
      %v4305 = vld [vmem:[#allocation3 + $0x120] sm:$0xff]
      %v4306 = vld [vmem:[#allocation3 + $0x128] sm:$0xff]
      %v4307 = vld [vmem:[#allocation3 + $0x130] sm:$0xff]
      %v4308 = vld [vmem:[#allocation3 + $0x138] sm:$0xff]
      %v4309 = vld [vmem:[#allocation3 + $0x140] sm:$0xff]
      %v4310 = vld [vmem:[#allocation3 + $0x148] sm:$0xff]
      %v4311 = vld [vmem:[#allocation3 + $0x150] sm:$0xff]
      %v4312 = vld [vmem:[#allocation3 + $0x158] sm:$0xff]
      %v4313 = vld [vmem:[#allocation3 + $0x160] sm:$0xff]
      %v4314 = vld [vmem:[#allocation3 + $0x168] sm:$0xff]
      %v4315 = vld [vmem:[#allocation3 + $0x170] sm:$0xff]
      %v4316 = vld [vmem:[#allocation3 + $0x178] sm:$0xff]
      %v4317 = vld [vmem:[#allocation3 + $0x180] sm:$0xff]
      %v4318 = vld [vmem:[#allocation3 + $0x188] sm:$0xff]
      %v4319 = vld [vmem:[#allocation3 + $0x190] sm:$0xff]
      %v4320 = vld [vmem:[#allocation3 + $0x198] sm:$0xff]
      %v4321 = vld [vmem:[#allocation3 + $0x1a0] sm:$0xff]
      %v4322 = vld [vmem:[#allocation3 + $0x1a8] sm:$0xff]
      %v4323 = vld [vmem:[#allocation3 + $0x1b0] sm:$0xff]
      %v4324 = vld [vmem:[#allocation3 + $0x1b8] sm:$0xff]
      %v4325 = vld [vmem:[#allocation3 + $0x1c0] sm:$0xff]
      %v4326 = vld [vmem:[#allocation3 + $0x1c8] sm:$0xff]
      %v4327 = vld [vmem:[#allocation3 + $0x1d0] sm:$0xff]
      %v4328 = vld [vmem:[#allocation3 + $0x1d8] sm:$0xff]
      %v4329 = vld [vmem:[#allocation3 + $0x1e0] sm:$0xff]
      %v4330 = vld [vmem:[#allocation3 + $0x1e8] sm:$0xff]
      %v4331 = vld [vmem:[#allocation3 + $0x1f0] sm:$0xff]
      %v4332 = vld [vmem:[#allocation3 + $0x1f8] sm:$0xff]
      %v4333 = vstv %s4200
      %4334 = vmatpush.xpose.msra.mxu0 %v4299
      %4335 = vmatpush.xpose.msra.mxu0 %v4297
      %4336 = vmatpush.xpose.msra.mxu0 %v4295
      %4337 = vmatpush.xpose.msra.mxu0 %v4293
      %4338 = vmatpush.xpose.msra.mxu0 %v4291
      %4339 = vmatpush.xpose.msra.mxu0 %v4289
      %4340 = vmatpush.xpose.msra.mxu0 %v4287
      %4341 = vmatpush.xpose.msra.mxu0 %v4285
      %4342 = vmatpush.xpose.msra.mxu0 %v4283
      %4343 = vmatpush.xpose.msra.mxu0 %v4281
      %4344 = vmatpush.xpose.msra.mxu0 %v4279
      %4345 = vmatpush.xpose.msra.mxu0 %v4277
      %4346 = vmatpush.xpose.msra.mxu0 %v4275
      %4347 = vmatpush.xpose.msra.mxu0 %v4273
      %4348 = vmatpush.xpose.msra.mxu0 %v4271
      %4349 = vmatpush.xpose.msra.mxu0 %v4269
      %4350 = vmatmul.f32.gmra.mxu0 %v4267
      %v4351 = vpop.f32.mrf.mxu0
      %v4352 = vadd.f32 %v4333, %v4351
      %4353 = vdwg.mxu0
      %4354 = vmatpush.xpose.msra.mxu0 %v4300
      %4355 = vmatpush.xpose.msra.mxu0 %v4298
      %4356 = vmatpush.xpose.msra.mxu0 %v4296
      %4357 = vmatpush.xpose.msra.mxu0 %v4294
      %4358 = vmatpush.xpose.msra.mxu0 %v4292
      %4359 = vmatpush.xpose.msra.mxu0 %v4290
      %4360 = vmatpush.xpose.msra.mxu0 %v4288
      %4361 = vmatpush.xpose.msra.mxu0 %v4286
      %4362 = vmatpush.xpose.msra.mxu0 %v4284
      %4363 = vmatpush.xpose.msra.mxu0 %v4282
      %4364 = vmatpush.xpose.msra.mxu0 %v4280
      %4365 = vmatpush.xpose.msra.mxu0 %v4278
      %4366 = vmatpush.xpose.msra.mxu0 %v4276
      %4367 = vmatpush.xpose.msra.mxu0 %v4274
      %4368 = vmatpush.xpose.msra.mxu0 %v4272
      %4369 = vmatpush.xpose.msra.mxu0 %v4270
      %4370 = vmatmul.f32.gmra.mxu0 %v4268
      %v4371 = vpop.f32.mrf.mxu0
      %v4372 = vadd.f32 %v4352, %v4371
      %4373 = vdwg.mxu0
      %4374 = vmatpush.xpose.msra.mxu0 %v4331
      %4375 = vmatpush.xpose.msra.mxu0 %v4329
      %4376 = vmatpush.xpose.msra.mxu0 %v4327
      %4377 = vmatpush.xpose.msra.mxu0 %v4325
      %4378 = vmatpush.xpose.msra.mxu0 %v4323
      %4379 = vmatpush.xpose.msra.mxu0 %v4321
      %4380 = vmatpush.xpose.msra.mxu0 %v4319
      %4381 = vmatpush.xpose.msra.mxu0 %v4317
      %4382 = vmatpush.xpose.msra.mxu0 %v4315
      %4383 = vmatpush.xpose.msra.mxu0 %v4313
      %4384 = vmatpush.xpose.msra.mxu0 %v4311
      %4385 = vmatpush.xpose.msra.mxu0 %v4309
      %4386 = vmatpush.xpose.msra.mxu0 %v4307
      %4387 = vmatpush.xpose.msra.mxu0 %v4305
      %4388 = vmatpush.xpose.msra.mxu0 %v4303
      %4389 = vmatpush.xpose.msra.mxu0 %v4301
      %4390 = vmatmul.f32.gmra.mxu0 %v4267
      %v4391 = vpop.f32.mrf.mxu0
      %v4392 = vadd.f32 %v4333, %v4391
      %4393 = vdwg.mxu0
      %4394 = vmatpush.xpose.msra.mxu0 %v4332
      %4395 = vmatpush.xpose.msra.mxu0 %v4330
      %4396 = vmatpush.xpose.msra.mxu0 %v4328
      %4397 = vmatpush.xpose.msra.mxu0 %v4326
      %4398 = vmatpush.xpose.msra.mxu0 %v4324
      %4399 = vmatpush.xpose.msra.mxu0 %v4322
      %4400 = vmatpush.xpose.msra.mxu0 %v4320
      %4401 = vmatpush.xpose.msra.mxu0 %v4318
      %4402 = vmatpush.xpose.msra.mxu0 %v4316
      %4403 = vmatpush.xpose.msra.mxu0 %v4314
      %4404 = vmatpush.xpose.msra.mxu0 %v4312
      %4405 = vmatpush.xpose.msra.mxu0 %v4310
      %4406 = vmatpush.xpose.msra.mxu0 %v4308
      %4407 = vmatpush.xpose.msra.mxu0 %v4306
      %4408 = vmatpush.xpose.msra.mxu0 %v4304
      %4409 = vmatpush.xpose.msra.mxu0 %v4302
      %4410 = vmatmul.f32.gmra.mxu0 %v4268
      %v4411 = vpop.f32.mrf.mxu0
      %v4412 = vadd.f32 %v4392, %v4411
      %4413 = vdwg.mxu0
      %v4414 = vld [vmem:[%s9] sm:$0xf]
      %4416 = vst [vmem:[#allocation1] ss:$4 sm:$0xff] %v4414
      %v4417 = vld.sshfl [vmem:[#allocation1] sm:$0xff pattern:$0x73625140]
      %v4418 = vld.sshfl [vmem:[#allocation1 + $0x8] sm:$0xff pattern:$0x73625140]
      %v4421 = vadd.f32 %v4372, %v4417
      %v4422 = vadd.f32 %v4412, %v4418
      %v4425 = vrot.slane %v4422, 6
      %vm4426 = vcmask 1041408
      %v4427 = vsel %vm4426, %v4421, %v4425
      %4429 = vst [vmem:[%s11] sm:$0xf] %v4427
    $region57: #{dgis_forward.1} parent=1 // pred_fallthru
      _
    // Predicated region
    $region58: #{dgis_forward.1} parent=1 // pred_check
      _
    $region59: #{dgis_forward.1} parent=1 // pred_check_branch
      %4431 = sbr.rel (0) target = $region61
    $region60: #{dgis_forward.1} parent=1 // pred_region
      _
    $region61: #{dgis_forward.1} parent=1 // pred_fallthru
      _
    // Predicated region
    $region62: #{dgis_forward.1} parent=1 // pred_check
      _
    $region63: #{dgis_forward.1} parent=1 // pred_check_branch
      %4433 = sbr.rel (0) target = $region65
    $region64: #{dgis_forward.1} parent=1 // pred_region
      _
    $region65: #{dgis_forward.1} parent=1 // pred_fallthru
      _
    %4434 = vsyncpa [#allocation6], 1

</llo_original>
